<compile_context>
chip_gen: v6e
topology: v6e:2x2x1
jax: 0.10.0
libtpu: 0.0.40
codegen_flags: <defaults>
</compile_context>

<pallas_src>
import functools

import jax
import jax.numpy as jnp
from jax import lax
from jax.experimental import pallas as pl
from jax.experimental.pallas import tpu as pltpu

GROUPS = 32
C = 512
CG = C // GROUPS              # 16 channels per group
KH = KW = 3
K_DIM = CG * KH * KW          # 144 contraction rows per group
STRIDE = 2
PAD = 1
EPS = 1e-5

GB = 8                        # groups per grid step  -> 128 channels / block
NB = GROUPS // GB             # 4 grid steps
GBC = GB * CG                 # 128
MATMUL_DTYPE = jnp.bfloat16   # MXU operand dtype (accumulation stays f32)


def _fused_block_kernel(planes_ref, w_ref, gb_ref, mask_ref, o_ref, patch_ref,
                        *, ow):
    # planes_ref: (2, 2, GBC, FLAT) bf16  [pa, ps, channel, a*OW + m]
    #             ps=0: padded cols 2,4,...,W ; ps=1: padded cols 1,3,...,W-1
    #             pa  : padded-row parity (padded row = 2a + pa)
    # w_ref:      (1, GB, CG, K_DIM) bf16  per-group weights, K=(kh,kw,ci)
    # gb_ref:     (1, GBC, 2) f32   [:, :, 0]=gamma, [:, :, 1]=beta
    # mask_ref:   (1, P) bf16       0.0 where p % OW == 0 else 1.0
    # o_ref:      (1, GBC, P) f32   channel-major fused output
    # patch_ref:  (K_DIM, P) bf16   per-group im2col scratch (VMEM)
    p = o_ref.shape[2]
    mask = mask_ref[...]                                   # [1, P]

    s1_parts = []
    s2_parts = []
    for g in range(GB):                                    # static unroll
        gs = g * CG
        # Build the [K_DIM, P] patch matrix for this group: every tap is a
        # static lane-window of a phase plane (no HBM gather, no transpose).
        for kh in range(KH):
            pa, da = kh % 2, kh // 2
            base = da * ow
            for kw in range(KW):
                t = kh * KW + kw
                rs = t * CG
                if kw == 1:                                # padded col 2*owi+1
                    tap = planes_ref[pa, 1, gs:gs + CG, base:base + p]
                elif kw == 2:                              # padded col 2*owi+2
                    tap = planes_ref[pa, 0, gs:gs + CG, base:base + p]
                else:                                      # kw == 0: col 2*owi
                    win = planes_ref[pa, 0, gs:gs + CG, base:base + p - 1]
                    tap = jnp.concatenate(
                        [jnp.zeros((CG, 1), dtype=win.dtype), win], axis=1)
                    tap = tap * mask                       # zero owi==0 taps
                patch_ref[rs:rs + CG, :] = tap

        # One K=144 MXU matmul per group, f32 accumulation, result written
        # straight into the output block (no extra VMEM scratch).
        y = jnp.dot(w_ref[0, g], patch_ref[...],
                    preferred_element_type=jnp.float32)    # [CG, P]
        o_ref[0, gs:gs + CG, :] = y
        # Single-pass BN statistics.
        s1_parts.append(jnp.sum(y, axis=1, keepdims=True))
        s2_parts.append(jnp.sum(y * y, axis=1, keepdims=True))

    s1 = jnp.concatenate(s1_parts, axis=0)                 # [GBC, 1]
    s2 = jnp.concatenate(s2_parts, axis=0)                 # [GBC, 1]
    inv_p = 1.0 / p
    mean = s1 * inv_p
    var = s2 * inv_p - mean * mean                         # E[y^2] - mean^2
    gb = gb_ref[0]                                         # [GBC, 2]
    scale = gb[:, 0:1] * lax.rsqrt(var + EPS)
    shift = gb[:, 1:2] - mean * scale
    o_ref[0] = jnp.maximum(o_ref[0] * scale + shift, 0.0)


@jax.jit
def fused_relu_gconv_bn_relu(x, weight, gamma, beta):
    """x: [1, 512, H, W] NCHW f32; weight: [512, 16, 3, 3] OIHW (grouped)."""
    n, c, h, w = x.shape
    assert n == 1 and c == C and h % 2 == 0 and w % 2 == 0
    oh, ow = h // 2, w // 2
    p = oh * ow
    flat = (oh + 1) * ow

    # XLA side: ReLU + bf16 cast + pad + stride-2 phase split (compact,
    # ~x.nbytes/2 intermediate; no 9x patch expansion).
    xr = jnp.maximum(x, 0.0).astype(MATMUL_DTYPE).reshape(c, h, w)
    xp = jnp.pad(xr, ((0, 0), (1, 1), (1, 1)))             # [C, h+2, w+2]
    xpr = xp.reshape(c, oh + 1, 2, w + 2)                   # (c, a, pa, j)
    cols0 = xpr[:, :, :, 2:2 + 2 * ow:2]                    # j = 2,4,...,w
    cols1 = xpr[:, :, :, 1:1 + 2 * ow:2]                    # j = 1,3,...,w-1
    planes = jnp.stack([cols0, cols1], axis=0)               # (ps, c, a, pa, m)
    planes = planes.transpose(3, 0, 1, 2, 4)                 # (pa, ps, c, a, m)
    planes = planes.reshape(2, 2, c, flat)

    # weight[co, ci, kh, kw] -> per group [CG_out, (kh, kw, ci)] to match the
    # patch-row ordering t*CG + ci with t = kh*3 + kw.
    w_mat = weight.transpose(0, 2, 3, 1).reshape(NB, GB, CG, K_DIM)
    w_mat = w_mat.astype(MATMUL_DTYPE)
    gamma_beta = jnp.stack([gamma, beta], axis=-1).reshape(NB, GBC, 2)
    gamma_beta = gamma_beta.astype(jnp.float32)
    mask = (jnp.arange(p) % ow != 0).astype(MATMUL_DTYPE).reshape(1, p)

    kernel = functools.partial(_fused_block_kernel, ow=ow)
    out = pl.pallas_call(
        kernel,
        out_shape=jax.ShapeDtypeStruct((NB, GBC, p), jnp.float32),
        grid_spec=pltpu.PrefetchScalarGridSpec(
            num_scalar_prefetch=0,
            grid=(NB,),
            in_specs=[
                pl.BlockSpec((2, 2, GBC, flat), lambda b: (0, 0, b, 0)),
                pl.BlockSpec((1, GB, CG, K_DIM), lambda b: (b, 0, 0, 0)),
                pl.BlockSpec((1, GBC, 2), lambda b: (b, 0, 0)),
                pl.BlockSpec((1, p), lambda b: (0, 0)),
            ],
            out_specs=pl.BlockSpec((1, GBC, p), lambda b: (b, 0, 0)),
            scratch_shapes=[pltpu.VMEM((K_DIM, p), MATMUL_DTYPE)],
        ),
        compiler_params=pltpu.CompilerParams(
            dimension_semantics=("parallel",),
            vmem_limit_bytes=32 * 1024 * 1024,
        ),
    )(planes, w_mat, gamma_beta, mask)

    # (NB, 128, P) is channel-major -> NCHW is a free reshape.
    return out.reshape(1, C, oh, ow)


def _reference(x, weight, gamma, beta):
    """Pure-JAX f32 reference mirroring the PyTorch module (training-mode BN)."""
    x39 = jnp.maximum(x, 0.0)
    x40 = lax.conv_general_dilated(
        x39, weight, window_strides=(STRIDE, STRIDE),
        padding=((PAD, PAD), (PAD, PAD)),
        dimension_numbers=("NCHW", "OIHW", "NCHW"),
        feature_group_count=GROUPS)
    mean = jnp.mean(x40, axis=(0, 2, 3), keepdims=True)
    var = jnp.mean((x40 - mean) ** 2, axis=(0, 2, 3), keepdims=True)
    x41 = (x40 - mean) * lax.rsqrt(var + EPS)
    x41 = x41 * gamma.reshape(1, C, 1, 1) + beta.reshape(1, C, 1, 1)
    return jnp.maximum(x41, 0.0)


if __name__ == "__main__":
    key = jax.random.PRNGKey(0)
    k_x, k_w, k_g, k_b = jax.random.split(key, 4)

    # Small spatial size for the test (original module used 56x56); channel /
    # group structure kept exactly as the module requires (512 ch, 32 groups).
    H = W = 16
    x = jax.random.normal(k_x, (1, C, H, W), dtype=jnp.float32)
    weight = jax.random.normal(k_w, (C, CG, KH, KW), dtype=jnp.float32) * 0.05
    gamma = 1.0 + 0.1 * jax.random.normal(k_g, (C,), dtype=jnp.float32)
    beta = 0.1 * jax.random.normal(k_b, (C,), dtype=jnp.float32)

    out = jax.block_until_ready(fused_relu_gconv_bn_relu(x, weight, gamma, beta))
    ref = jax.block_until_ready(_reference(x, weight, gamma, beta))

    assert out.shape == ref.shape == (1, C, H // 2, W // 2), out.shape
    max_err = float(jnp.max(jnp.abs(out - ref)))
    # bf16 MXU operands (f32 accumulation, f32 BN) -> tolerance relaxed vs f32.
    assert jnp.allclose(out, ref, atol=5e-2, rtol=5e-2), max_err

    print("KERNEL_OK")
</pallas_src>

<mosaic_0001>
module attributes {stable_mosaic.version = 11 : i64} {
  func.func @_fused_block_kernel(%arg0: i32, %arg1: memref<2x2x128x72xbf16, #tpu.memory_space<vmem>>, %arg2: memref<1x8x16x144xbf16, #tpu.memory_space<vmem>>, %arg3: memref<1x128x2xf32, #tpu.memory_space<vmem>>, %arg4: memref<1x64xbf16, #tpu.memory_space<vmem>>, %arg5: memref<1x128x64xf32, #tpu.memory_space<vmem>>, %arg6: memref<144x64xbf16, #tpu.memory_space<vmem>>) attributes {dimension_semantics = [#tpu.dimension_semantics<parallel>], iteration_bounds = array<i64: 4>, scalar_prefetch = 0 : i64, scratch_operands = 1 : i64, tpu.core_type = #tpu.core_type<tc>, window_params = [{transform_indices = @transform_0, window_bounds = array<i64: 2, 2, 128, 72>}, {transform_indices = @transform_1, window_bounds = array<i64: 1, 8, 16, 144>}, {transform_indices = @transform_2, window_bounds = array<i64: 1, 128, 2>}, {pipeline_mode = #tpu.pipeline_mode<synchronous>, transform_indices = @transform_3, window_bounds = array<i64: 1, 64>}, {transform_indices = @transform_4, window_bounds = array<i64: 1, 128, 64>}]} {
    %c0 = arith.constant 0 : index
    %c0_0 = arith.constant 0 : index
    %0 = vector.load %arg4[%c0, %c0_0] : memref<1x64xbf16, #tpu.memory_space<vmem>>, vector<1x64xbf16>
    %c0_1 = arith.constant 0 : index
    %c0_2 = arith.constant 0 : index
    %c0_3 = arith.constant 0 : index
    %c0_4 = arith.constant 0 : index
    %1 = vector.load %arg1[%c0_1, %c0_2, %c0_3, %c0_4] : memref<2x2x128x72xbf16, #tpu.memory_space<vmem>>, vector<1x1x16x63xbf16>
    %2 = vector.shape_cast %1 : vector<1x1x16x63xbf16> to vector<16x63xbf16>
    %cst = arith.constant 0.000000e+00 : bf16
    %3 = vector.broadcast %cst : bf16 to vector<16x1xbf16>
    %4 = tpu.concatenate %3, %2 in 1 : vector<16x1xbf16>, vector<16x63xbf16> -> vector<16x64xbf16>
    %5 = vector.broadcast %0 : vector<1x64xbf16> to vector<16x64xbf16>
    %6 = arith.mulf %4, %5 : vector<16x64xbf16>
    %c0_5 = arith.constant 0 : index
    %c0_6 = arith.constant 0 : index
    %7 = vector.load %arg6[%c0_5, %c0_6] : memref<144x64xbf16, #tpu.memory_space<vmem>>, vector<16x64xbf16>
    tpu.vector_store %arg6[%c0_5, %c0_6], %6 {strides = array<i32>} : memref<144x64xbf16, #tpu.memory_space<vmem>>, vector<16x64xbf16>,
    %c0_7 = arith.constant 0 : index
    %c1 = arith.constant 1 : index
    %c0_8 = arith.constant 0 : index
    %c0_9 = arith.constant 0 : index
    %8 = vector.load %arg1[%c0_7, %c1, %c0_8, %c0_9] : memref<2x2x128x72xbf16, #tpu.memory_space<vmem>>, vector<1x1x16x64xbf16>
    %9 = vector.shape_cast %8 : vector<1x1x16x64xbf16> to vector<16x64xbf16>
    %c16 = arith.constant 16 : index
    %c0_10 = arith.constant 0 : index
    %10 = vector.load %arg6[%c16, %c0_10] : memref<144x64xbf16, #tpu.memory_space<vmem>>, vector<16x64xbf16>
    tpu.vector_store %arg6[%c16, %c0_10], %9 {strides = array<i32>} : memref<144x64xbf16, #tpu.memory_space<vmem>>, vector<16x64xbf16>,
    %c0_11 = arith.constant 0 : index
    %c0_12 = arith.constant 0 : index
    %c0_13 = arith.constant 0 : index
    %c0_14 = arith.constant 0 : index
    %11 = vector.load %arg1[%c0_11, %c0_12, %c0_13, %c0_14] : memref<2x2x128x72xbf16, #tpu.memory_space<vmem>>, vector<1x1x16x64xbf16>
    %12 = vector.shape_cast %11 : vector<1x1x16x64xbf16> to vector<16x64xbf16>
    %c32 = arith.constant 32 : index
    %c0_15 = arith.constant 0 : index
    %13 = vector.load %arg6[%c32, %c0_15] : memref<144x64xbf16, #tpu.memory_space<vmem>>, vector<16x64xbf16>
    tpu.vector_store %arg6[%c32, %c0_15], %12 {strides = array<i32>} : memref<144x64xbf16, #tpu.memory_space<vmem>>, vector<16x64xbf16>,
    %c1_16 = arith.constant 1 : index
    %c0_17 = arith.constant 0 : index
    %c0_18 = arith.constant 0 : index
    %c0_19 = arith.constant 0 : index
    %14 = vector.load %arg1[%c1_16, %c0_17, %c0_18, %c0_19] : memref<2x2x128x72xbf16, #tpu.memory_space<vmem>>, vector<1x1x16x63xbf16>
    %15 = vector.shape_cast %14 : vector<1x1x16x63xbf16> to vector<16x63xbf16>
    %cst_20 = arith.constant 0.000000e+00 : bf16
    %16 = vector.broadcast %cst_20 : bf16 to vector<16x1xbf16>
    %17 = tpu.concatenate %16, %15 in 1 : vector<16x1xbf16>, vector<16x63xbf16> -> vector<16x64xbf16>
    %18 = vector.broadcast %0 : vector<1x64xbf16> to vector<16x64xbf16>
    %19 = arith.mulf %17, %18 : vector<16x64xbf16>
    %c48 = arith.constant 48 : index
    %c0_21 = arith.constant 0 : index
    %20 = vector.load %arg6[%c48, %c0_21] : memref<144x64xbf16, #tpu.memory_space<vmem>>, vector<16x64xbf16>
    tpu.vector_store %arg6[%c48, %c0_21], %19 {strides = array<i32>} : memref<144x64xbf16, #tpu.memory_space<vmem>>, vector<16x64xbf16>,
    %c1_22 = arith.constant 1 : index
    %c1_23 = arith.constant 1 : index
    %c0_24 = arith.constant 0 : index
    %c0_25 = arith.constant 0 : index
    %21 = vector.load %arg1[%c1_22, %c1_23, %c0_24, %c0_25] : memref<2x2x128x72xbf16, #tpu.memory_space<vmem>>, vector<1x1x16x64xbf16>
    %22 = vector.shape_cast %21 : vector<1x1x16x64xbf16> to vector<16x64xbf16>
    %c64 = arith.constant 64 : index
    %c0_26 = arith.constant 0 : index
    %23 = vector.load %arg6[%c64, %c0_26] : memref<144x64xbf16, #tpu.memory_space<vmem>>, vector<16x64xbf16>
    tpu.vector_store %arg6[%c64, %c0_26], %22 {strides = array<i32>} : memref<144x64xbf16, #tpu.memory_space<vmem>>, vector<16x64xbf16>,
    %c1_27 = arith.constant 1 : index
    %c0_28 = arith.constant 0 : index
    %c0_29 = arith.constant 0 : index
    %c0_30 = arith.constant 0 : index
    %24 = vector.load %arg1[%c1_27, %c0_28, %c0_29, %c0_30] : memref<2x2x128x72xbf16, #tpu.memory_space<vmem>>, vector<1x1x16x64xbf16>
    %25 = vector.shape_cast %24 : vector<1x1x16x64xbf16> to vector<16x64xbf16>
    %c80 = arith.constant 80 : index
    %c0_31 = arith.constant 0 : index
    %26 = vector.load %arg6[%c80, %c0_31] : memref<144x64xbf16, #tpu.memory_space<vmem>>, vector<16x64xbf16>
    tpu.vector_store %arg6[%c80, %c0_31], %25 {strides = array<i32>} : memref<144x64xbf16, #tpu.memory_space<vmem>>, vector<16x64xbf16>,
    %c0_32 = arith.constant 0 : index
    %c0_33 = arith.constant 0 : index
    %c0_34 = arith.constant 0 : index
    %c8 = arith.constant 8 : index
    %27 = vector.load %arg1[%c0_32, %c0_33, %c0_34, %c8] : memref<2x2x128x72xbf16, #tpu.memory_space<vmem>>, vector<1x1x16x63xbf16>
    %28 = vector.shape_cast %27 : vector<1x1x16x63xbf16> to vector<16x63xbf16>
    %cst_35 = arith.constant 0.000000e+00 : bf16
    %29 = vector.broadcast %cst_35 : bf16 to vector<16x1xbf16>
    %30 = tpu.concatenate %29, %28 in 1 : vector<16x1xbf16>, vector<16x63xbf16> -> vector<16x64xbf16>
    %31 = vector.broadcast %0 : vector<1x64xbf16> to vector<16x64xbf16>
    %32 = arith.mulf %30, %31 : vector<16x64xbf16>
    %c96 = arith.constant 96 : index
    %c0_36 = arith.constant 0 : index
    %33 = vector.load %arg6[%c96, %c0_36] : memref<144x64xbf16, #tpu.memory_space<vmem>>, vector<16x64xbf16>
    tpu.vector_store %arg6[%c96, %c0_36], %32 {strides = array<i32>} : memref<144x64xbf16, #tpu.memory_space<vmem>>, vector<16x64xbf16>,
    %c0_37 = arith.constant 0 : index
    %c1_38 = arith.constant 1 : index
    %c0_39 = arith.constant 0 : index
    %c8_40 = arith.constant 8 : index
    %34 = vector.load %arg1[%c0_37, %c1_38, %c0_39, %c8_40] : memref<2x2x128x72xbf16, #tpu.memory_space<vmem>>, vector<1x1x16x64xbf16>
    %35 = vector.shape_cast %34 : vector<1x1x16x64xbf16> to vector<16x64xbf16>
    %c112 = arith.constant 112 : index
    %c0_41 = arith.constant 0 : index
    %36 = vector.load %arg6[%c112, %c0_41] : memref<144x64xbf16, #tpu.memory_space<vmem>>, vector<16x64xbf16>
    tpu.vector_store %arg6[%c112, %c0_41], %35 {strides = array<i32>} : memref<144x64xbf16, #tpu.memory_space<vmem>>, vector<16x64xbf16>,
    %c0_42 = arith.constant 0 : index
    %c0_43 = arith.constant 0 : index
    %c0_44 = arith.constant 0 : index
    %c8_45 = arith.constant 8 : index
    %37 = vector.load %arg1[%c0_42, %c0_43, %c0_44, %c8_45] : memref<2x2x128x72xbf16, #tpu.memory_space<vmem>>, vector<1x1x16x64xbf16>
    %38 = vector.shape_cast %37 : vector<1x1x16x64xbf16> to vector<16x64xbf16>
    %c128 = arith.constant 128 : index
    %c0_46 = arith.constant 0 : index
    %39 = vector.load %arg6[%c128, %c0_46] : memref<144x64xbf16, #tpu.memory_space<vmem>>, vector<16x64xbf16>
    tpu.vector_store %arg6[%c128, %c0_46], %38 {strides = array<i32>} : memref<144x64xbf16, #tpu.memory_space<vmem>>, vector<16x64xbf16>,
    %c0_47 = arith.constant 0 : index
    %c0_48 = arith.constant 0 : index
    %c0_49 = arith.constant 0 : index
    %c0_50 = arith.constant 0 : index
    %40 = vector.load %arg2[%c0_47, %c0_48, %c0_49, %c0_50] : memref<1x8x16x144xbf16, #tpu.memory_space<vmem>>, vector<1x1x16x144xbf16>
    %41 = vector.shape_cast %40 : vector<1x1x16x144xbf16> to vector<16x144xbf16>
    %c0_51 = arith.constant 0 : index
    %c0_52 = arith.constant 0 : index
    %42 = vector.load %arg6[%c0_51, %c0_52] : memref<144x64xbf16, #tpu.memory_space<vmem>>, vector<144x64xbf16>
    %cst_53 = arith.constant dense<0.000000e+00> : vector<16x64xf32>
    %43 = tpu.matmul %41, %42, %cst_53 {dimension_numbers = #tpu.dot_dimension_numbers<[1], [0], [0], [1], [0, 0, 1, 1], [], []>} : vector<16x144xbf16>, vector<144x64xbf16>, vector<16x64xf32> -> vector<16x64xf32>
    %c0_54 = arith.constant 0 : index
    %c0_55 = arith.constant 0 : index
    %c0_56 = arith.constant 0 : index
    %44 = vector.load %arg5[%c0_54, %c0_55, %c0_56] : memref<1x128x64xf32, #tpu.memory_space<vmem>>, vector<1x16x64xf32>
    %45 = vector.shape_cast %44 : vector<1x16x64xf32> to vector<16x64xf32>
    %46 = vector.shape_cast %43 : vector<16x64xf32> to vector<1x16x64xf32>
    tpu.vector_store %arg5[%c0_54, %c0_55, %c0_56], %46 {strides = array<i32>} : memref<1x128x64xf32, #tpu.memory_space<vmem>>, vector<1x16x64xf32>,
    %cst_57 = arith.constant dense<0.000000e+00> : vector<16xf32>
    %47 = vector.multi_reduction <add>, %43, %cst_57 [1] : vector<16x64xf32> to vector<16xf32>
    %48 = vector.shape_cast %47 : vector<16xf32> to vector<16x1xf32>
    %49 = arith.mulf %43, %43 : vector<16x64xf32>
    %cst_58 = arith.constant dense<0.000000e+00> : vector<16xf32>
    %50 = vector.multi_reduction <add>, %49, %cst_58 [1] : vector<16x64xf32> to vector<16xf32>
    %51 = vector.shape_cast %50 : vector<16xf32> to vector<16x1xf32>
    %c0_59 = arith.constant 0 : index
    %c0_60 = arith.constant 0 : index
    %c16_61 = arith.constant 16 : index
    %c0_62 = arith.constant 0 : index
    %52 = vector.load %arg1[%c0_59, %c0_60, %c16_61, %c0_62] : memref<2x2x128x72xbf16, #tpu.memory_space<vmem>>, vector<1x1x16x63xbf16>
    %53 = vector.shape_cast %52 : vector<1x1x16x63xbf16> to vector<16x63xbf16>
    %cst_63 = arith.constant 0.000000e+00 : bf16
    %54 = vector.broadcast %cst_63 : bf16 to vector<16x1xbf16>
    %55 = tpu.concatenate %54, %53 in 1 : vector<16x1xbf16>, vector<16x63xbf16> -> vector<16x64xbf16>
    %56 = vector.broadcast %0 : vector<1x64xbf16> to vector<16x64xbf16>
    %57 = arith.mulf %55, %56 : vector<16x64xbf16>
    %c0_64 = arith.constant 0 : index
    %c0_65 = arith.constant 0 : index
    %58 = vector.load %arg6[%c0_64, %c0_65] : memref<144x64xbf16, #tpu.memory_space<vmem>>, vector<16x64xbf16>
    tpu.vector_store %arg6[%c0_64, %c0_65], %57 {strides = array<i32>} : memref<144x64xbf16, #tpu.memory_space<vmem>>, vector<16x64xbf16>,
    %c0_66 = arith.constant 0 : index
    %c1_67 = arith.constant 1 : index
    %c16_68 = arith.constant 16 : index
    %c0_69 = arith.constant 0 : index
    %59 = vector.load %arg1[%c0_66, %c1_67, %c16_68, %c0_69] : memref<2x2x128x72xbf16, #tpu.memory_space<vmem>>, vector<1x1x16x64xbf16>
    %60 = vector.shape_cast %59 : vector<1x1x16x64xbf16> to vector<16x64xbf16>
    %c16_70 = arith.constant 16 : index
    %c0_71 = arith.constant 0 : index
    %61 = vector.load %arg6[%c16_70, %c0_71] : memref<144x64xbf16, #tpu.memory_space<vmem>>, vector<16x64xbf16>
    tpu.vector_store %arg6[%c16_70, %c0_71], %60 {strides = array<i32>} : memref<144x64xbf16, #tpu.memory_space<vmem>>, vector<16x64xbf16>,
    %c0_72 = arith.constant 0 : index
    %c0_73 = arith.constant 0 : index
    %c16_74 = arith.constant 16 : index
    %c0_75 = arith.constant 0 : index
    %62 = vector.load %arg1[%c0_72, %c0_73, %c16_74, %c0_75] : memref<2x2x128x72xbf16, #tpu.memory_space<vmem>>, vector<1x1x16x64xbf16>
    %63 = vector.shape_cast %62 : vector<1x1x16x64xbf16> to vector<16x64xbf16>
    %c32_76 = arith.constant 32 : index
    %c0_77 = arith.constant 0 : index
    %64 = vector.load %arg6[%c32_76, %c0_77] : memref<144x64xbf16, #tpu.memory_space<vmem>>, vector<16x64xbf16>
    tpu.vector_store %arg6[%c32_76, %c0_77], %63 {strides = array<i32>} : memref<144x64xbf16, #tpu.memory_space<vmem>>, vector<16x64xbf16>,
    %c1_78 = arith.constant 1 : index
    %c0_79 = arith.constant 0 : index
    %c16_80 = arith.constant 16 : index
    %c0_81 = arith.constant 0 : index
    %65 = vector.load %arg1[%c1_78, %c0_79, %c16_80, %c0_81] : memref<2x2x128x72xbf16, #tpu.memory_space<vmem>>, vector<1x1x16x63xbf16>
    %66 = vector.shape_cast %65 : vector<1x1x16x63xbf16> to vector<16x63xbf16>
    %cst_82 = arith.constant 0.000000e+00 : bf16
    %67 = vector.broadcast %cst_82 : bf16 to vector<16x1xbf16>
    %68 = tpu.concatenate %67, %66 in 1 : vector<16x1xbf16>, vector<16x63xbf16> -> vector<16x64xbf16>
    %69 = vector.broadcast %0 : vector<1x64xbf16> to vector<16x64xbf16>
    %70 = arith.mulf %68, %69 : vector<16x64xbf16>
    %c48_83 = arith.constant 48 : index
    %c0_84 = arith.constant 0 : index
    %71 = vector.load %arg6[%c48_83, %c0_84] : memref<144x64xbf16, #tpu.memory_space<vmem>>, vector<16x64xbf16>
    tpu.vector_store %arg6[%c48_83, %c0_84], %70 {strides = array<i32>} : memref<144x64xbf16, #tpu.memory_space<vmem>>, vector<16x64xbf16>,
    %c1_85 = arith.constant 1 : index
    %c1_86 = arith.constant 1 : index
    %c16_87 = arith.constant 16 : index
    %c0_88 = arith.constant 0 : index
    %72 = vector.load %arg1[%c1_85, %c1_86, %c16_87, %c0_88] : memref<2x2x128x72xbf16, #tpu.memory_space<vmem>>, vector<1x1x16x64xbf16>
    %73 = vector.shape_cast %72 : vector<1x1x16x64xbf16> to vector<16x64xbf16>
    %c64_89 = arith.constant 64 : index
    %c0_90 = arith.constant 0 : index
    %74 = vector.load %arg6[%c64_89, %c0_90] : memref<144x64xbf16, #tpu.memory_space<vmem>>, vector<16x64xbf16>
    tpu.vector_store %arg6[%c64_89, %c0_90], %73 {strides = array<i32>} : memref<144x64xbf16, #tpu.memory_space<vmem>>, vector<16x64xbf16>,
    %c1_91 = arith.constant 1 : index
    %c0_92 = arith.constant 0 : index
    %c16_93 = arith.constant 16 : index
    %c0_94 = arith.constant 0 : index
    %75 = vector.load %arg1[%c1_91, %c0_92, %c16_93, %c0_94] : memref<2x2x128x72xbf16, #tpu.memory_space<vmem>>, vector<1x1x16x64xbf16>
    %76 = vector.shape_cast %75 : vector<1x1x16x64xbf16> to vector<16x64xbf16>
    %c80_95 = arith.constant 80 : index
    %c0_96 = arith.constant 0 : index
    %77 = vector.load %arg6[%c80_95, %c0_96] : memref<144x64xbf16, #tpu.memory_space<vmem>>, vector<16x64xbf16>
    tpu.vector_store %arg6[%c80_95, %c0_96], %76 {strides = array<i32>} : memref<144x64xbf16, #tpu.memory_space<vmem>>, vector<16x64xbf16>,
    %c0_97 = arith.constant 0 : index
    %c0_98 = arith.constant 0 : index
    %c16_99 = arith.constant 16 : index
    %c8_100 = arith.constant 8 : index
    %78 = vector.load %arg1[%c0_97, %c0_98, %c16_99, %c8_100] : memref<2x2x128x72xbf16, #tpu.memory_space<vmem>>, vector<1x1x16x63xbf16>
    %79 = vector.shape_cast %78 : vector<1x1x16x63xbf16> to vector<16x63xbf16>
    %cst_101 = arith.constant 0.000000e+00 : bf16
    %80 = vector.broadcast %cst_101 : bf16 to vector<16x1xbf16>
    %81 = tpu.concatenate %80, %79 in 1 : vector<16x1xbf16>, vector<16x63xbf16> -> vector<16x64xbf16>
    %82 = vector.broadcast %0 : vector<1x64xbf16> to vector<16x64xbf16>
    %83 = arith.mulf %81, %82 : vector<16x64xbf16>
    %c96_102 = arith.constant 96 : index
    %c0_103 = arith.constant 0 : index
    %84 = vector.load %arg6[%c96_102, %c0_103] : memref<144x64xbf16, #tpu.memory_space<vmem>>, vector<16x64xbf16>
    tpu.vector_store %arg6[%c96_102, %c0_103], %83 {strides = array<i32>} : memref<144x64xbf16, #tpu.memory_space<vmem>>, vector<16x64xbf16>,
    %c0_104 = arith.constant 0 : index
    %c1_105 = arith.constant 1 : index
    %c16_106 = arith.constant 16 : index
    %c8_107 = arith.constant 8 : index
    %85 = vector.load %arg1[%c0_104, %c1_105, %c16_106, %c8_107] : memref<2x2x128x72xbf16, #tpu.memory_space<vmem>>, vector<1x1x16x64xbf16>
    %86 = vector.shape_cast %85 : vector<1x1x16x64xbf16> to vector<16x64xbf16>
    %c112_108 = arith.constant 112 : index
    %c0_109 = arith.constant 0 : index
    %87 = vector.load %arg6[%c112_108, %c0_109] : memref<144x64xbf16, #tpu.memory_space<vmem>>, vector<16x64xbf16>
    tpu.vector_store %arg6[%c112_108, %c0_109], %86 {strides = array<i32>} : memref<144x64xbf16, #tpu.memory_space<vmem>>, vector<16x64xbf16>,
    %c0_110 = arith.constant 0 : index
    %c0_111 = arith.constant 0 : index
    %c16_112 = arith.constant 16 : index
    %c8_113 = arith.constant 8 : index
    %88 = vector.load %arg1[%c0_110, %c0_111, %c16_112, %c8_113] : memref<2x2x128x72xbf16, #tpu.memory_space<vmem>>, vector<1x1x16x64xbf16>
    %89 = vector.shape_cast %88 : vector<1x1x16x64xbf16> to vector<16x64xbf16>
    %c128_114 = arith.constant 128 : index
    %c0_115 = arith.constant 0 : index
    %90 = vector.load %arg6[%c128_114, %c0_115] : memref<144x64xbf16, #tpu.memory_space<vmem>>, vector<16x64xbf16>
    tpu.vector_store %arg6[%c128_114, %c0_115], %89 {strides = array<i32>} : memref<144x64xbf16, #tpu.memory_space<vmem>>, vector<16x64xbf16>,
    %c0_116 = arith.constant 0 : index
    %c1_117 = arith.constant 1 : index
    %c0_118 = arith.constant 0 : index
    %c0_119 = arith.constant 0 : index
    %91 = vector.load %arg2[%c0_116, %c1_117, %c0_118, %c0_119] : memref<1x8x16x144xbf16, #tpu.memory_space<vmem>>, vector<1x1x16x144xbf16>
    %92 = vector.shape_cast %91 : vector<1x1x16x144xbf16> to vector<16x144xbf16>
    %c0_120 = arith.constant 0 : index
    %c0_121 = arith.constant 0 : index
    %93 = vector.load %arg6[%c0_120, %c0_121] : memref<144x64xbf16, #tpu.memory_space<vmem>>, vector<144x64xbf16>
    %cst_122 = arith.constant dense<0.000000e+00> : vector<16x64xf32>
    %94 = tpu.matmul %92, %93, %cst_122 {dimension_numbers = #tpu.dot_dimension_numbers<[1], [0], [0], [1], [0, 0, 1, 1], [], []>} : vector<16x144xbf16>, vector<144x64xbf16>, vector<16x64xf32> -> vector<16x64xf32>
    %c0_123 = arith.constant 0 : index
    %c16_124 = arith.constant 16 : index
    %c0_125 = arith.constant 0 : index
    %95 = vector.load %arg5[%c0_123, %c16_124, %c0_125] : memref<1x128x64xf32, #tpu.memory_space<vmem>>, vector<1x16x64xf32>
    %96 = vector.shape_cast %95 : vector<1x16x64xf32> to vector<16x64xf32>
    %97 = vector.shape_cast %94 : vector<16x64xf32> to vector<1x16x64xf32>
    tpu.vector_store %arg5[%c0_123, %c16_124, %c0_125], %97 {strides = array<i32>} : memref<1x128x64xf32, #tpu.memory_space<vmem>>, vector<1x16x64xf32>,
    %cst_126 = arith.constant dense<0.000000e+00> : vector<16xf32>
    %98 = vector.multi_reduction <add>, %94, %cst_126 [1] : vector<16x64xf32> to vector<16xf32>
    %99 = vector.shape_cast %98 : vector<16xf32> to vector<16x1xf32>
    %100 = arith.mulf %94, %94 : vector<16x64xf32>
    %cst_127 = arith.constant dense<0.000000e+00> : vector<16xf32>
    %101 = vector.multi_reduction <add>, %100, %cst_127 [1] : vector<16x64xf32> to vector<16xf32>
    %102 = vector.shape_cast %101 : vector<16xf32> to vector<16x1xf32>
    %c0_128 = arith.constant 0 : index
    %c0_129 = arith.constant 0 : index
    %c32_130 = arith.constant 32 : index
    %c0_131 = arith.constant 0 : index
    %103 = vector.load %arg1[%c0_128, %c0_129, %c32_130, %c0_131] : memref<2x2x128x72xbf16, #tpu.memory_space<vmem>>, vector<1x1x16x63xbf16>
    %104 = vector.shape_cast %103 : vector<1x1x16x63xbf16> to vector<16x63xbf16>
    %cst_132 = arith.constant 0.000000e+00 : bf16
    %105 = vector.broadcast %cst_132 : bf16 to vector<16x1xbf16>
    %106 = tpu.concatenate %105, %104 in 1 : vector<16x1xbf16>, vector<16x63xbf16> -> vector<16x64xbf16>
    %107 = vector.broadcast %0 : vector<1x64xbf16> to vector<16x64xbf16>
    %108 = arith.mulf %106, %107 : vector<16x64xbf16>
    %c0_133 = arith.constant 0 : index
    %c0_134 = arith.constant 0 : index
    %109 = vector.load %arg6[%c0_133, %c0_134] : memref<144x64xbf16, #tpu.memory_space<vmem>>, vector<16x64xbf16>
    tpu.vector_store %arg6[%c0_133, %c0_134], %108 {strides = array<i32>} : memref<144x64xbf16, #tpu.memory_space<vmem>>, vector<16x64xbf16>,
    %c0_135 = arith.constant 0 : index
    %c1_136 = arith.constant 1 : index
    %c32_137 = arith.constant 32 : index
    %c0_138 = arith.constant 0 : index
    %110 = vector.load %arg1[%c0_135, %c1_136, %c32_137, %c0_138] : memref<2x2x128x72xbf16, #tpu.memory_space<vmem>>, vector<1x1x16x64xbf16>
    %111 = vector.shape_cast %110 : vector<1x1x16x64xbf16> to vector<16x64xbf16>
    %c16_139 = arith.constant 16 : index
    %c0_140 = arith.constant 0 : index
    %112 = vector.load %arg6[%c16_139, %c0_140] : memref<144x64xbf16, #tpu.memory_space<vmem>>, vector<16x64xbf16>
    tpu.vector_store %arg6[%c16_139, %c0_140], %111 {strides = array<i32>} : memref<144x64xbf16, #tpu.memory_space<vmem>>, vector<16x64xbf16>,
    %c0_141 = arith.constant 0 : index
    %c0_142 = arith.constant 0 : index
    %c32_143 = arith.constant 32 : index
    %c0_144 = arith.constant 0 : index
    %113 = vector.load %arg1[%c0_141, %c0_142, %c32_143, %c0_144] : memref<2x2x128x72xbf16, #tpu.memory_space<vmem>>, vector<1x1x16x64xbf16>
    %114 = vector.shape_cast %113 : vector<1x1x16x64xbf16> to vector<16x64xbf16>
    %c32_145 = arith.constant 32 : index
    %c0_146 = arith.constant 0 : index
    %115 = vector.load %arg6[%c32_145, %c0_146] : memref<144x64xbf16, #tpu.memory_space<vmem>>, vector<16x64xbf16>
    tpu.vector_store %arg6[%c32_145, %c0_146], %114 {strides = array<i32>} : memref<144x64xbf16, #tpu.memory_space<vmem>>, vector<16x64xbf16>,
    %c1_147 = arith.constant 1 : index
    %c0_148 = arith.constant 0 : index
    %c32_149 = arith.constant 32 : index
    %c0_150 = arith.constant 0 : index
    %116 = vector.load %arg1[%c1_147, %c0_148, %c32_149, %c0_150] : memref<2x2x128x72xbf16, #tpu.memory_space<vmem>>, vector<1x1x16x63xbf16>
    %117 = vector.shape_cast %116 : vector<1x1x16x63xbf16> to vector<16x63xbf16>
    %cst_151 = arith.constant 0.000000e+00 : bf16
    %118 = vector.broadcast %cst_151 : bf16 to vector<16x1xbf16>
    %119 = tpu.concatenate %118, %117 in 1 : vector<16x1xbf16>, vector<16x63xbf16> -> vector<16x64xbf16>
    %120 = vector.broadcast %0 : vector<1x64xbf16> to vector<16x64xbf16>
    %121 = arith.mulf %119, %120 : vector<16x64xbf16>
    %c48_152 = arith.constant 48 : index
    %c0_153 = arith.constant 0 : index
    %122 = vector.load %arg6[%c48_152, %c0_153] : memref<144x64xbf16, #tpu.memory_space<vmem>>, vector<16x64xbf16>
    tpu.vector_store %arg6[%c48_152, %c0_153], %121 {strides = array<i32>} : memref<144x64xbf16, #tpu.memory_space<vmem>>, vector<16x64xbf16>,
    %c1_154 = arith.constant 1 : index
    %c1_155 = arith.constant 1 : index
    %c32_156 = arith.constant 32 : index
    %c0_157 = arith.constant 0 : index
    %123 = vector.load %arg1[%c1_154, %c1_155, %c32_156, %c0_157] : memref<2x2x128x72xbf16, #tpu.memory_space<vmem>>, vector<1x1x16x64xbf16>
    %124 = vector.shape_cast %123 : vector<1x1x16x64xbf16> to vector<16x64xbf16>
    %c64_158 = arith.constant 64 : index
    %c0_159 = arith.constant 0 : index
    %125 = vector.load %arg6[%c64_158, %c0_159] : memref<144x64xbf16, #tpu.memory_space<vmem>>, vector<16x64xbf16>
    tpu.vector_store %arg6[%c64_158, %c0_159], %124 {strides = array<i32>} : memref<144x64xbf16, #tpu.memory_space<vmem>>, vector<16x64xbf16>,
    %c1_160 = arith.constant 1 : index
    %c0_161 = arith.constant 0 : index
    %c32_162 = arith.constant 32 : index
    %c0_163 = arith.constant 0 : index
    %126 = vector.load %arg1[%c1_160, %c0_161, %c32_162, %c0_163] : memref<2x2x128x72xbf16, #tpu.memory_space<vmem>>, vector<1x1x16x64xbf16>
    %127 = vector.shape_cast %126 : vector<1x1x16x64xbf16> to vector<16x64xbf16>
    %c80_164 = arith.constant 80 : index
    %c0_165 = arith.constant 0 : index
    %128 = vector.load %arg6[%c80_164, %c0_165] : memref<144x64xbf16, #tpu.memory_space<vmem>>, vector<16x64xbf16>
    tpu.vector_store %arg6[%c80_164, %c0_165], %127 {strides = array<i32>} : memref<144x64xbf16, #tpu.memory_space<vmem>>, vector<16x64xbf16>,
    %c0_166 = arith.constant 0 : index
    %c0_167 = arith.constant 0 : index
    %c32_168 = arith.constant 32 : index
    %c8_169 = arith.constant 8 : index
    %129 = vector.load %arg1[%c0_166, %c0_167, %c32_168, %c8_169] : memref<2x2x128x72xbf16, #tpu.memory_space<vmem>>, vector<1x1x16x63xbf16>
    %130 = vector.shape_cast %129 : vector<1x1x16x63xbf16> to vector<16x63xbf16>
    %cst_170 = arith.constant 0.000000e+00 : bf16
    %131 = vector.broadcast %cst_170 : bf16 to vector<16x1xbf16>
    %132 = tpu.concatenate %131, %130 in 1 : vector<16x1xbf16>, vector<16x63xbf16> -> vector<16x64xbf16>
    %133 = vector.broadcast %0 : vector<1x64xbf16> to vector<16x64xbf16>
    %134 = arith.mulf %132, %133 : vector<16x64xbf16>
    %c96_171 = arith.constant 96 : index
    %c0_172 = arith.constant 0 : index
    %135 = vector.load %arg6[%c96_171, %c0_172] : memref<144x64xbf16, #tpu.memory_space<vmem>>, vector<16x64xbf16>
    tpu.vector_store %arg6[%c96_171, %c0_172], %134 {strides = array<i32>} : memref<144x64xbf16, #tpu.memory_space<vmem>>, vector<16x64xbf16>,
    %c0_173 = arith.constant 0 : index
    %c1_174 = arith.constant 1 : index
    %c32_175 = arith.constant 32 : index
    %c8_176 = arith.constant 8 : index
    %136 = vector.load %arg1[%c0_173, %c1_174, %c32_175, %c8_176] : memref<2x2x128x72xbf16, #tpu.memory_space<vmem>>, vector<1x1x16x64xbf16>
    %137 = vector.shape_cast %136 : vector<1x1x16x64xbf16> to vector<16x64xbf16>
    %c112_177 = arith.constant 112 : index
    %c0_178 = arith.constant 0 : index
    %138 = vector.load %arg6[%c112_177, %c0_178] : memref<144x64xbf16, #tpu.memory_space<vmem>>, vector<16x64xbf16>
    tpu.vector_store %arg6[%c112_177, %c0_178], %137 {strides = array<i32>} : memref<144x64xbf16, #tpu.memory_space<vmem>>, vector<16x64xbf16>,
    %c0_179 = arith.constant 0 : index
    %c0_180 = arith.constant 0 : index
    %c32_181 = arith.constant 32 : index
    %c8_182 = arith.constant 8 : index
    %139 = vector.load %arg1[%c0_179, %c0_180, %c32_181, %c8_182] : memref<2x2x128x72xbf16, #tpu.memory_space<vmem>>, vector<1x1x16x64xbf16>
    %140 = vector.shape_cast %139 : vector<1x1x16x64xbf16> to vector<16x64xbf16>
    %c128_183 = arith.constant 128 : index
    %c0_184 = arith.constant 0 : index
    %141 = vector.load %arg6[%c128_183, %c0_184] : memref<144x64xbf16, #tpu.memory_space<vmem>>, vector<16x64xbf16>
    tpu.vector_store %arg6[%c128_183, %c0_184], %140 {strides = array<i32>} : memref<144x64xbf16, #tpu.memory_space<vmem>>, vector<16x64xbf16>,
    %c0_185 = arith.constant 0 : index
    %c2 = arith.constant 2 : index
    %c0_186 = arith.constant 0 : index
    %c0_187 = arith.constant 0 : index
    %142 = vector.load %arg2[%c0_185, %c2, %c0_186, %c0_187] : memref<1x8x16x144xbf16, #tpu.memory_space<vmem>>, vector<1x1x16x144xbf16>
    %143 = vector.shape_cast %142 : vector<1x1x16x144xbf16> to vector<16x144xbf16>
    %c0_188 = arith.constant 0 : index
    %c0_189 = arith.constant 0 : index
    %144 = vector.load %arg6[%c0_188, %c0_189] : memref<144x64xbf16, #tpu.memory_space<vmem>>, vector<144x64xbf16>
    %cst_190 = arith.constant dense<0.000000e+00> : vector<16x64xf32>
    %145 = tpu.matmul %143, %144, %cst_190 {dimension_numbers = #tpu.dot_dimension_numbers<[1], [0], [0], [1], [0, 0, 1, 1], [], []>} : vector<16x144xbf16>, vector<144x64xbf16>, vector<16x64xf32> -> vector<16x64xf32>
    %c0_191 = arith.constant 0 : index
    %c32_192 = arith.constant 32 : index
    %c0_193 = arith.constant 0 : index
    %146 = vector.load %arg5[%c0_191, %c32_192, %c0_193] : memref<1x128x64xf32, #tpu.memory_space<vmem>>, vector<1x16x64xf32>
    %147 = vector.shape_cast %146 : vector<1x16x64xf32> to vector<16x64xf32>
    %148 = vector.shape_cast %145 : vector<16x64xf32> to vector<1x16x64xf32>
    tpu.vector_store %arg5[%c0_191, %c32_192, %c0_193], %148 {strides = array<i32>} : memref<1x128x64xf32, #tpu.memory_space<vmem>>, vector<1x16x64xf32>,
    %cst_194 = arith.constant dense<0.000000e+00> : vector<16xf32>
    %149 = vector.multi_reduction <add>, %145, %cst_194 [1] : vector<16x64xf32> to vector<16xf32>
    %150 = vector.shape_cast %149 : vector<16xf32> to vector<16x1xf32>
    %151 = arith.mulf %145, %145 : vector<16x64xf32>
    %cst_195 = arith.constant dense<0.000000e+00> : vector<16xf32>
    %152 = vector.multi_reduction <add>, %151, %cst_195 [1] : vector<16x64xf32> to vector<16xf32>
    %153 = vector.shape_cast %152 : vector<16xf32> to vector<16x1xf32>
    %c0_196 = arith.constant 0 : index
    %c0_197 = arith.constant 0 : index
    %c48_198 = arith.constant 48 : index
    %c0_199 = arith.constant 0 : index
    %154 = vector.load %arg1[%c0_196, %c0_197, %c48_198, %c0_199] : memref<2x2x128x72xbf16, #tpu.memory_space<vmem>>, vector<1x1x16x63xbf16>
    %155 = vector.shape_cast %154 : vector<1x1x16x63xbf16> to vector<16x63xbf16>
    %cst_200 = arith.constant 0.000000e+00 : bf16
    %156 = vector.broadcast %cst_200 : bf16 to vector<16x1xbf16>
    %157 = tpu.concatenate %156, %155 in 1 : vector<16x1xbf16>, vector<16x63xbf16> -> vector<16x64xbf16>
    %158 = vector.broadcast %0 : vector<1x64xbf16> to vector<16x64xbf16>
    %159 = arith.mulf %157, %158 : vector<16x64xbf16>
    %c0_201 = arith.constant 0 : index
    %c0_202 = arith.constant 0 : index
    %160 = vector.load %arg6[%c0_201, %c0_202] : memref<144x64xbf16, #tpu.memory_space<vmem>>, vector<16x64xbf16>
    tpu.vector_store %arg6[%c0_201, %c0_202], %159 {strides = array<i32>} : memref<144x64xbf16, #tpu.memory_space<vmem>>, vector<16x64xbf16>,
    %c0_203 = arith.constant 0 : index
    %c1_204 = arith.constant 1 : index
    %c48_205 = arith.constant 48 : index
    %c0_206 = arith.constant 0 : index
    %161 = vector.load %arg1[%c0_203, %c1_204, %c48_205, %c0_206] : memref<2x2x128x72xbf16, #tpu.memory_space<vmem>>, vector<1x1x16x64xbf16>
    %162 = vector.shape_cast %161 : vector<1x1x16x64xbf16> to vector<16x64xbf16>
    %c16_207 = arith.constant 16 : index
    %c0_208 = arith.constant 0 : index
    %163 = vector.load %arg6[%c16_207, %c0_208] : memref<144x64xbf16, #tpu.memory_space<vmem>>, vector<16x64xbf16>
    tpu.vector_store %arg6[%c16_207, %c0_208], %162 {strides = array<i32>} : memref<144x64xbf16, #tpu.memory_space<vmem>>, vector<16x64xbf16>,
    %c0_209 = arith.constant 0 : index
    %c0_210 = arith.constant 0 : index
    %c48_211 = arith.constant 48 : index
    %c0_212 = arith.constant 0 : index
    %164 = vector.load %arg1[%c0_209, %c0_210, %c48_211, %c0_212] : memref<2x2x128x72xbf16, #tpu.memory_space<vmem>>, vector<1x1x16x64xbf16>
    %165 = vector.shape_cast %164 : vector<1x1x16x64xbf16> to vector<16x64xbf16>
    %c32_213 = arith.constant 32 : index
    %c0_214 = arith.constant 0 : index
    %166 = vector.load %arg6[%c32_213, %c0_214] : memref<144x64xbf16, #tpu.memory_space<vmem>>, vector<16x64xbf16>
    tpu.vector_store %arg6[%c32_213, %c0_214], %165 {strides = array<i32>} : memref<144x64xbf16, #tpu.memory_space<vmem>>, vector<16x64xbf16>,
    %c1_215 = arith.constant 1 : index
    %c0_216 = arith.constant 0 : index
    %c48_217 = arith.constant 48 : index
    %c0_218 = arith.constant 0 : index
    %167 = vector.load %arg1[%c1_215, %c0_216, %c48_217, %c0_218] : memref<2x2x128x72xbf16, #tpu.memory_space<vmem>>, vector<1x1x16x63xbf16>
    %168 = vector.shape_cast %167 : vector<1x1x16x63xbf16> to vector<16x63xbf16>
    %cst_219 = arith.constant 0.000000e+00 : bf16
    %169 = vector.broadcast %cst_219 : bf16 to vector<16x1xbf16>
    %170 = tpu.concatenate %169, %168 in 1 : vector<16x1xbf16>, vector<16x63xbf16> -> vector<16x64xbf16>
    %171 = vector.broadcast %0 : vector<1x64xbf16> to vector<16x64xbf16>
    %172 = arith.mulf %170, %171 : vector<16x64xbf16>
    %c48_220 = arith.constant 48 : index
    %c0_221 = arith.constant 0 : index
    %173 = vector.load %arg6[%c48_220, %c0_221] : memref<144x64xbf16, #tpu.memory_space<vmem>>, vector<16x64xbf16>
    tpu.vector_store %arg6[%c48_220, %c0_221], %172 {strides = array<i32>} : memref<144x64xbf16, #tpu.memory_space<vmem>>, vector<16x64xbf16>,
    %c1_222 = arith.constant 1 : index
    %c1_223 = arith.constant 1 : index
    %c48_224 = arith.constant 48 : index
    %c0_225 = arith.constant 0 : index
    %174 = vector.load %arg1[%c1_222, %c1_223, %c48_224, %c0_225] : memref<2x2x128x72xbf16, #tpu.memory_space<vmem>>, vector<1x1x16x64xbf16>
    %175 = vector.shape_cast %174 : vector<1x1x16x64xbf16> to vector<16x64xbf16>
    %c64_226 = arith.constant 64 : index
    %c0_227 = arith.constant 0 : index
    %176 = vector.load %arg6[%c64_226, %c0_227] : memref<144x64xbf16, #tpu.memory_space<vmem>>, vector<16x64xbf16>
    tpu.vector_store %arg6[%c64_226, %c0_227], %175 {strides = array<i32>} : memref<144x64xbf16, #tpu.memory_space<vmem>>, vector<16x64xbf16>,
    %c1_228 = arith.constant 1 : index
    %c0_229 = arith.constant 0 : index
    %c48_230 = arith.constant 48 : index
    %c0_231 = arith.constant 0 : index
    %177 = vector.load %arg1[%c1_228, %c0_229, %c48_230, %c0_231] : memref<2x2x128x72xbf16, #tpu.memory_space<vmem>>, vector<1x1x16x64xbf16>
    %178 = vector.shape_cast %177 : vector<1x1x16x64xbf16> to vector<16x64xbf16>
    %c80_232 = arith.constant 80 : index
    %c0_233 = arith.constant 0 : index
    %179 = vector.load %arg6[%c80_232, %c0_233] : memref<144x64xbf16, #tpu.memory_space<vmem>>, vector<16x64xbf16>
    tpu.vector_store %arg6[%c80_232, %c0_233], %178 {strides = array<i32>} : memref<144x64xbf16, #tpu.memory_space<vmem>>, vector<16x64xbf16>,
    %c0_234 = arith.constant 0 : index
    %c0_235 = arith.constant 0 : index
    %c48_236 = arith.constant 48 : index
    %c8_237 = arith.constant 8 : index
    %180 = vector.load %arg1[%c0_234, %c0_235, %c48_236, %c8_237] : memref<2x2x128x72xbf16, #tpu.memory_space<vmem>>, vector<1x1x16x63xbf16>
    %181 = vector.shape_cast %180 : vector<1x1x16x63xbf16> to vector<16x63xbf16>
    %cst_238 = arith.constant 0.000000e+00 : bf16
    %182 = vector.broadcast %cst_238 : bf16 to vector<16x1xbf16>
    %183 = tpu.concatenate %182, %181 in 1 : vector<16x1xbf16>, vector<16x63xbf16> -> vector<16x64xbf16>
    %184 = vector.broadcast %0 : vector<1x64xbf16> to vector<16x64xbf16>
    %185 = arith.mulf %183, %184 : vector<16x64xbf16>
    %c96_239 = arith.constant 96 : index
    %c0_240 = arith.constant 0 : index
    %186 = vector.load %arg6[%c96_239, %c0_240] : memref<144x64xbf16, #tpu.memory_space<vmem>>, vector<16x64xbf16>
    tpu.vector_store %arg6[%c96_239, %c0_240], %185 {strides = array<i32>} : memref<144x64xbf16, #tpu.memory_space<vmem>>, vector<16x64xbf16>,
    %c0_241 = arith.constant 0 : index
    %c1_242 = arith.constant 1 : index
    %c48_243 = arith.constant 48 : index
    %c8_244 = arith.constant 8 : index
    %187 = vector.load %arg1[%c0_241, %c1_242, %c48_243, %c8_244] : memref<2x2x128x72xbf16, #tpu.memory_space<vmem>>, vector<1x1x16x64xbf16>
    %188 = vector.shape_cast %187 : vector<1x1x16x64xbf16> to vector<16x64xbf16>
    %c112_245 = arith.constant 112 : index
    %c0_246 = arith.constant 0 : index
    %189 = vector.load %arg6[%c112_245, %c0_246] : memref<144x64xbf16, #tpu.memory_space<vmem>>, vector<16x64xbf16>
    tpu.vector_store %arg6[%c112_245, %c0_246], %188 {strides = array<i32>} : memref<144x64xbf16, #tpu.memory_space<vmem>>, vector<16x64xbf16>,
    %c0_247 = arith.constant 0 : index
    %c0_248 = arith.constant 0 : index
    %c48_249 = arith.constant 48 : index
    %c8_250 = arith.constant 8 : index
    %190 = vector.load %arg1[%c0_247, %c0_248, %c48_249, %c8_250] : memref<2x2x128x72xbf16, #tpu.memory_space<vmem>>, vector<1x1x16x64xbf16>
    %191 = vector.shape_cast %190 : vector<1x1x16x64xbf16> to vector<16x64xbf16>
    %c128_251 = arith.constant 128 : index
    %c0_252 = arith.constant 0 : index
    %192 = vector.load %arg6[%c128_251, %c0_252] : memref<144x64xbf16, #tpu.memory_space<vmem>>, vector<16x64xbf16>
    tpu.vector_store %arg6[%c128_251, %c0_252], %191 {strides = array<i32>} : memref<144x64xbf16, #tpu.memory_space<vmem>>, vector<16x64xbf16>,
    %c0_253 = arith.constant 0 : index
    %c3 = arith.constant 3 : index
    %c0_254 = arith.constant 0 : index
    %c0_255 = arith.constant 0 : index
    %193 = vector.load %arg2[%c0_253, %c3, %c0_254, %c0_255] : memref<1x8x16x144xbf16, #tpu.memory_space<vmem>>, vector<1x1x16x144xbf16>
    %194 = vector.shape_cast %193 : vector<1x1x16x144xbf16> to vector<16x144xbf16>
    %c0_256 = arith.constant 0 : index
    %c0_257 = arith.constant 0 : index
    %195 = vector.load %arg6[%c0_256, %c0_257] : memref<144x64xbf16, #tpu.memory_space<vmem>>, vector<144x64xbf16>
    %cst_258 = arith.constant dense<0.000000e+00> : vector<16x64xf32>
    %196 = tpu.matmul %194, %195, %cst_258 {dimension_numbers = #tpu.dot_dimension_numbers<[1], [0], [0], [1], [0, 0, 1, 1], [], []>} : vector<16x144xbf16>, vector<144x64xbf16>, vector<16x64xf32> -> vector<16x64xf32>
    %c0_259 = arith.constant 0 : index
    %c48_260 = arith.constant 48 : index
    %c0_261 = arith.constant 0 : index
    %197 = vector.load %arg5[%c0_259, %c48_260, %c0_261] : memref<1x128x64xf32, #tpu.memory_space<vmem>>, vector<1x16x64xf32>
    %198 = vector.shape_cast %197 : vector<1x16x64xf32> to vector<16x64xf32>
    %199 = vector.shape_cast %196 : vector<16x64xf32> to vector<1x16x64xf32>
    tpu.vector_store %arg5[%c0_259, %c48_260, %c0_261], %199 {strides = array<i32>} : memref<1x128x64xf32, #tpu.memory_space<vmem>>, vector<1x16x64xf32>,
    %cst_262 = arith.constant dense<0.000000e+00> : vector<16xf32>
    %200 = vector.multi_reduction <add>, %196, %cst_262 [1] : vector<16x64xf32> to vector<16xf32>
    %201 = vector.shape_cast %200 : vector<16xf32> to vector<16x1xf32>
    %202 = arith.mulf %196, %196 : vector<16x64xf32>
    %cst_263 = arith.constant dense<0.000000e+00> : vector<16xf32>
    %203 = vector.multi_reduction <add>, %202, %cst_263 [1] : vector<16x64xf32> to vector<16xf32>
    %204 = vector.shape_cast %203 : vector<16xf32> to vector<16x1xf32>
    %c0_264 = arith.constant 0 : index
    %c0_265 = arith.constant 0 : index
    %c64_266 = arith.constant 64 : index
    %c0_267 = arith.constant 0 : index
    %205 = vector.load %arg1[%c0_264, %c0_265, %c64_266, %c0_267] : memref<2x2x128x72xbf16, #tpu.memory_space<vmem>>, vector<1x1x16x63xbf16>
    %206 = vector.shape_cast %205 : vector<1x1x16x63xbf16> to vector<16x63xbf16>
    %cst_268 = arith.constant 0.000000e+00 : bf16
    %207 = vector.broadcast %cst_268 : bf16 to vector<16x1xbf16>
    %208 = tpu.concatenate %207, %206 in 1 : vector<16x1xbf16>, vector<16x63xbf16> -> vector<16x64xbf16>
    %209 = vector.broadcast %0 : vector<1x64xbf16> to vector<16x64xbf16>
    %210 = arith.mulf %208, %209 : vector<16x64xbf16>
    %c0_269 = arith.constant 0 : index
    %c0_270 = arith.constant 0 : index
    %211 = vector.load %arg6[%c0_269, %c0_270] : memref<144x64xbf16, #tpu.memory_space<vmem>>, vector<16x64xbf16>
    tpu.vector_store %arg6[%c0_269, %c0_270], %210 {strides = array<i32>} : memref<144x64xbf16, #tpu.memory_space<vmem>>, vector<16x64xbf16>,
    %c0_271 = arith.constant 0 : index
    %c1_272 = arith.constant 1 : index
    %c64_273 = arith.constant 64 : index
    %c0_274 = arith.constant 0 : index
    %212 = vector.load %arg1[%c0_271, %c1_272, %c64_273, %c0_274] : memref<2x2x128x72xbf16, #tpu.memory_space<vmem>>, vector<1x1x16x64xbf16>
    %213 = vector.shape_cast %212 : vector<1x1x16x64xbf16> to vector<16x64xbf16>
    %c16_275 = arith.constant 16 : index
    %c0_276 = arith.constant 0 : index
    %214 = vector.load %arg6[%c16_275, %c0_276] : memref<144x64xbf16, #tpu.memory_space<vmem>>, vector<16x64xbf16>
    tpu.vector_store %arg6[%c16_275, %c0_276], %213 {strides = array<i32>} : memref<144x64xbf16, #tpu.memory_space<vmem>>, vector<16x64xbf16>,
    %c0_277 = arith.constant 0 : index
    %c0_278 = arith.constant 0 : index
    %c64_279 = arith.constant 64 : index
    %c0_280 = arith.constant 0 : index
    %215 = vector.load %arg1[%c0_277, %c0_278, %c64_279, %c0_280] : memref<2x2x128x72xbf16, #tpu.memory_space<vmem>>, vector<1x1x16x64xbf16>
    %216 = vector.shape_cast %215 : vector<1x1x16x64xbf16> to vector<16x64xbf16>
    %c32_281 = arith.constant 32 : index
    %c0_282 = arith.constant 0 : index
    %217 = vector.load %arg6[%c32_281, %c0_282] : memref<144x64xbf16, #tpu.memory_space<vmem>>, vector<16x64xbf16>
    tpu.vector_store %arg6[%c32_281, %c0_282], %216 {strides = array<i32>} : memref<144x64xbf16, #tpu.memory_space<vmem>>, vector<16x64xbf16>,
    %c1_283 = arith.constant 1 : index
    %c0_284 = arith.constant 0 : index
    %c64_285 = arith.constant 64 : index
    %c0_286 = arith.constant 0 : index
    %218 = vector.load %arg1[%c1_283, %c0_284, %c64_285, %c0_286] : memref<2x2x128x72xbf16, #tpu.memory_space<vmem>>, vector<1x1x16x63xbf16>
    %219 = vector.shape_cast %218 : vector<1x1x16x63xbf16> to vector<16x63xbf16>
    %cst_287 = arith.constant 0.000000e+00 : bf16
    %220 = vector.broadcast %cst_287 : bf16 to vector<16x1xbf16>
    %221 = tpu.concatenate %220, %219 in 1 : vector<16x1xbf16>, vector<16x63xbf16> -> vector<16x64xbf16>
    %222 = vector.broadcast %0 : vector<1x64xbf16> to vector<16x64xbf16>
    %223 = arith.mulf %221, %222 : vector<16x64xbf16>
    %c48_288 = arith.constant 48 : index
    %c0_289 = arith.constant 0 : index
    %224 = vector.load %arg6[%c48_288, %c0_289] : memref<144x64xbf16, #tpu.memory_space<vmem>>, vector<16x64xbf16>
    tpu.vector_store %arg6[%c48_288, %c0_289], %223 {strides = array<i32>} : memref<144x64xbf16, #tpu.memory_space<vmem>>, vector<16x64xbf16>,
    %c1_290 = arith.constant 1 : index
    %c1_291 = arith.constant 1 : index
    %c64_292 = arith.constant 64 : index
    %c0_293 = arith.constant 0 : index
    %225 = vector.load %arg1[%c1_290, %c1_291, %c64_292, %c0_293] : memref<2x2x128x72xbf16, #tpu.memory_space<vmem>>, vector<1x1x16x64xbf16>
    %226 = vector.shape_cast %225 : vector<1x1x16x64xbf16> to vector<16x64xbf16>
    %c64_294 = arith.constant 64 : index
    %c0_295 = arith.constant 0 : index
    %227 = vector.load %arg6[%c64_294, %c0_295] : memref<144x64xbf16, #tpu.memory_space<vmem>>, vector<16x64xbf16>
    tpu.vector_store %arg6[%c64_294, %c0_295], %226 {strides = array<i32>} : memref<144x64xbf16, #tpu.memory_space<vmem>>, vector<16x64xbf16>,
    %c1_296 = arith.constant 1 : index
    %c0_297 = arith.constant 0 : index
    %c64_298 = arith.constant 64 : index
    %c0_299 = arith.constant 0 : index
    %228 = vector.load %arg1[%c1_296, %c0_297, %c64_298, %c0_299] : memref<2x2x128x72xbf16, #tpu.memory_space<vmem>>, vector<1x1x16x64xbf16>
    %229 = vector.shape_cast %228 : vector<1x1x16x64xbf16> to vector<16x64xbf16>
    %c80_300 = arith.constant 80 : index
    %c0_301 = arith.constant 0 : index
    %230 = vector.load %arg6[%c80_300, %c0_301] : memref<144x64xbf16, #tpu.memory_space<vmem>>, vector<16x64xbf16>
    tpu.vector_store %arg6[%c80_300, %c0_301], %229 {strides = array<i32>} : memref<144x64xbf16, #tpu.memory_space<vmem>>, vector<16x64xbf16>,
    %c0_302 = arith.constant 0 : index
    %c0_303 = arith.constant 0 : index
    %c64_304 = arith.constant 64 : index
    %c8_305 = arith.constant 8 : index
    %231 = vector.load %arg1[%c0_302, %c0_303, %c64_304, %c8_305] : memref<2x2x128x72xbf16, #tpu.memory_space<vmem>>, vector<1x1x16x63xbf16>
    %232 = vector.shape_cast %231 : vector<1x1x16x63xbf16> to vector<16x63xbf16>
    %cst_306 = arith.constant 0.000000e+00 : bf16
    %233 = vector.broadcast %cst_306 : bf16 to vector<16x1xbf16>
    %234 = tpu.concatenate %233, %232 in 1 : vector<16x1xbf16>, vector<16x63xbf16> -> vector<16x64xbf16>
    %235 = vector.broadcast %0 : vector<1x64xbf16> to vector<16x64xbf16>
    %236 = arith.mulf %234, %235 : vector<16x64xbf16>
    %c96_307 = arith.constant 96 : index
    %c0_308 = arith.constant 0 : index
    %237 = vector.load %arg6[%c96_307, %c0_308] : memref<144x64xbf16, #tpu.memory_space<vmem>>, vector<16x64xbf16>
    tpu.vector_store %arg6[%c96_307, %c0_308], %236 {strides = array<i32>} : memref<144x64xbf16, #tpu.memory_space<vmem>>, vector<16x64xbf16>,
    %c0_309 = arith.constant 0 : index
    %c1_310 = arith.constant 1 : index
    %c64_311 = arith.constant 64 : index
    %c8_312 = arith.constant 8 : index
    %238 = vector.load %arg1[%c0_309, %c1_310, %c64_311, %c8_312] : memref<2x2x128x72xbf16, #tpu.memory_space<vmem>>, vector<1x1x16x64xbf16>
    %239 = vector.shape_cast %238 : vector<1x1x16x64xbf16> to vector<16x64xbf16>
    %c112_313 = arith.constant 112 : index
    %c0_314 = arith.constant 0 : index
    %240 = vector.load %arg6[%c112_313, %c0_314] : memref<144x64xbf16, #tpu.memory_space<vmem>>, vector<16x64xbf16>
    tpu.vector_store %arg6[%c112_313, %c0_314], %239 {strides = array<i32>} : memref<144x64xbf16, #tpu.memory_space<vmem>>, vector<16x64xbf16>,
    %c0_315 = arith.constant 0 : index
    %c0_316 = arith.constant 0 : index
    %c64_317 = arith.constant 64 : index
    %c8_318 = arith.constant 8 : index
    %241 = vector.load %arg1[%c0_315, %c0_316, %c64_317, %c8_318] : memref<2x2x128x72xbf16, #tpu.memory_space<vmem>>, vector<1x1x16x64xbf16>
    %242 = vector.shape_cast %241 : vector<1x1x16x64xbf16> to vector<16x64xbf16>
    %c128_319 = arith.constant 128 : index
    %c0_320 = arith.constant 0 : index
    %243 = vector.load %arg6[%c128_319, %c0_320] : memref<144x64xbf16, #tpu.memory_space<vmem>>, vector<16x64xbf16>
    tpu.vector_store %arg6[%c128_319, %c0_320], %242 {strides = array<i32>} : memref<144x64xbf16, #tpu.memory_space<vmem>>, vector<16x64xbf16>,
    %c0_321 = arith.constant 0 : index
    %c4 = arith.constant 4 : index
    %c0_322 = arith.constant 0 : index
    %c0_323 = arith.constant 0 : index
    %244 = vector.load %arg2[%c0_321, %c4, %c0_322, %c0_323] : memref<1x8x16x144xbf16, #tpu.memory_space<vmem>>, vector<1x1x16x144xbf16>
    %245 = vector.shape_cast %244 : vector<1x1x16x144xbf16> to vector<16x144xbf16>
    %c0_324 = arith.constant 0 : index
    %c0_325 = arith.constant 0 : index
    %246 = vector.load %arg6[%c0_324, %c0_325] : memref<144x64xbf16, #tpu.memory_space<vmem>>, vector<144x64xbf16>
    %cst_326 = arith.constant dense<0.000000e+00> : vector<16x64xf32>
    %247 = tpu.matmul %245, %246, %cst_326 {dimension_numbers = #tpu.dot_dimension_numbers<[1], [0], [0], [1], [0, 0, 1, 1], [], []>} : vector<16x144xbf16>, vector<144x64xbf16>, vector<16x64xf32> -> vector<16x64xf32>
    %c0_327 = arith.constant 0 : index
    %c64_328 = arith.constant 64 : index
    %c0_329 = arith.constant 0 : index
    %248 = vector.load %arg5[%c0_327, %c64_328, %c0_329] : memref<1x128x64xf32, #tpu.memory_space<vmem>>, vector<1x16x64xf32>
    %249 = vector.shape_cast %248 : vector<1x16x64xf32> to vector<16x64xf32>
    %250 = vector.shape_cast %247 : vector<16x64xf32> to vector<1x16x64xf32>
    tpu.vector_store %arg5[%c0_327, %c64_328, %c0_329], %250 {strides = array<i32>} : memref<1x128x64xf32, #tpu.memory_space<vmem>>, vector<1x16x64xf32>,
    %cst_330 = arith.constant dense<0.000000e+00> : vector<16xf32>
    %251 = vector.multi_reduction <add>, %247, %cst_330 [1] : vector<16x64xf32> to vector<16xf32>
    %252 = vector.shape_cast %251 : vector<16xf32> to vector<16x1xf32>
    %253 = arith.mulf %247, %247 : vector<16x64xf32>
    %cst_331 = arith.constant dense<0.000000e+00> : vector<16xf32>
    %254 = vector.multi_reduction <add>, %253, %cst_331 [1] : vector<16x64xf32> to vector<16xf32>
    %255 = vector.shape_cast %254 : vector<16xf32> to vector<16x1xf32>
    %c0_332 = arith.constant 0 : index
    %c0_333 = arith.constant 0 : index
    %c80_334 = arith.constant 80 : index
    %c0_335 = arith.constant 0 : index
    %256 = vector.load %arg1[%c0_332, %c0_333, %c80_334, %c0_335] : memref<2x2x128x72xbf16, #tpu.memory_space<vmem>>, vector<1x1x16x63xbf16>
    %257 = vector.shape_cast %256 : vector<1x1x16x63xbf16> to vector<16x63xbf16>
    %cst_336 = arith.constant 0.000000e+00 : bf16
    %258 = vector.broadcast %cst_336 : bf16 to vector<16x1xbf16>
    %259 = tpu.concatenate %258, %257 in 1 : vector<16x1xbf16>, vector<16x63xbf16> -> vector<16x64xbf16>
    %260 = vector.broadcast %0 : vector<1x64xbf16> to vector<16x64xbf16>
    %261 = arith.mulf %259, %260 : vector<16x64xbf16>
    %c0_337 = arith.constant 0 : index
    %c0_338 = arith.constant 0 : index
    %262 = vector.load %arg6[%c0_337, %c0_338] : memref<144x64xbf16, #tpu.memory_space<vmem>>, vector<16x64xbf16>
    tpu.vector_store %arg6[%c0_337, %c0_338], %261 {strides = array<i32>} : memref<144x64xbf16, #tpu.memory_space<vmem>>, vector<16x64xbf16>,
    %c0_339 = arith.constant 0 : index
    %c1_340 = arith.constant 1 : index
    %c80_341 = arith.constant 80 : index
    %c0_342 = arith.constant 0 : index
    %263 = vector.load %arg1[%c0_339, %c1_340, %c80_341, %c0_342] : memref<2x2x128x72xbf16, #tpu.memory_space<vmem>>, vector<1x1x16x64xbf16>
    %264 = vector.shape_cast %263 : vector<1x1x16x64xbf16> to vector<16x64xbf16>
    %c16_343 = arith.constant 16 : index
    %c0_344 = arith.constant 0 : index
    %265 = vector.load %arg6[%c16_343, %c0_344] : memref<144x64xbf16, #tpu.memory_space<vmem>>, vector<16x64xbf16>
    tpu.vector_store %arg6[%c16_343, %c0_344], %264 {strides = array<i32>} : memref<144x64xbf16, #tpu.memory_space<vmem>>, vector<16x64xbf16>,
    %c0_345 = arith.constant 0 : index
    %c0_346 = arith.constant 0 : index
    %c80_347 = arith.constant 80 : index
    %c0_348 = arith.constant 0 : index
    %266 = vector.load %arg1[%c0_345, %c0_346, %c80_347, %c0_348] : memref<2x2x128x72xbf16, #tpu.memory_space<vmem>>, vector<1x1x16x64xbf16>
    %267 = vector.shape_cast %266 : vector<1x1x16x64xbf16> to vector<16x64xbf16>
    %c32_349 = arith.constant 32 : index
    %c0_350 = arith.constant 0 : index
    %268 = vector.load %arg6[%c32_349, %c0_350] : memref<144x64xbf16, #tpu.memory_space<vmem>>, vector<16x64xbf16>
    tpu.vector_store %arg6[%c32_349, %c0_350], %267 {strides = array<i32>} : memref<144x64xbf16, #tpu.memory_space<vmem>>, vector<16x64xbf16>,
    %c1_351 = arith.constant 1 : index
    %c0_352 = arith.constant 0 : index
    %c80_353 = arith.constant 80 : index
    %c0_354 = arith.constant 0 : index
    %269 = vector.load %arg1[%c1_351, %c0_352, %c80_353, %c0_354] : memref<2x2x128x72xbf16, #tpu.memory_space<vmem>>, vector<1x1x16x63xbf16>
    %270 = vector.shape_cast %269 : vector<1x1x16x63xbf16> to vector<16x63xbf16>
    %cst_355 = arith.constant 0.000000e+00 : bf16
    %271 = vector.broadcast %cst_355 : bf16 to vector<16x1xbf16>
    %272 = tpu.concatenate %271, %270 in 1 : vector<16x1xbf16>, vector<16x63xbf16> -> vector<16x64xbf16>
    %273 = vector.broadcast %0 : vector<1x64xbf16> to vector<16x64xbf16>
    %274 = arith.mulf %272, %273 : vector<16x64xbf16>
    %c48_356 = arith.constant 48 : index
    %c0_357 = arith.constant 0 : index
    %275 = vector.load %arg6[%c48_356, %c0_357] : memref<144x64xbf16, #tpu.memory_space<vmem>>, vector<16x64xbf16>
    tpu.vector_store %arg6[%c48_356, %c0_357], %274 {strides = array<i32>} : memref<144x64xbf16, #tpu.memory_space<vmem>>, vector<16x64xbf16>,
    %c1_358 = arith.constant 1 : index
    %c1_359 = arith.constant 1 : index
    %c80_360 = arith.constant 80 : index
    %c0_361 = arith.constant 0 : index
    %276 = vector.load %arg1[%c1_358, %c1_359, %c80_360, %c0_361] : memref<2x2x128x72xbf16, #tpu.memory_space<vmem>>, vector<1x1x16x64xbf16>
    %277 = vector.shape_cast %276 : vector<1x1x16x64xbf16> to vector<16x64xbf16>
    %c64_362 = arith.constant 64 : index
    %c0_363 = arith.constant 0 : index
    %278 = vector.load %arg6[%c64_362, %c0_363] : memref<144x64xbf16, #tpu.memory_space<vmem>>, vector<16x64xbf16>
    tpu.vector_store %arg6[%c64_362, %c0_363], %277 {strides = array<i32>} : memref<144x64xbf16, #tpu.memory_space<vmem>>, vector<16x64xbf16>,
    %c1_364 = arith.constant 1 : index
    %c0_365 = arith.constant 0 : index
    %c80_366 = arith.constant 80 : index
    %c0_367 = arith.constant 0 : index
    %279 = vector.load %arg1[%c1_364, %c0_365, %c80_366, %c0_367] : memref<2x2x128x72xbf16, #tpu.memory_space<vmem>>, vector<1x1x16x64xbf16>
    %280 = vector.shape_cast %279 : vector<1x1x16x64xbf16> to vector<16x64xbf16>
    %c80_368 = arith.constant 80 : index
    %c0_369 = arith.constant 0 : index
    %281 = vector.load %arg6[%c80_368, %c0_369] : memref<144x64xbf16, #tpu.memory_space<vmem>>, vector<16x64xbf16>
    tpu.vector_store %arg6[%c80_368, %c0_369], %280 {strides = array<i32>} : memref<144x64xbf16, #tpu.memory_space<vmem>>, vector<16x64xbf16>,
    %c0_370 = arith.constant 0 : index
    %c0_371 = arith.constant 0 : index
    %c80_372 = arith.constant 80 : index
    %c8_373 = arith.constant 8 : index
    %282 = vector.load %arg1[%c0_370, %c0_371, %c80_372, %c8_373] : memref<2x2x128x72xbf16, #tpu.memory_space<vmem>>, vector<1x1x16x63xbf16>
    %283 = vector.shape_cast %282 : vector<1x1x16x63xbf16> to vector<16x63xbf16>
    %cst_374 = arith.constant 0.000000e+00 : bf16
    %284 = vector.broadcast %cst_374 : bf16 to vector<16x1xbf16>
    %285 = tpu.concatenate %284, %283 in 1 : vector<16x1xbf16>, vector<16x63xbf16> -> vector<16x64xbf16>
    %286 = vector.broadcast %0 : vector<1x64xbf16> to vector<16x64xbf16>
    %287 = arith.mulf %285, %286 : vector<16x64xbf16>
    %c96_375 = arith.constant 96 : index
    %c0_376 = arith.constant 0 : index
    %288 = vector.load %arg6[%c96_375, %c0_376] : memref<144x64xbf16, #tpu.memory_space<vmem>>, vector<16x64xbf16>
    tpu.vector_store %arg6[%c96_375, %c0_376], %287 {strides = array<i32>} : memref<144x64xbf16, #tpu.memory_space<vmem>>, vector<16x64xbf16>,
    %c0_377 = arith.constant 0 : index
    %c1_378 = arith.constant 1 : index
    %c80_379 = arith.constant 80 : index
    %c8_380 = arith.constant 8 : index
    %289 = vector.load %arg1[%c0_377, %c1_378, %c80_379, %c8_380] : memref<2x2x128x72xbf16, #tpu.memory_space<vmem>>, vector<1x1x16x64xbf16>
    %290 = vector.shape_cast %289 : vector<1x1x16x64xbf16> to vector<16x64xbf16>
    %c112_381 = arith.constant 112 : index
    %c0_382 = arith.constant 0 : index
    %291 = vector.load %arg6[%c112_381, %c0_382] : memref<144x64xbf16, #tpu.memory_space<vmem>>, vector<16x64xbf16>
    tpu.vector_store %arg6[%c112_381, %c0_382], %290 {strides = array<i32>} : memref<144x64xbf16, #tpu.memory_space<vmem>>, vector<16x64xbf16>,
    %c0_383 = arith.constant 0 : index
    %c0_384 = arith.constant 0 : index
    %c80_385 = arith.constant 80 : index
    %c8_386 = arith.constant 8 : index
    %292 = vector.load %arg1[%c0_383, %c0_384, %c80_385, %c8_386] : memref<2x2x128x72xbf16, #tpu.memory_space<vmem>>, vector<1x1x16x64xbf16>
    %293 = vector.shape_cast %292 : vector<1x1x16x64xbf16> to vector<16x64xbf16>
    %c128_387 = arith.constant 128 : index
    %c0_388 = arith.constant 0 : index
    %294 = vector.load %arg6[%c128_387, %c0_388] : memref<144x64xbf16, #tpu.memory_space<vmem>>, vector<16x64xbf16>
    tpu.vector_store %arg6[%c128_387, %c0_388], %293 {strides = array<i32>} : memref<144x64xbf16, #tpu.memory_space<vmem>>, vector<16x64xbf16>,
    %c0_389 = arith.constant 0 : index
    %c5 = arith.constant 5 : index
    %c0_390 = arith.constant 0 : index
    %c0_391 = arith.constant 0 : index
    %295 = vector.load %arg2[%c0_389, %c5, %c0_390, %c0_391] : memref<1x8x16x144xbf16, #tpu.memory_space<vmem>>, vector<1x1x16x144xbf16>
    %296 = vector.shape_cast %295 : vector<1x1x16x144xbf16> to vector<16x144xbf16>
    %c0_392 = arith.constant 0 : index
    %c0_393 = arith.constant 0 : index
    %297 = vector.load %arg6[%c0_392, %c0_393] : memref<144x64xbf16, #tpu.memory_space<vmem>>, vector<144x64xbf16>
    %cst_394 = arith.constant dense<0.000000e+00> : vector<16x64xf32>
    %298 = tpu.matmul %296, %297, %cst_394 {dimension_numbers = #tpu.dot_dimension_numbers<[1], [0], [0], [1], [0, 0, 1, 1], [], []>} : vector<16x144xbf16>, vector<144x64xbf16>, vector<16x64xf32> -> vector<16x64xf32>
    %c0_395 = arith.constant 0 : index
    %c80_396 = arith.constant 80 : index
    %c0_397 = arith.constant 0 : index
    %299 = vector.load %arg5[%c0_395, %c80_396, %c0_397] : memref<1x128x64xf32, #tpu.memory_space<vmem>>, vector<1x16x64xf32>
    %300 = vector.shape_cast %299 : vector<1x16x64xf32> to vector<16x64xf32>
    %301 = vector.shape_cast %298 : vector<16x64xf32> to vector<1x16x64xf32>
    tpu.vector_store %arg5[%c0_395, %c80_396, %c0_397], %301 {strides = array<i32>} : memref<1x128x64xf32, #tpu.memory_space<vmem>>, vector<1x16x64xf32>,
    %cst_398 = arith.constant dense<0.000000e+00> : vector<16xf32>
    %302 = vector.multi_reduction <add>, %298, %cst_398 [1] : vector<16x64xf32> to vector<16xf32>
    %303 = vector.shape_cast %302 : vector<16xf32> to vector<16x1xf32>
    %304 = arith.mulf %298, %298 : vector<16x64xf32>
    %cst_399 = arith.constant dense<0.000000e+00> : vector<16xf32>
    %305 = vector.multi_reduction <add>, %304, %cst_399 [1] : vector<16x64xf32> to vector<16xf32>
    %306 = vector.shape_cast %305 : vector<16xf32> to vector<16x1xf32>
    %c0_400 = arith.constant 0 : index
    %c0_401 = arith.constant 0 : index
    %c96_402 = arith.constant 96 : index
    %c0_403 = arith.constant 0 : index
    %307 = vector.load %arg1[%c0_400, %c0_401, %c96_402, %c0_403] : memref<2x2x128x72xbf16, #tpu.memory_space<vmem>>, vector<1x1x16x63xbf16>
    %308 = vector.shape_cast %307 : vector<1x1x16x63xbf16> to vector<16x63xbf16>
    %cst_404 = arith.constant 0.000000e+00 : bf16
    %309 = vector.broadcast %cst_404 : bf16 to vector<16x1xbf16>
    %310 = tpu.concatenate %309, %308 in 1 : vector<16x1xbf16>, vector<16x63xbf16> -> vector<16x64xbf16>
    %311 = vector.broadcast %0 : vector<1x64xbf16> to vector<16x64xbf16>
    %312 = arith.mulf %310, %311 : vector<16x64xbf16>
    %c0_405 = arith.constant 0 : index
    %c0_406 = arith.constant 0 : index
    %313 = vector.load %arg6[%c0_405, %c0_406] : memref<144x64xbf16, #tpu.memory_space<vmem>>, vector<16x64xbf16>
    tpu.vector_store %arg6[%c0_405, %c0_406], %312 {strides = array<i32>} : memref<144x64xbf16, #tpu.memory_space<vmem>>, vector<16x64xbf16>,
    %c0_407 = arith.constant 0 : index
    %c1_408 = arith.constant 1 : index
    %c96_409 = arith.constant 96 : index
    %c0_410 = arith.constant 0 : index
    %314 = vector.load %arg1[%c0_407, %c1_408, %c96_409, %c0_410] : memref<2x2x128x72xbf16, #tpu.memory_space<vmem>>, vector<1x1x16x64xbf16>
    %315 = vector.shape_cast %314 : vector<1x1x16x64xbf16> to vector<16x64xbf16>
    %c16_411 = arith.constant 16 : index
    %c0_412 = arith.constant 0 : index
    %316 = vector.load %arg6[%c16_411, %c0_412] : memref<144x64xbf16, #tpu.memory_space<vmem>>, vector<16x64xbf16>
    tpu.vector_store %arg6[%c16_411, %c0_412], %315 {strides = array<i32>} : memref<144x64xbf16, #tpu.memory_space<vmem>>, vector<16x64xbf16>,
    %c0_413 = arith.constant 0 : index
    %c0_414 = arith.constant 0 : index
    %c96_415 = arith.constant 96 : index
    %c0_416 = arith.constant 0 : index
    %317 = vector.load %arg1[%c0_413, %c0_414, %c96_415, %c0_416] : memref<2x2x128x72xbf16, #tpu.memory_space<vmem>>, vector<1x1x16x64xbf16>
    %318 = vector.shape_cast %317 : vector<1x1x16x64xbf16> to vector<16x64xbf16>
    %c32_417 = arith.constant 32 : index
    %c0_418 = arith.constant 0 : index
    %319 = vector.load %arg6[%c32_417, %c0_418] : memref<144x64xbf16, #tpu.memory_space<vmem>>, vector<16x64xbf16>
    tpu.vector_store %arg6[%c32_417, %c0_418], %318 {strides = array<i32>} : memref<144x64xbf16, #tpu.memory_space<vmem>>, vector<16x64xbf16>,
    %c1_419 = arith.constant 1 : index
    %c0_420 = arith.constant 0 : index
    %c96_421 = arith.constant 96 : index
    %c0_422 = arith.constant 0 : index
    %320 = vector.load %arg1[%c1_419, %c0_420, %c96_421, %c0_422] : memref<2x2x128x72xbf16, #tpu.memory_space<vmem>>, vector<1x1x16x63xbf16>
    %321 = vector.shape_cast %320 : vector<1x1x16x63xbf16> to vector<16x63xbf16>
    %cst_423 = arith.constant 0.000000e+00 : bf16
    %322 = vector.broadcast %cst_423 : bf16 to vector<16x1xbf16>
    %323 = tpu.concatenate %322, %321 in 1 : vector<16x1xbf16>, vector<16x63xbf16> -> vector<16x64xbf16>
    %324 = vector.broadcast %0 : vector<1x64xbf16> to vector<16x64xbf16>
    %325 = arith.mulf %323, %324 : vector<16x64xbf16>
    %c48_424 = arith.constant 48 : index
    %c0_425 = arith.constant 0 : index
    %326 = vector.load %arg6[%c48_424, %c0_425] : memref<144x64xbf16, #tpu.memory_space<vmem>>, vector<16x64xbf16>
    tpu.vector_store %arg6[%c48_424, %c0_425], %325 {strides = array<i32>} : memref<144x64xbf16, #tpu.memory_space<vmem>>, vector<16x64xbf16>,
    %c1_426 = arith.constant 1 : index
    %c1_427 = arith.constant 1 : index
    %c96_428 = arith.constant 96 : index
    %c0_429 = arith.constant 0 : index
    %327 = vector.load %arg1[%c1_426, %c1_427, %c96_428, %c0_429] : memref<2x2x128x72xbf16, #tpu.memory_space<vmem>>, vector<1x1x16x64xbf16>
    %328 = vector.shape_cast %327 : vector<1x1x16x64xbf16> to vector<16x64xbf16>
    %c64_430 = arith.constant 64 : index
    %c0_431 = arith.constant 0 : index
    %329 = vector.load %arg6[%c64_430, %c0_431] : memref<144x64xbf16, #tpu.memory_space<vmem>>, vector<16x64xbf16>
    tpu.vector_store %arg6[%c64_430, %c0_431], %328 {strides = array<i32>} : memref<144x64xbf16, #tpu.memory_space<vmem>>, vector<16x64xbf16>,
    %c1_432 = arith.constant 1 : index
    %c0_433 = arith.constant 0 : index
    %c96_434 = arith.constant 96 : index
    %c0_435 = arith.constant 0 : index
    %330 = vector.load %arg1[%c1_432, %c0_433, %c96_434, %c0_435] : memref<2x2x128x72xbf16, #tpu.memory_space<vmem>>, vector<1x1x16x64xbf16>
    %331 = vector.shape_cast %330 : vector<1x1x16x64xbf16> to vector<16x64xbf16>
    %c80_436 = arith.constant 80 : index
    %c0_437 = arith.constant 0 : index
    %332 = vector.load %arg6[%c80_436, %c0_437] : memref<144x64xbf16, #tpu.memory_space<vmem>>, vector<16x64xbf16>
    tpu.vector_store %arg6[%c80_436, %c0_437], %331 {strides = array<i32>} : memref<144x64xbf16, #tpu.memory_space<vmem>>, vector<16x64xbf16>,
    %c0_438 = arith.constant 0 : index
    %c0_439 = arith.constant 0 : index
    %c96_440 = arith.constant 96 : index
    %c8_441 = arith.constant 8 : index
    %333 = vector.load %arg1[%c0_438, %c0_439, %c96_440, %c8_441] : memref<2x2x128x72xbf16, #tpu.memory_space<vmem>>, vector<1x1x16x63xbf16>
    %334 = vector.shape_cast %333 : vector<1x1x16x63xbf16> to vector<16x63xbf16>
    %cst_442 = arith.constant 0.000000e+00 : bf16
    %335 = vector.broadcast %cst_442 : bf16 to vector<16x1xbf16>
    %336 = tpu.concatenate %335, %334 in 1 : vector<16x1xbf16>, vector<16x63xbf16> -> vector<16x64xbf16>
    %337 = vector.broadcast %0 : vector<1x64xbf16> to vector<16x64xbf16>
    %338 = arith.mulf %336, %337 : vector<16x64xbf16>
    %c96_443 = arith.constant 96 : index
    %c0_444 = arith.constant 0 : index
    %339 = vector.load %arg6[%c96_443, %c0_444] : memref<144x64xbf16, #tpu.memory_space<vmem>>, vector<16x64xbf16>
    tpu.vector_store %arg6[%c96_443, %c0_444], %338 {strides = array<i32>} : memref<144x64xbf16, #tpu.memory_space<vmem>>, vector<16x64xbf16>,
    %c0_445 = arith.constant 0 : index
    %c1_446 = arith.constant 1 : index
    %c96_447 = arith.constant 96 : index
    %c8_448 = arith.constant 8 : index
    %340 = vector.load %arg1[%c0_445, %c1_446, %c96_447, %c8_448] : memref<2x2x128x72xbf16, #tpu.memory_space<vmem>>, vector<1x1x16x64xbf16>
    %341 = vector.shape_cast %340 : vector<1x1x16x64xbf16> to vector<16x64xbf16>
    %c112_449 = arith.constant 112 : index
    %c0_450 = arith.constant 0 : index
    %342 = vector.load %arg6[%c112_449, %c0_450] : memref<144x64xbf16, #tpu.memory_space<vmem>>, vector<16x64xbf16>
    tpu.vector_store %arg6[%c112_449, %c0_450], %341 {strides = array<i32>} : memref<144x64xbf16, #tpu.memory_space<vmem>>, vector<16x64xbf16>,
    %c0_451 = arith.constant 0 : index
    %c0_452 = arith.constant 0 : index
    %c96_453 = arith.constant 96 : index
    %c8_454 = arith.constant 8 : index
    %343 = vector.load %arg1[%c0_451, %c0_452, %c96_453, %c8_454] : memref<2x2x128x72xbf16, #tpu.memory_space<vmem>>, vector<1x1x16x64xbf16>
    %344 = vector.shape_cast %343 : vector<1x1x16x64xbf16> to vector<16x64xbf16>
    %c128_455 = arith.constant 128 : index
    %c0_456 = arith.constant 0 : index
    %345 = vector.load %arg6[%c128_455, %c0_456] : memref<144x64xbf16, #tpu.memory_space<vmem>>, vector<16x64xbf16>
    tpu.vector_store %arg6[%c128_455, %c0_456], %344 {strides = array<i32>} : memref<144x64xbf16, #tpu.memory_space<vmem>>, vector<16x64xbf16>,
    %c0_457 = arith.constant 0 : index
    %c6 = arith.constant 6 : index
    %c0_458 = arith.constant 0 : index
    %c0_459 = arith.constant 0 : index
    %346 = vector.load %arg2[%c0_457, %c6, %c0_458, %c0_459] : memref<1x8x16x144xbf16, #tpu.memory_space<vmem>>, vector<1x1x16x144xbf16>
    %347 = vector.shape_cast %346 : vector<1x1x16x144xbf16> to vector<16x144xbf16>
    %c0_460 = arith.constant 0 : index
    %c0_461 = arith.constant 0 : index
    %348 = vector.load %arg6[%c0_460, %c0_461] : memref<144x64xbf16, #tpu.memory_space<vmem>>, vector<144x64xbf16>
    %cst_462 = arith.constant dense<0.000000e+00> : vector<16x64xf32>
    %349 = tpu.matmul %347, %348, %cst_462 {dimension_numbers = #tpu.dot_dimension_numbers<[1], [0], [0], [1], [0, 0, 1, 1], [], []>} : vector<16x144xbf16>, vector<144x64xbf16>, vector<16x64xf32> -> vector<16x64xf32>
    %c0_463 = arith.constant 0 : index
    %c96_464 = arith.constant 96 : index
    %c0_465 = arith.constant 0 : index
    %350 = vector.load %arg5[%c0_463, %c96_464, %c0_465] : memref<1x128x64xf32, #tpu.memory_space<vmem>>, vector<1x16x64xf32>
    %351 = vector.shape_cast %350 : vector<1x16x64xf32> to vector<16x64xf32>
    %352 = vector.shape_cast %349 : vector<16x64xf32> to vector<1x16x64xf32>
    tpu.vector_store %arg5[%c0_463, %c96_464, %c0_465], %352 {strides = array<i32>} : memref<1x128x64xf32, #tpu.memory_space<vmem>>, vector<1x16x64xf32>,
    %cst_466 = arith.constant dense<0.000000e+00> : vector<16xf32>
    %353 = vector.multi_reduction <add>, %349, %cst_466 [1] : vector<16x64xf32> to vector<16xf32>
    %354 = vector.shape_cast %353 : vector<16xf32> to vector<16x1xf32>
    %355 = arith.mulf %349, %349 : vector<16x64xf32>
    %cst_467 = arith.constant dense<0.000000e+00> : vector<16xf32>
    %356 = vector.multi_reduction <add>, %355, %cst_467 [1] : vector<16x64xf32> to vector<16xf32>
    %357 = vector.shape_cast %356 : vector<16xf32> to vector<16x1xf32>
    %c0_468 = arith.constant 0 : index
    %c0_469 = arith.constant 0 : index
    %c112_470 = arith.constant 112 : index
    %c0_471 = arith.constant 0 : index
    %358 = vector.load %arg1[%c0_468, %c0_469, %c112_470, %c0_471] : memref<2x2x128x72xbf16, #tpu.memory_space<vmem>>, vector<1x1x16x63xbf16>
    %359 = vector.shape_cast %358 : vector<1x1x16x63xbf16> to vector<16x63xbf16>
    %cst_472 = arith.constant 0.000000e+00 : bf16
    %360 = vector.broadcast %cst_472 : bf16 to vector<16x1xbf16>
    %361 = tpu.concatenate %360, %359 in 1 : vector<16x1xbf16>, vector<16x63xbf16> -> vector<16x64xbf16>
    %362 = vector.broadcast %0 : vector<1x64xbf16> to vector<16x64xbf16>
    %363 = arith.mulf %361, %362 : vector<16x64xbf16>
    %c0_473 = arith.constant 0 : index
    %c0_474 = arith.constant 0 : index
    %364 = vector.load %arg6[%c0_473, %c0_474] : memref<144x64xbf16, #tpu.memory_space<vmem>>, vector<16x64xbf16>
    tpu.vector_store %arg6[%c0_473, %c0_474], %363 {strides = array<i32>} : memref<144x64xbf16, #tpu.memory_space<vmem>>, vector<16x64xbf16>,
    %c0_475 = arith.constant 0 : index
    %c1_476 = arith.constant 1 : index
    %c112_477 = arith.constant 112 : index
    %c0_478 = arith.constant 0 : index
    %365 = vector.load %arg1[%c0_475, %c1_476, %c112_477, %c0_478] : memref<2x2x128x72xbf16, #tpu.memory_space<vmem>>, vector<1x1x16x64xbf16>
    %366 = vector.shape_cast %365 : vector<1x1x16x64xbf16> to vector<16x64xbf16>
    %c16_479 = arith.constant 16 : index
    %c0_480 = arith.constant 0 : index
    %367 = vector.load %arg6[%c16_479, %c0_480] : memref<144x64xbf16, #tpu.memory_space<vmem>>, vector<16x64xbf16>
    tpu.vector_store %arg6[%c16_479, %c0_480], %366 {strides = array<i32>} : memref<144x64xbf16, #tpu.memory_space<vmem>>, vector<16x64xbf16>,
    %c0_481 = arith.constant 0 : index
    %c0_482 = arith.constant 0 : index
    %c112_483 = arith.constant 112 : index
    %c0_484 = arith.constant 0 : index
    %368 = vector.load %arg1[%c0_481, %c0_482, %c112_483, %c0_484] : memref<2x2x128x72xbf16, #tpu.memory_space<vmem>>, vector<1x1x16x64xbf16>
    %369 = vector.shape_cast %368 : vector<1x1x16x64xbf16> to vector<16x64xbf16>
    %c32_485 = arith.constant 32 : index
    %c0_486 = arith.constant 0 : index
    %370 = vector.load %arg6[%c32_485, %c0_486] : memref<144x64xbf16, #tpu.memory_space<vmem>>, vector<16x64xbf16>
    tpu.vector_store %arg6[%c32_485, %c0_486], %369 {strides = array<i32>} : memref<144x64xbf16, #tpu.memory_space<vmem>>, vector<16x64xbf16>,
    %c1_487 = arith.constant 1 : index
    %c0_488 = arith.constant 0 : index
    %c112_489 = arith.constant 112 : index
    %c0_490 = arith.constant 0 : index
    %371 = vector.load %arg1[%c1_487, %c0_488, %c112_489, %c0_490] : memref<2x2x128x72xbf16, #tpu.memory_space<vmem>>, vector<1x1x16x63xbf16>
    %372 = vector.shape_cast %371 : vector<1x1x16x63xbf16> to vector<16x63xbf16>
    %cst_491 = arith.constant 0.000000e+00 : bf16
    %373 = vector.broadcast %cst_491 : bf16 to vector<16x1xbf16>
    %374 = tpu.concatenate %373, %372 in 1 : vector<16x1xbf16>, vector<16x63xbf16> -> vector<16x64xbf16>
    %375 = vector.broadcast %0 : vector<1x64xbf16> to vector<16x64xbf16>
    %376 = arith.mulf %374, %375 : vector<16x64xbf16>
    %c48_492 = arith.constant 48 : index
    %c0_493 = arith.constant 0 : index
    %377 = vector.load %arg6[%c48_492, %c0_493] : memref<144x64xbf16, #tpu.memory_space<vmem>>, vector<16x64xbf16>
    tpu.vector_store %arg6[%c48_492, %c0_493], %376 {strides = array<i32>} : memref<144x64xbf16, #tpu.memory_space<vmem>>, vector<16x64xbf16>,
    %c1_494 = arith.constant 1 : index
    %c1_495 = arith.constant 1 : index
    %c112_496 = arith.constant 112 : index
    %c0_497 = arith.constant 0 : index
    %378 = vector.load %arg1[%c1_494, %c1_495, %c112_496, %c0_497] : memref<2x2x128x72xbf16, #tpu.memory_space<vmem>>, vector<1x1x16x64xbf16>
    %379 = vector.shape_cast %378 : vector<1x1x16x64xbf16> to vector<16x64xbf16>
    %c64_498 = arith.constant 64 : index
    %c0_499 = arith.constant 0 : index
    %380 = vector.load %arg6[%c64_498, %c0_499] : memref<144x64xbf16, #tpu.memory_space<vmem>>, vector<16x64xbf16>
    tpu.vector_store %arg6[%c64_498, %c0_499], %379 {strides = array<i32>} : memref<144x64xbf16, #tpu.memory_space<vmem>>, vector<16x64xbf16>,
    %c1_500 = arith.constant 1 : index
    %c0_501 = arith.constant 0 : index
    %c112_502 = arith.constant 112 : index
    %c0_503 = arith.constant 0 : index
    %381 = vector.load %arg1[%c1_500, %c0_501, %c112_502, %c0_503] : memref<2x2x128x72xbf16, #tpu.memory_space<vmem>>, vector<1x1x16x64xbf16>
    %382 = vector.shape_cast %381 : vector<1x1x16x64xbf16> to vector<16x64xbf16>
    %c80_504 = arith.constant 80 : index
    %c0_505 = arith.constant 0 : index
    %383 = vector.load %arg6[%c80_504, %c0_505] : memref<144x64xbf16, #tpu.memory_space<vmem>>, vector<16x64xbf16>
    tpu.vector_store %arg6[%c80_504, %c0_505], %382 {strides = array<i32>} : memref<144x64xbf16, #tpu.memory_space<vmem>>, vector<16x64xbf16>,
    %c0_506 = arith.constant 0 : index
    %c0_507 = arith.constant 0 : index
    %c112_508 = arith.constant 112 : index
    %c8_509 = arith.constant 8 : index
    %384 = vector.load %arg1[%c0_506, %c0_507, %c112_508, %c8_509] : memref<2x2x128x72xbf16, #tpu.memory_space<vmem>>, vector<1x1x16x63xbf16>
    %385 = vector.shape_cast %384 : vector<1x1x16x63xbf16> to vector<16x63xbf16>
    %cst_510 = arith.constant 0.000000e+00 : bf16
    %386 = vector.broadcast %cst_510 : bf16 to vector<16x1xbf16>
    %387 = tpu.concatenate %386, %385 in 1 : vector<16x1xbf16>, vector<16x63xbf16> -> vector<16x64xbf16>
    %388 = vector.broadcast %0 : vector<1x64xbf16> to vector<16x64xbf16>
    %389 = arith.mulf %387, %388 : vector<16x64xbf16>
    %c96_511 = arith.constant 96 : index
    %c0_512 = arith.constant 0 : index
    %390 = vector.load %arg6[%c96_511, %c0_512] : memref<144x64xbf16, #tpu.memory_space<vmem>>, vector<16x64xbf16>
    tpu.vector_store %arg6[%c96_511, %c0_512], %389 {strides = array<i32>} : memref<144x64xbf16, #tpu.memory_space<vmem>>, vector<16x64xbf16>,
    %c0_513 = arith.constant 0 : index
    %c1_514 = arith.constant 1 : index
    %c112_515 = arith.constant 112 : index
    %c8_516 = arith.constant 8 : index
    %391 = vector.load %arg1[%c0_513, %c1_514, %c112_515, %c8_516] : memref<2x2x128x72xbf16, #tpu.memory_space<vmem>>, vector<1x1x16x64xbf16>
    %392 = vector.shape_cast %391 : vector<1x1x16x64xbf16> to vector<16x64xbf16>
    %c112_517 = arith.constant 112 : index
    %c0_518 = arith.constant 0 : index
    %393 = vector.load %arg6[%c112_517, %c0_518] : memref<144x64xbf16, #tpu.memory_space<vmem>>, vector<16x64xbf16>
    tpu.vector_store %arg6[%c112_517, %c0_518], %392 {strides = array<i32>} : memref<144x64xbf16, #tpu.memory_space<vmem>>, vector<16x64xbf16>,
    %c0_519 = arith.constant 0 : index
    %c0_520 = arith.constant 0 : index
    %c112_521 = arith.constant 112 : index
    %c8_522 = arith.constant 8 : index
    %394 = vector.load %arg1[%c0_519, %c0_520, %c112_521, %c8_522] : memref<2x2x128x72xbf16, #tpu.memory_space<vmem>>, vector<1x1x16x64xbf16>
    %395 = vector.shape_cast %394 : vector<1x1x16x64xbf16> to vector<16x64xbf16>
    %c128_523 = arith.constant 128 : index
    %c0_524 = arith.constant 0 : index
    %396 = vector.load %arg6[%c128_523, %c0_524] : memref<144x64xbf16, #tpu.memory_space<vmem>>, vector<16x64xbf16>
    tpu.vector_store %arg6[%c128_523, %c0_524], %395 {strides = array<i32>} : memref<144x64xbf16, #tpu.memory_space<vmem>>, vector<16x64xbf16>,
    %c0_525 = arith.constant 0 : index
    %c7 = arith.constant 7 : index
    %c0_526 = arith.constant 0 : index
    %c0_527 = arith.constant 0 : index
    %397 = vector.load %arg2[%c0_525, %c7, %c0_526, %c0_527] : memref<1x8x16x144xbf16, #tpu.memory_space<vmem>>, vector<1x1x16x144xbf16>
    %398 = vector.shape_cast %397 : vector<1x1x16x144xbf16> to vector<16x144xbf16>
    %c0_528 = arith.constant 0 : index
    %c0_529 = arith.constant 0 : index
    %399 = vector.load %arg6[%c0_528, %c0_529] : memref<144x64xbf16, #tpu.memory_space<vmem>>, vector<144x64xbf16>
    %cst_530 = arith.constant dense<0.000000e+00> : vector<16x64xf32>
    %400 = tpu.matmul %398, %399, %cst_530 {dimension_numbers = #tpu.dot_dimension_numbers<[1], [0], [0], [1], [0, 0, 1, 1], [], []>} : vector<16x144xbf16>, vector<144x64xbf16>, vector<16x64xf32> -> vector<16x64xf32>
    %c0_531 = arith.constant 0 : index
    %c112_532 = arith.constant 112 : index
    %c0_533 = arith.constant 0 : index
    %401 = vector.load %arg5[%c0_531, %c112_532, %c0_533] : memref<1x128x64xf32, #tpu.memory_space<vmem>>, vector<1x16x64xf32>
    %402 = vector.shape_cast %401 : vector<1x16x64xf32> to vector<16x64xf32>
    %403 = vector.shape_cast %400 : vector<16x64xf32> to vector<1x16x64xf32>
    tpu.vector_store %arg5[%c0_531, %c112_532, %c0_533], %403 {strides = array<i32>} : memref<1x128x64xf32, #tpu.memory_space<vmem>>, vector<1x16x64xf32>,
    %cst_534 = arith.constant dense<0.000000e+00> : vector<16xf32>
    %404 = vector.multi_reduction <add>, %400, %cst_534 [1] : vector<16x64xf32> to vector<16xf32>
    %405 = vector.shape_cast %404 : vector<16xf32> to vector<16x1xf32>
    %406 = arith.mulf %400, %400 : vector<16x64xf32>
    %cst_535 = arith.constant dense<0.000000e+00> : vector<16xf32>
    %407 = vector.multi_reduction <add>, %406, %cst_535 [1] : vector<16x64xf32> to vector<16xf32>
    %408 = vector.shape_cast %407 : vector<16xf32> to vector<16x1xf32>
    %409 = tpu.concatenate %48, %99, %150, %201, %252, %303, %354, %405 in 0 : vector<16x1xf32>, vector<16x1xf32>, vector<16x1xf32>, vector<16x1xf32>, vector<16x1xf32>, vector<16x1xf32>, vector<16x1xf32>, vector<16x1xf32> -> vector<128x1xf32>
    %410 = tpu.concatenate %51, %102, %153, %204, %255, %306, %357, %408 in 0 : vector<16x1xf32>, vector<16x1xf32>, vector<16x1xf32>, vector<16x1xf32>, vector<16x1xf32>, vector<16x1xf32>, vector<16x1xf32>, vector<16x1xf32> -> vector<128x1xf32>
    %cst_536 = arith.constant 1.562500e-02 : f32
    %411 = vector.broadcast %cst_536 : f32 to vector<128x1xf32>
    %412 = arith.mulf %409, %411 : vector<128x1xf32>
    %cst_537 = arith.constant 1.562500e-02 : f32
    %413 = vector.broadcast %cst_537 : f32 to vector<128x1xf32>
    %414 = arith.mulf %410, %413 : vector<128x1xf32>
    %415 = arith.mulf %412, %412 : vector<128x1xf32>
    %416 = arith.subf %414, %415 : vector<128x1xf32>
    %c0_538 = arith.constant 0 : index
    %c0_539 = arith.constant 0 : index
    %c0_540 = arith.constant 0 : index
    %417 = vector.load %arg3[%c0_538, %c0_539, %c0_540] : memref<1x128x2xf32, #tpu.memory_space<vmem>>, vector<1x128x2xf32>
    %418 = vector.shape_cast %417 : vector<1x128x2xf32> to vector<128x2xf32>
    %419 = vector.extract_strided_slice %418 {offsets = [0, 0], sizes = [128, 1], strides = [1, 1]} : vector<128x2xf32> to vector<128x1xf32>
    %cst_541 = arith.constant 9.99999974E-6 : f32
    %420 = vector.broadcast %cst_541 : f32 to vector<128x1xf32>
    %421 = arith.addf %416, %420 : vector<128x1xf32>
    %422 = math.rsqrt %421 : vector<128x1xf32>
    %423 = arith.mulf %419, %422 : vector<128x1xf32>
    %424 = vector.extract_strided_slice %418 {offsets = [0, 1], sizes = [128, 1], strides = [1, 1]} : vector<128x2xf32> to vector<128x1xf32>
    %425 = arith.mulf %412, %423 : vector<128x1xf32>
    %426 = arith.subf %424, %425 : vector<128x1xf32>
    %c0_542 = arith.constant 0 : index
    %c0_543 = arith.constant 0 : index
    %c0_544 = arith.constant 0 : index
    %427 = vector.load %arg5[%c0_542, %c0_543, %c0_544] : memref<1x128x64xf32, #tpu.memory_space<vmem>>, vector<1x128x64xf32>
    %428 = vector.shape_cast %427 : vector<1x128x64xf32> to vector<128x64xf32>
    %429 = vector.broadcast %423 : vector<128x1xf32> to vector<128x64xf32>
    %430 = arith.mulf %428, %429 : vector<128x64xf32>
    %431 = vector.broadcast %426 : vector<128x1xf32> to vector<128x64xf32>
    %432 = arith.addf %430, %431 : vector<128x64xf32>
    %cst_545 = arith.constant 0.000000e+00 : f32
    %433 = vector.broadcast %cst_545 : f32 to vector<128x64xf32>
    %434 = arith.maximumf %432, %433 : vector<128x64xf32>
    %c0_546 = arith.constant 0 : index
    %c0_547 = arith.constant 0 : index
    %c0_548 = arith.constant 0 : index
    %435 = vector.load %arg5[%c0_546, %c0_547, %c0_548] : memref<1x128x64xf32, #tpu.memory_space<vmem>>, vector<1x128x64xf32>
    %436 = vector.shape_cast %435 : vector<1x128x64xf32> to vector<128x64xf32>
    %437 = vector.shape_cast %434 : vector<128x64xf32> to vector<1x128x64xf32>
    tpu.vector_store %arg5[%c0_546, %c0_547, %c0_548], %437 {strides = array<i32>} : memref<1x128x64xf32, #tpu.memory_space<vmem>>, vector<1x128x64xf32>,
    return
  }
  func.func @transform_0(%arg0: i32) -> (i32, i32, i32, i32) {
    %c0_i32 = arith.constant 0 : i32
    %c0_i32_0 = arith.constant 0 : i32
    %c0_i32_1 = arith.constant 0 : i32
    %c0_i32_2 = arith.constant 0 : i32
    return %c0_i32, %c0_i32_0, %arg0, %c0_i32_1 : i32, i32, i32, i32
  }
  func.func @transform_1(%arg0: i32) -> (i32, i32, i32, i32) {
    %c0_i32 = arith.constant 0 : i32
    %c0_i32_0 = arith.constant 0 : i32
    %c0_i32_1 = arith.constant 0 : i32
    %c0_i32_2 = arith.constant 0 : i32
    return %arg0, %c0_i32, %c0_i32_0, %c0_i32_1 : i32, i32, i32, i32
  }
  func.func @transform_2(%arg0: i32) -> (i32, i32, i32) {
    %c0_i32 = arith.constant 0 : i32
    %c0_i32_0 = arith.constant 0 : i32
    %c0_i32_1 = arith.constant 0 : i32
    return %arg0, %c0_i32, %c0_i32_0 : i32, i32, i32
  }
  func.func @transform_3(%arg0: i32) -> (i32, i32) {
    %c0_i32 = arith.constant 0 : i32
    %c0_i32_0 = arith.constant 0 : i32
    %c0_i32_1 = arith.constant 0 : i32
    return %c0_i32, %c0_i32_0 : i32, i32
  }
  func.func @transform_4(%arg0: i32) -> (i32, i32, i32) {
    %c0_i32 = arith.constant 0 : i32
    %c0_i32_0 = arith.constant 0 : i32
    %c0_i32_1 = arith.constant 0 : i32
    return %arg0, %c0_i32, %c0_i32_0 : i32, i32, i32
  }
}

</mosaic_0001>

<llo_original>
// kernel: fused_relu_gconv_bn_relu.1
$region0: #{fused_relu_gconv_bn_relu.1}
  #allocation0 [shape = 'u32[]', space=smem, size = 0x4, offset = 0x4, fixed_abs, tag = 'smem constant byte address 0x4 - core index']
  #allocation1 [shape = 'u32[144,128]{1,0:T(1,128)}', space=vmem, size = 0x12000, scoped, tag = 'internal scratch']
  #allocation2 [shape = 'bf16[144,64]{1,0:T(8,128)(2,1)}', space=vmem, size = 0x9000, scoped, tag = 'scratch operand']
  %s0 = inlined_call_operand.vmem [shape: bf16[2,2,512,72], index: 0, kind: input, shape index: {}]
  %s1 = inlined_call_operand.vmem [shape: bf16[4,8,16,144], index: 1, kind: input, shape index: {}]
  %s2 = inlined_call_operand.vmem [shape: f32[4,128,2], index: 2, kind: input, shape index: {}]
  %s3 = inlined_call_operand.vmem [shape: bf16[1,64], index: 3, kind: input, shape index: {}]
  %s4 = inlined_call_operand.vmem [shape: f32[4,128,64], index: 4, kind: output, shape index: {}]
  %s5 = sld [smem:[#allocation0]]
  $region90: #{fused_relu_gconv_bn_relu.1} parent=0
    _
  %s7 = ssub.s32 1, %s5
  %s8 = scalar_select 0, %s7, %s5
  $region1: #{fused_relu_gconv_bn_relu.1} parent=0
    #allocation3 [shape = 'u8[262144]{0}', space=vmem, size = 0x40000, scoped, tag = 'input window, operand 0']
    loop: start=0, step=1, limit=6
    $region2: #{fused_relu_gconv_bn_relu.1} parent=1 // loop_pre_header
      _
    $region3: #{fused_relu_gconv_bn_relu.1} parent=1 // loop_header
      %s10 = sphi 0, %s14
      %p11 = scmp.ge.s32.totalorder %s10, 6
      %s20 = sphi 0, %s22
      %s23 = sphi 0, %s20
      %s24 = sphi 0, %s23
      %s40 = sphi 0, %s24
      %s46 = sphi 0, %s48
      %s49 = sphi 0, %s46
      %s50 = sphi 0, %s49
      %s66 = sphi 0, %s50
      %s72 = sphi 0, %s74
      %s75 = sphi 0, %s72
      %s76 = sphi 0, %s75
      %s92 = sphi 0, %s76
      %s96 = sphi 0, %s96
      %s98 = sphi 0, %s96
      %s99 = sphi 0, %s98
      %s113 = sphi 0, %s99
      %s119 = sphi 0, %s121
      %s122 = sphi 0, %s119
      %s123 = sphi 0, %s122
      %s139 = sphi 0, %s123
    $region4: #{fused_relu_gconv_bn_relu.1} parent=1 // loop_header_branch
      %13 = sbr.rel (%p11) target = $region8
    $region5: #{fused_relu_gconv_bn_relu.1} parent=1 // loop_body
      %s15 = ssub.s32 %s10, 1
      %s16 = ssub.s32 %s10, 2
      %s17 = sadd.s32 %s10, 1
      %s18 = ssub.s32 %s10, %s17
      %p19 = scmp.eq.s32.totalorder %s18, 0
      %s21 = sadd.s32 %s20, 1
      %s22 = scalar_select %p19, %s20, %s21
      %p25 = pneg %p19
      %p26 = scmp.eq.s32.totalorder %s10, 3
      %p27 = por %p25, %p26
      %p28 = scmp.ne.s32.totalorder %s20, %s23
      %p29 = scmp.eq.s32.totalorder %s10, 0
      %p30 = por %p28, %p29
      %p31 = scmp.ne.s32.totalorder %s20, %s23
      %p32 = scmp.eq.s32.totalorder %s15, 3
      %p33 = por %p31, %p32
      %p34 = scmp.ne.s32.totalorder %s23, %s24
      %p35 = scmp.eq.s32.totalorder %s15, 0
      %p36 = por %p34, %p35
      %p37 = scmp.ne.s32.totalorder %s23, %s24
      %p38 = scmp.eq.s32.totalorder %s16, 3
      %p39 = por %p37, %p38
      %p41 = scmp.ne.s32.totalorder %s24, %s40
      %p42 = scmp.eq.s32.totalorder %s16, 0
      %p43 = por %p41, %p42
      %s44 = ssub.s32 %s10, %s17
      %p45 = scmp.eq.s32.totalorder %s44, 0
      %s47 = sadd.s32 %s46, 1
      %s48 = scalar_select %p45, %s46, %s47
      %p51 = pneg %p45
      %p52 = scmp.eq.s32.totalorder %s10, 3
      %p53 = por %p51, %p52
      %p54 = scmp.ne.s32.totalorder %s46, %s49
      %p55 = scmp.eq.s32.totalorder %s10, 0
      %p56 = por %p54, %p55
      %p57 = scmp.ne.s32.totalorder %s46, %s49
      %p58 = scmp.eq.s32.totalorder %s15, 3
      %p59 = por %p57, %p58
      %p60 = scmp.ne.s32.totalorder %s49, %s50
      %p61 = scmp.eq.s32.totalorder %s15, 0
      %p62 = por %p60, %p61
      %p63 = scmp.ne.s32.totalorder %s49, %s50
      %p64 = scmp.eq.s32.totalorder %s16, 3
      %p65 = por %p63, %p64
      %p67 = scmp.ne.s32.totalorder %s50, %s66
      %p68 = scmp.eq.s32.totalorder %s16, 0
      %p69 = por %p67, %p68
      %s70 = ssub.s32 %s10, %s17
      %p71 = scmp.eq.s32.totalorder %s70, 0
      %s73 = sadd.s32 %s72, 1
      %s74 = scalar_select %p71, %s72, %s73
      %p77 = pneg %p71
      %p78 = scmp.eq.s32.totalorder %s10, 3
      %p79 = por %p77, %p78
      %p80 = scmp.ne.s32.totalorder %s72, %s75
      %p81 = scmp.eq.s32.totalorder %s10, 0
      %p82 = por %p80, %p81
      %p83 = scmp.ne.s32.totalorder %s72, %s75
      %p84 = scmp.eq.s32.totalorder %s15, 3
      %p85 = por %p83, %p84
      %p86 = scmp.ne.s32.totalorder %s75, %s76
      %p87 = scmp.eq.s32.totalorder %s15, 0
      %p88 = por %p86, %p87
      %p89 = scmp.ne.s32.totalorder %s75, %s76
      %p90 = scmp.eq.s32.totalorder %s16, 3
      %p91 = por %p89, %p90
      %p93 = scmp.ne.s32.totalorder %s76, %s92
      %p94 = scmp.eq.s32.totalorder %s16, 0
      %p95 = por %p93, %p94
      %s97 = sadd.s32 %s96, 1
      %p100 = scmp.eq.s32.totalorder %s10, 3
      %p101 = scmp.ne.s32.totalorder %s96, %s98
      %p102 = scmp.eq.s32.totalorder %s10, 0
      %p103 = por %p101, %p102
      %p104 = scmp.ne.s32.totalorder %s96, %s98
      %p105 = scmp.eq.s32.totalorder %s15, 3
      %p106 = por %p104, %p105
      %p107 = scmp.ne.s32.totalorder %s98, %s99
      %p108 = scmp.eq.s32.totalorder %s15, 0
      %p109 = por %p107, %p108
      %p110 = scmp.ne.s32.totalorder %s98, %s99
      %p111 = scmp.eq.s32.totalorder %s16, 3
      %p112 = por %p110, %p111
      %p114 = scmp.ne.s32.totalorder %s99, %s113
      %p115 = scmp.eq.s32.totalorder %s16, 0
      %p116 = por %p114, %p115
      %s117 = ssub.s32 %s10, %s17
      %p118 = scmp.eq.s32.totalorder %s117, 0
      %s120 = sadd.s32 %s119, 1
      %s121 = scalar_select %p118, %s119, %s120
      %p124 = pneg %p118
      %p125 = scmp.eq.s32.totalorder %s10, 3
      %p126 = por %p124, %p125
      %p127 = scmp.ne.s32.totalorder %s119, %s122
      %p128 = scmp.eq.s32.totalorder %s10, 0
      %p129 = por %p127, %p128
      %p130 = scmp.ne.s32.totalorder %s119, %s122
      %p131 = scmp.eq.s32.totalorder %s15, 3
      %p132 = por %p130, %p131
      %p133 = scmp.ne.s32.totalorder %s122, %s123
      %p134 = scmp.eq.s32.totalorder %s15, 0
      %p135 = por %p133, %p134
      %p136 = scmp.ne.s32.totalorder %s122, %s123
      %p137 = scmp.eq.s32.totalorder %s16, 3
      %p138 = por %p136, %p137
      %p140 = scmp.ne.s32.totalorder %s123, %s139
      %p141 = scmp.eq.s32.totalorder %s16, 0
      %p142 = por %p140, %p141
      %p143 = scmp.le.s32.totalorder 1, %s10
      %p144 = scmp.lt.s32.totalorder %s10, 5
      %p145 = pnand %p143, %p144
      %p146 = pneg %p145
      // Predicated region
      $region9: #{fused_relu_gconv_bn_relu.1} parent=5 // pred_check
        _
      $region10: #{fused_relu_gconv_bn_relu.1} parent=5 // pred_check_branch
        %148 = sbr.rel (%p145) target = $region12
      $region11: #{fused_relu_gconv_bn_relu.1} parent=5 // pred_region
        %s149 = ssub.s32 %s10, 1
        // Predicated region
        $region13: #{fused_relu_gconv_bn_relu.1} parent=11 // pred_check
          %p150 = pneg %p109
        $region14: #{fused_relu_gconv_bn_relu.1} parent=11 // pred_check_branch
          %152 = sbr.rel (%p150) target = $region16
        $region15: #{fused_relu_gconv_bn_relu.1} parent=11 // pred_region
          _
        $region16: #{fused_relu_gconv_bn_relu.1} parent=11 // pred_fallthru
          _
      $region12: #{fused_relu_gconv_bn_relu.1} parent=5 // pred_fallthru
        _
      %p153 = scmp.lt.s32.totalorder %s10, 4
      // Predicated region
      $region17: #{fused_relu_gconv_bn_relu.1} parent=5 // pred_check
        %p154 = pneg %p153
      $region18: #{fused_relu_gconv_bn_relu.1} parent=5 // pred_check_branch
        %156 = sbr.rel (%p154) target = $region20
      $region19: #{fused_relu_gconv_bn_relu.1} parent=5 // pred_region
        // Predicated region
        $region21: #{fused_relu_gconv_bn_relu.1} parent=19 // pred_check
          %p157 = pneg %p30
        $region22: #{fused_relu_gconv_bn_relu.1} parent=19 // pred_check_branch
          %159 = sbr.rel (%p157) target = $region24
        $region23: #{fused_relu_gconv_bn_relu.1} parent=19 // pred_region
          %s160 = sand.u32 %s20, 1
          %s161 = sand.u32 %s20, 1
          %s162 = smul.addr %s161, 256
          %s163 = scalar_lea.vmem [#allocation3], %s162
          %s164 = smul.u32 16, %s10
          %s165 = smul.addr %s164, 4
          %s166 = scalar_lea.vmem %s0, %s165
          // Predicated region
          $region25: #{fused_relu_gconv_bn_relu.1} parent=23 // pred_check
            _
          $region26: #{fused_relu_gconv_bn_relu.1} parent=23 // pred_check_branch
            %168 = sbr.rel (0) target = $region28
          $region27: #{fused_relu_gconv_bn_relu.1} parent=23 // pred_region
            // Predicated region
            $region29: #{fused_relu_gconv_bn_relu.1} parent=27 // pred_check
              _
            $region30: #{fused_relu_gconv_bn_relu.1} parent=27 // pred_check_branch
              %170 = sbr.rel target = $region32
            $region31: #{fused_relu_gconv_bn_relu.1} parent=27 // pred_region
              // Predicated region
              $region44: #{fused_relu_gconv_bn_relu.1} parent=31 // pred_check
                _
              $region45: #{fused_relu_gconv_bn_relu.1} parent=31 // pred_check_branch
                %312 = sbr.rel (0) target = $region47
              $region46: #{fused_relu_gconv_bn_relu.1} parent=31 // pred_region
                loop: start=0, step=1, limit=1
                $region48: #{fused_relu_gconv_bn_relu.1} parent=46 // loop_pre_header
                  _
                $region49: #{fused_relu_gconv_bn_relu.1} parent=46 // loop_header
                  %s314 = sphi 0, %s318
                  %p315 = scmp.ge.s32.totalorder %s314, 1
                  %s319 = sphi %s166, %s166
                  %s320 = sphi %s163, %s163
                $region50: #{fused_relu_gconv_bn_relu.1} parent=46 // loop_header_branch
                  %317 = sbr.rel (%p315) target = $region54
                $region51: #{fused_relu_gconv_bn_relu.1} parent=46 // loop_body
                  _
                $region52: #{fused_relu_gconv_bn_relu.1} parent=46 // loop_footer
                  %s318 = sadd.s32 1, %s314
                $region53: #{fused_relu_gconv_bn_relu.1} parent=46 // loop_footer_branch
                  %313 = sbr.rel target = $region49
                $region54: #{fused_relu_gconv_bn_relu.1} parent=46 // loop_exit
                  _
                %s322 = ssub.s32 16, 1
                loop: start=0, step=1, limit=1
                $region55: #{fused_relu_gconv_bn_relu.1} parent=46 // loop_pre_header
                  _
                $region56: #{fused_relu_gconv_bn_relu.1} parent=46 // loop_header
                  %s324 = sphi 0, %s328
                  %p325 = scmp.ge.s32.totalorder %s324, 1
                  %s329 = sphi %s166, %s166
                  %s330 = sphi %s163, %s163
                $region57: #{fused_relu_gconv_bn_relu.1} parent=46 // loop_header_branch
                  %327 = sbr.rel (%p325) target = $region61
                $region58: #{fused_relu_gconv_bn_relu.1} parent=46 // loop_body
                  %v331 = vld [vmem:[%s329] sm:%s322]
                  %332 = vst [vmem:[%s330] sm:%s322] %v331
                  %v333 = vld [vmem:[%s329 + $0x4] sm:%s322]
                  %334 = vst [vmem:[%s330 + $0x4] sm:%s322] %v333
                  %v335 = vld [vmem:[%s329 + $0x8] sm:%s322]
                  %336 = vst [vmem:[%s330 + $0x8] sm:%s322] %v335
                  %v337 = vld [vmem:[%s329 + $0xc] sm:%s322]
                  %338 = vst [vmem:[%s330 + $0xc] sm:%s322] %v337
                  %v339 = vld [vmem:[%s329 + $0x10] sm:%s322]
                  %340 = vst [vmem:[%s330 + $0x10] sm:%s322] %v339
                  %v341 = vld [vmem:[%s329 + $0x14] sm:%s322]
                  %342 = vst [vmem:[%s330 + $0x14] sm:%s322] %v341
                  %v343 = vld [vmem:[%s329 + $0x18] sm:%s322]
                  %344 = vst [vmem:[%s330 + $0x18] sm:%s322] %v343
                  %v345 = vld [vmem:[%s329 + $0x1c] sm:%s322]
                  %346 = vst [vmem:[%s330 + $0x1c] sm:%s322] %v345
                  %v347 = vld [vmem:[%s329 + $0x20] sm:%s322]
                  %348 = vst [vmem:[%s330 + $0x20] sm:%s322] %v347
                  %v349 = vld [vmem:[%s329 + $0x24] sm:%s322]
                  %350 = vst [vmem:[%s330 + $0x24] sm:%s322] %v349
                  %v351 = vld [vmem:[%s329 + $0x28] sm:%s322]
                  %352 = vst [vmem:[%s330 + $0x28] sm:%s322] %v351
                  %v353 = vld [vmem:[%s329 + $0x2c] sm:%s322]
                  %354 = vst [vmem:[%s330 + $0x2c] sm:%s322] %v353
                  %v355 = vld [vmem:[%s329 + $0x30] sm:%s322]
                  %356 = vst [vmem:[%s330 + $0x30] sm:%s322] %v355
                  %v357 = vld [vmem:[%s329 + $0x34] sm:%s322]
                  %358 = vst [vmem:[%s330 + $0x34] sm:%s322] %v357
                  %v359 = vld [vmem:[%s329 + $0x38] sm:%s322]
                  %360 = vst [vmem:[%s330 + $0x38] sm:%s322] %v359
                  %v361 = vld [vmem:[%s329 + $0x3c] sm:%s322]
                  %362 = vst [vmem:[%s330 + $0x3c] sm:%s322] %v361
                  %v363 = vld [vmem:[%s329 + $0x100] sm:%s322]
                  %364 = vst [vmem:[%s330 + $0x40] sm:%s322] %v363
                  %v365 = vld [vmem:[%s329 + $0x104] sm:%s322]
                  %366 = vst [vmem:[%s330 + $0x44] sm:%s322] %v365
                  %v367 = vld [vmem:[%s329 + $0x108] sm:%s322]
                  %368 = vst [vmem:[%s330 + $0x48] sm:%s322] %v367
                  %v369 = vld [vmem:[%s329 + $0x10c] sm:%s322]
                  %370 = vst [vmem:[%s330 + $0x4c] sm:%s322] %v369
                  %v371 = vld [vmem:[%s329 + $0x110] sm:%s322]
                  %372 = vst [vmem:[%s330 + $0x50] sm:%s322] %v371
                  %v373 = vld [vmem:[%s329 + $0x114] sm:%s322]
                  %374 = vst [vmem:[%s330 + $0x54] sm:%s322] %v373
                  %v375 = vld [vmem:[%s329 + $0x118] sm:%s322]
                  %376 = vst [vmem:[%s330 + $0x58] sm:%s322] %v375
                  %v377 = vld [vmem:[%s329 + $0x11c] sm:%s322]
                  %378 = vst [vmem:[%s330 + $0x5c] sm:%s322] %v377
                  %v379 = vld [vmem:[%s329 + $0x120] sm:%s322]
                  %380 = vst [vmem:[%s330 + $0x60] sm:%s322] %v379
                  %v381 = vld [vmem:[%s329 + $0x124] sm:%s322]
                  %382 = vst [vmem:[%s330 + $0x64] sm:%s322] %v381
                  %v383 = vld [vmem:[%s329 + $0x128] sm:%s322]
                  %384 = vst [vmem:[%s330 + $0x68] sm:%s322] %v383
                  %v385 = vld [vmem:[%s329 + $0x12c] sm:%s322]
                  %386 = vst [vmem:[%s330 + $0x6c] sm:%s322] %v385
                  %v387 = vld [vmem:[%s329 + $0x130] sm:%s322]
                  %388 = vst [vmem:[%s330 + $0x70] sm:%s322] %v387
                  %v389 = vld [vmem:[%s329 + $0x134] sm:%s322]
                  %390 = vst [vmem:[%s330 + $0x74] sm:%s322] %v389
                  %v391 = vld [vmem:[%s329 + $0x138] sm:%s322]
                  %392 = vst [vmem:[%s330 + $0x78] sm:%s322] %v391
                  %v393 = vld [vmem:[%s329 + $0x13c] sm:%s322]
                  %394 = vst [vmem:[%s330 + $0x7c] sm:%s322] %v393
                  %v395 = vld [vmem:[%s329 + $0x200] sm:%s322]
                  %396 = vst [vmem:[%s330 + $0x80] sm:%s322] %v395
                  %v397 = vld [vmem:[%s329 + $0x204] sm:%s322]
                  %398 = vst [vmem:[%s330 + $0x84] sm:%s322] %v397
                  %v399 = vld [vmem:[%s329 + $0x208] sm:%s322]
                  %400 = vst [vmem:[%s330 + $0x88] sm:%s322] %v399
                  %v401 = vld [vmem:[%s329 + $0x20c] sm:%s322]
                  %402 = vst [vmem:[%s330 + $0x8c] sm:%s322] %v401
                  %v403 = vld [vmem:[%s329 + $0x210] sm:%s322]
                  %404 = vst [vmem:[%s330 + $0x90] sm:%s322] %v403
                  %v405 = vld [vmem:[%s329 + $0x214] sm:%s322]
                  %406 = vst [vmem:[%s330 + $0x94] sm:%s322] %v405
                  %v407 = vld [vmem:[%s329 + $0x218] sm:%s322]
                  %408 = vst [vmem:[%s330 + $0x98] sm:%s322] %v407
                  %v409 = vld [vmem:[%s329 + $0x21c] sm:%s322]
                  %410 = vst [vmem:[%s330 + $0x9c] sm:%s322] %v409
                  %v411 = vld [vmem:[%s329 + $0x220] sm:%s322]
                  %412 = vst [vmem:[%s330 + $0xa0] sm:%s322] %v411
                  %v413 = vld [vmem:[%s329 + $0x224] sm:%s322]
                  %414 = vst [vmem:[%s330 + $0xa4] sm:%s322] %v413
                  %v415 = vld [vmem:[%s329 + $0x228] sm:%s322]
                  %416 = vst [vmem:[%s330 + $0xa8] sm:%s322] %v415
                  %v417 = vld [vmem:[%s329 + $0x22c] sm:%s322]
                  %418 = vst [vmem:[%s330 + $0xac] sm:%s322] %v417
                  %v419 = vld [vmem:[%s329 + $0x230] sm:%s322]
                  %420 = vst [vmem:[%s330 + $0xb0] sm:%s322] %v419
                  %v421 = vld [vmem:[%s329 + $0x234] sm:%s322]
                  %422 = vst [vmem:[%s330 + $0xb4] sm:%s322] %v421
                  %v423 = vld [vmem:[%s329 + $0x238] sm:%s322]
                  %424 = vst [vmem:[%s330 + $0xb8] sm:%s322] %v423
                  %v425 = vld [vmem:[%s329 + $0x23c] sm:%s322]
                  %426 = vst [vmem:[%s330 + $0xbc] sm:%s322] %v425
                  %v427 = vld [vmem:[%s329 + $0x300] sm:%s322]
                  %428 = vst [vmem:[%s330 + $0xc0] sm:%s322] %v427
                  %v429 = vld [vmem:[%s329 + $0x304] sm:%s322]
                  %430 = vst [vmem:[%s330 + $0xc4] sm:%s322] %v429
                  %v431 = vld [vmem:[%s329 + $0x308] sm:%s322]
                  %432 = vst [vmem:[%s330 + $0xc8] sm:%s322] %v431
                  %v433 = vld [vmem:[%s329 + $0x30c] sm:%s322]
                  %434 = vst [vmem:[%s330 + $0xcc] sm:%s322] %v433
                  %v435 = vld [vmem:[%s329 + $0x310] sm:%s322]
                  %436 = vst [vmem:[%s330 + $0xd0] sm:%s322] %v435
                  %v437 = vld [vmem:[%s329 + $0x314] sm:%s322]
                  %438 = vst [vmem:[%s330 + $0xd4] sm:%s322] %v437
                  %v439 = vld [vmem:[%s329 + $0x318] sm:%s322]
                  %440 = vst [vmem:[%s330 + $0xd8] sm:%s322] %v439
                  %v441 = vld [vmem:[%s329 + $0x31c] sm:%s322]
                  %442 = vst [vmem:[%s330 + $0xdc] sm:%s322] %v441
                  %v443 = vld [vmem:[%s329 + $0x320] sm:%s322]
                  %444 = vst [vmem:[%s330 + $0xe0] sm:%s322] %v443
                  %v445 = vld [vmem:[%s329 + $0x324] sm:%s322]
                  %446 = vst [vmem:[%s330 + $0xe4] sm:%s322] %v445
                  %v447 = vld [vmem:[%s329 + $0x328] sm:%s322]
                  %448 = vst [vmem:[%s330 + $0xe8] sm:%s322] %v447
                  %v449 = vld [vmem:[%s329 + $0x32c] sm:%s322]
                  %450 = vst [vmem:[%s330 + $0xec] sm:%s322] %v449
                  %v451 = vld [vmem:[%s329 + $0x330] sm:%s322]
                  %452 = vst [vmem:[%s330 + $0xf0] sm:%s322] %v451
                  %v453 = vld [vmem:[%s329 + $0x334] sm:%s322]
                  %454 = vst [vmem:[%s330 + $0xf4] sm:%s322] %v453
                  %v455 = vld [vmem:[%s329 + $0x338] sm:%s322]
                  %456 = vst [vmem:[%s330 + $0xf8] sm:%s322] %v455
                  %v457 = vld [vmem:[%s329 + $0x33c] sm:%s322]
                  %458 = vst [vmem:[%s330 + $0xfc] sm:%s322] %v457
                $region59: #{fused_relu_gconv_bn_relu.1} parent=46 // loop_footer
                  %s328 = sadd.s32 1, %s324
                $region60: #{fused_relu_gconv_bn_relu.1} parent=46 // loop_footer_branch
                  %323 = sbr.rel target = $region56
                $region61: #{fused_relu_gconv_bn_relu.1} parent=46 // loop_exit
                  _
              $region47: #{fused_relu_gconv_bn_relu.1} parent=31 // pred_fallthru
                _
            $region32: #{fused_relu_gconv_bn_relu.1} parent=27 // pred_fallthru
              _
            // Predicated region
            $region33: #{fused_relu_gconv_bn_relu.1} parent=27 // pred_check
              _
            $region34: #{fused_relu_gconv_bn_relu.1} parent=27 // pred_check_branch
              %172 = sbr.rel (0) target = $region36
            $region35: #{fused_relu_gconv_bn_relu.1} parent=27 // pred_region
              %s174 = ssub.s32 16, 1
              loop: start=0, step=1, limit=1
              $region37: #{fused_relu_gconv_bn_relu.1} parent=35 // loop_pre_header
                _
              $region38: #{fused_relu_gconv_bn_relu.1} parent=35 // loop_header
                %s176 = sphi 0, %s180
                %p177 = scmp.ge.s32.totalorder %s176, 1
                %s181 = sphi %s166, %s166
                %s182 = sphi %s163, %s163
              $region39: #{fused_relu_gconv_bn_relu.1} parent=35 // loop_header_branch
                %179 = sbr.rel (%p177) target = $region43
              $region40: #{fused_relu_gconv_bn_relu.1} parent=35 // loop_body
                %v183 = vld [vmem:[%s181] sm:%s174]
                %184 = vst [vmem:[%s182] sm:%s174] %v183
                %v185 = vld [vmem:[%s181 + $0x4] sm:%s174]
                %186 = vst [vmem:[%s182 + $0x4] sm:%s174] %v185
                %v187 = vld [vmem:[%s181 + $0x8] sm:%s174]
                %188 = vst [vmem:[%s182 + $0x8] sm:%s174] %v187
                %v189 = vld [vmem:[%s181 + $0xc] sm:%s174]
                %190 = vst [vmem:[%s182 + $0xc] sm:%s174] %v189
                %v191 = vld [vmem:[%s181 + $0x10] sm:%s174]
                %192 = vst [vmem:[%s182 + $0x10] sm:%s174] %v191
                %v193 = vld [vmem:[%s181 + $0x14] sm:%s174]
                %194 = vst [vmem:[%s182 + $0x14] sm:%s174] %v193
                %v195 = vld [vmem:[%s181 + $0x18] sm:%s174]
                %196 = vst [vmem:[%s182 + $0x18] sm:%s174] %v195
                %v197 = vld [vmem:[%s181 + $0x1c] sm:%s174]
                %198 = vst [vmem:[%s182 + $0x1c] sm:%s174] %v197
                %v199 = vld [vmem:[%s181 + $0x20] sm:%s174]
                %200 = vst [vmem:[%s182 + $0x20] sm:%s174] %v199
                %v201 = vld [vmem:[%s181 + $0x24] sm:%s174]
                %202 = vst [vmem:[%s182 + $0x24] sm:%s174] %v201
                %v203 = vld [vmem:[%s181 + $0x28] sm:%s174]
                %204 = vst [vmem:[%s182 + $0x28] sm:%s174] %v203
                %v205 = vld [vmem:[%s181 + $0x2c] sm:%s174]
                %206 = vst [vmem:[%s182 + $0x2c] sm:%s174] %v205
                %v207 = vld [vmem:[%s181 + $0x30] sm:%s174]
                %208 = vst [vmem:[%s182 + $0x30] sm:%s174] %v207
                %v209 = vld [vmem:[%s181 + $0x34] sm:%s174]
                %210 = vst [vmem:[%s182 + $0x34] sm:%s174] %v209
                %v211 = vld [vmem:[%s181 + $0x38] sm:%s174]
                %212 = vst [vmem:[%s182 + $0x38] sm:%s174] %v211
                %v213 = vld [vmem:[%s181 + $0x3c] sm:%s174]
                %214 = vst [vmem:[%s182 + $0x3c] sm:%s174] %v213
                %v215 = vld [vmem:[%s181 + $0x100] sm:%s174]
                %216 = vst [vmem:[%s182 + $0x40] sm:%s174] %v215
                %v217 = vld [vmem:[%s181 + $0x104] sm:%s174]
                %218 = vst [vmem:[%s182 + $0x44] sm:%s174] %v217
                %v219 = vld [vmem:[%s181 + $0x108] sm:%s174]
                %220 = vst [vmem:[%s182 + $0x48] sm:%s174] %v219
                %v221 = vld [vmem:[%s181 + $0x10c] sm:%s174]
                %222 = vst [vmem:[%s182 + $0x4c] sm:%s174] %v221
                %v223 = vld [vmem:[%s181 + $0x110] sm:%s174]
                %224 = vst [vmem:[%s182 + $0x50] sm:%s174] %v223
                %v225 = vld [vmem:[%s181 + $0x114] sm:%s174]
                %226 = vst [vmem:[%s182 + $0x54] sm:%s174] %v225
                %v227 = vld [vmem:[%s181 + $0x118] sm:%s174]
                %228 = vst [vmem:[%s182 + $0x58] sm:%s174] %v227
                %v229 = vld [vmem:[%s181 + $0x11c] sm:%s174]
                %230 = vst [vmem:[%s182 + $0x5c] sm:%s174] %v229
                %v231 = vld [vmem:[%s181 + $0x120] sm:%s174]
                %232 = vst [vmem:[%s182 + $0x60] sm:%s174] %v231
                %v233 = vld [vmem:[%s181 + $0x124] sm:%s174]
                %234 = vst [vmem:[%s182 + $0x64] sm:%s174] %v233
                %v235 = vld [vmem:[%s181 + $0x128] sm:%s174]
                %236 = vst [vmem:[%s182 + $0x68] sm:%s174] %v235
                %v237 = vld [vmem:[%s181 + $0x12c] sm:%s174]
                %238 = vst [vmem:[%s182 + $0x6c] sm:%s174] %v237
                %v239 = vld [vmem:[%s181 + $0x130] sm:%s174]
                %240 = vst [vmem:[%s182 + $0x70] sm:%s174] %v239
                %v241 = vld [vmem:[%s181 + $0x134] sm:%s174]
                %242 = vst [vmem:[%s182 + $0x74] sm:%s174] %v241
                %v243 = vld [vmem:[%s181 + $0x138] sm:%s174]
                %244 = vst [vmem:[%s182 + $0x78] sm:%s174] %v243
                %v245 = vld [vmem:[%s181 + $0x13c] sm:%s174]
                %246 = vst [vmem:[%s182 + $0x7c] sm:%s174] %v245
                %v247 = vld [vmem:[%s181 + $0x200] sm:%s174]
                %248 = vst [vmem:[%s182 + $0x80] sm:%s174] %v247
                %v249 = vld [vmem:[%s181 + $0x204] sm:%s174]
                %250 = vst [vmem:[%s182 + $0x84] sm:%s174] %v249
                %v251 = vld [vmem:[%s181 + $0x208] sm:%s174]
                %252 = vst [vmem:[%s182 + $0x88] sm:%s174] %v251
                %v253 = vld [vmem:[%s181 + $0x20c] sm:%s174]
                %254 = vst [vmem:[%s182 + $0x8c] sm:%s174] %v253
                %v255 = vld [vmem:[%s181 + $0x210] sm:%s174]
                %256 = vst [vmem:[%s182 + $0x90] sm:%s174] %v255
                %v257 = vld [vmem:[%s181 + $0x214] sm:%s174]
                %258 = vst [vmem:[%s182 + $0x94] sm:%s174] %v257
                %v259 = vld [vmem:[%s181 + $0x218] sm:%s174]
                %260 = vst [vmem:[%s182 + $0x98] sm:%s174] %v259
                %v261 = vld [vmem:[%s181 + $0x21c] sm:%s174]
                %262 = vst [vmem:[%s182 + $0x9c] sm:%s174] %v261
                %v263 = vld [vmem:[%s181 + $0x220] sm:%s174]
                %264 = vst [vmem:[%s182 + $0xa0] sm:%s174] %v263
                %v265 = vld [vmem:[%s181 + $0x224] sm:%s174]
                %266 = vst [vmem:[%s182 + $0xa4] sm:%s174] %v265
                %v267 = vld [vmem:[%s181 + $0x228] sm:%s174]
                %268 = vst [vmem:[%s182 + $0xa8] sm:%s174] %v267
                %v269 = vld [vmem:[%s181 + $0x22c] sm:%s174]
                %270 = vst [vmem:[%s182 + $0xac] sm:%s174] %v269
                %v271 = vld [vmem:[%s181 + $0x230] sm:%s174]
                %272 = vst [vmem:[%s182 + $0xb0] sm:%s174] %v271
                %v273 = vld [vmem:[%s181 + $0x234] sm:%s174]
                %274 = vst [vmem:[%s182 + $0xb4] sm:%s174] %v273
                %v275 = vld [vmem:[%s181 + $0x238] sm:%s174]
                %276 = vst [vmem:[%s182 + $0xb8] sm:%s174] %v275
                %v277 = vld [vmem:[%s181 + $0x23c] sm:%s174]
                %278 = vst [vmem:[%s182 + $0xbc] sm:%s174] %v277
                %v279 = vld [vmem:[%s181 + $0x300] sm:%s174]
                %280 = vst [vmem:[%s182 + $0xc0] sm:%s174] %v279
                %v281 = vld [vmem:[%s181 + $0x304] sm:%s174]
                %282 = vst [vmem:[%s182 + $0xc4] sm:%s174] %v281
                %v283 = vld [vmem:[%s181 + $0x308] sm:%s174]
                %284 = vst [vmem:[%s182 + $0xc8] sm:%s174] %v283
                %v285 = vld [vmem:[%s181 + $0x30c] sm:%s174]
                %286 = vst [vmem:[%s182 + $0xcc] sm:%s174] %v285
                %v287 = vld [vmem:[%s181 + $0x310] sm:%s174]
                %288 = vst [vmem:[%s182 + $0xd0] sm:%s174] %v287
                %v289 = vld [vmem:[%s181 + $0x314] sm:%s174]
                %290 = vst [vmem:[%s182 + $0xd4] sm:%s174] %v289
                %v291 = vld [vmem:[%s181 + $0x318] sm:%s174]
                %292 = vst [vmem:[%s182 + $0xd8] sm:%s174] %v291
                %v293 = vld [vmem:[%s181 + $0x31c] sm:%s174]
                %294 = vst [vmem:[%s182 + $0xdc] sm:%s174] %v293
                %v295 = vld [vmem:[%s181 + $0x320] sm:%s174]
                %296 = vst [vmem:[%s182 + $0xe0] sm:%s174] %v295
                %v297 = vld [vmem:[%s181 + $0x324] sm:%s174]
                %298 = vst [vmem:[%s182 + $0xe4] sm:%s174] %v297
                %v299 = vld [vmem:[%s181 + $0x328] sm:%s174]
                %300 = vst [vmem:[%s182 + $0xe8] sm:%s174] %v299
                %v301 = vld [vmem:[%s181 + $0x32c] sm:%s174]
                %302 = vst [vmem:[%s182 + $0xec] sm:%s174] %v301
                %v303 = vld [vmem:[%s181 + $0x330] sm:%s174]
                %304 = vst [vmem:[%s182 + $0xf0] sm:%s174] %v303
                %v305 = vld [vmem:[%s181 + $0x334] sm:%s174]
                %306 = vst [vmem:[%s182 + $0xf4] sm:%s174] %v305
                %v307 = vld [vmem:[%s181 + $0x338] sm:%s174]
                %308 = vst [vmem:[%s182 + $0xf8] sm:%s174] %v307
                %v309 = vld [vmem:[%s181 + $0x33c] sm:%s174]
                %310 = vst [vmem:[%s182 + $0xfc] sm:%s174] %v309
              $region41: #{fused_relu_gconv_bn_relu.1} parent=35 // loop_footer
                %s180 = sadd.s32 1, %s176
              $region42: #{fused_relu_gconv_bn_relu.1} parent=35 // loop_footer_branch
                %175 = sbr.rel target = $region38
              $region43: #{fused_relu_gconv_bn_relu.1} parent=35 // loop_exit
                _
            $region36: #{fused_relu_gconv_bn_relu.1} parent=27 // pred_fallthru
              _
          $region28: #{fused_relu_gconv_bn_relu.1} parent=23 // pred_fallthru
            _
          %459 = vnop
        $region24: #{fused_relu_gconv_bn_relu.1} parent=19 // pred_fallthru
          _
        // Predicated region
        $region62: #{fused_relu_gconv_bn_relu.1} parent=19 // pred_check
          %p460 = pneg %p56
        $region63: #{fused_relu_gconv_bn_relu.1} parent=19 // pred_check_branch
          %462 = sbr.rel (%p460) target = $region65
        $region64: #{fused_relu_gconv_bn_relu.1} parent=19 // pred_region
          %p463 = scmp.lt.s32.totalorder %s10, 3
          %s464 = scalar_select %p463, %s10, 3
          %s465 = smul.addr %s464, 32
          %s466 = smul.addr %s465, 4
          %s467 = scalar_lea.vmem %s1, %s466
        $region65: #{fused_relu_gconv_bn_relu.1} parent=19 // pred_fallthru
          _
        // Predicated region
        $region66: #{fused_relu_gconv_bn_relu.1} parent=19 // pred_check
          %p468 = pneg %p82
        $region67: #{fused_relu_gconv_bn_relu.1} parent=19 // pred_check_branch
          %470 = sbr.rel (%p468) target = $region69
        $region68: #{fused_relu_gconv_bn_relu.1} parent=19 // pred_region
          %p471 = scmp.lt.s32.totalorder %s10, 3
          %s472 = scalar_select %p471, %s10, 3
          %s473 = smul.addr %s472, 16
          %s474 = smul.addr %s473, 8
          %s475 = scalar_lea.vmem %s2, %s474
        $region69: #{fused_relu_gconv_bn_relu.1} parent=19 // pred_fallthru
          _
      $region20: #{fused_relu_gconv_bn_relu.1} parent=5 // pred_fallthru
        _
      %p476 = scmp.le.s32.totalorder 1, %s10
      %p477 = scmp.lt.s32.totalorder %s10, 5
      %p478 = pnand %p476, %p477
      %p479 = pneg %p478
      // Predicated region
      $region70: #{fused_relu_gconv_bn_relu.1} parent=5 // pred_check
        _
      $region71: #{fused_relu_gconv_bn_relu.1} parent=5 // pred_check_branch
        %481 = sbr.rel (%p478) target = $region73
      $region72: #{fused_relu_gconv_bn_relu.1} parent=5 // pred_region
        %s482 = ssub.s32 %s10, 1
        %s483 = sand.u32 %s23, 1
        %s484 = sand.u32 %s23, 1
        %s485 = smul.addr %s484, 256
        %s486 = scalar_lea.vmem [#allocation3], %s485
        // Predicated region
        $region74: #{fused_relu_gconv_bn_relu.1} parent=72 // pred_check
          %p487 = pneg %p36
        $region75: #{fused_relu_gconv_bn_relu.1} parent=72 // pred_check_branch
          %489 = sbr.rel (%p487) target = $region77
        $region76: #{fused_relu_gconv_bn_relu.1} parent=72 // pred_region
          _
        $region77: #{fused_relu_gconv_bn_relu.1} parent=72 // pred_fallthru
          _
        %s490 = sand.u32 %s23, 1
        %s491 = sand.u32 %s23, 1
        %s492 = smul.addr %s491, 256
        %s493 = scalar_lea.vmem [#allocation3], %s492
        %p494 = pneg %p36
        %p495 = pneg %p33
        %p496 = scmp.lt.s32.totalorder %s15, 3
        %s497 = scalar_select %p496, %s15, 3
        %s498 = smul.addr %s497, 32
        %s499 = smul.addr %s498, 4
        %s500 = scalar_lea.vmem %s1, %s499
        %p501 = pneg %p62
        %p502 = pneg %p59
        %p503 = scmp.lt.s32.totalorder %s15, 3
        %s504 = scalar_select %p503, %s15, 3
        %s505 = smul.addr %s504, 16
        %s506 = smul.addr %s505, 8
        %s507 = scalar_lea.vmem %s2, %s506
        %p508 = pneg %p88
        %p509 = pneg %p85
        %p510 = pneg %p109
        %p511 = pneg %p106
        %p512 = pneg %p135
        %p513 = pneg %p132
        %p514 = scmp.lt.s32.totalorder %s15, 3
        %s515 = scalar_select %p514, %s15, 3
        %s516 = smul.addr %s515, 16
        %s517 = smul.addr %s516, 8
        %s518 = scalar_lea.vmem %s4, %s517
        %s519 = smul.u32 16, %s15
        %p520 = scmp.lt.s32.totalorder %s15, 3
        %s521 = scalar_select %p520, %s15, 3
        %s522 = smul.addr %s521, 32
        %s523 = smul.addr %s522, 4
        %s524 = scalar_lea.vmem %s1, %s523
        %p525 = scmp.lt.s32.totalorder %s15, 3
        %s526 = scalar_select %p525, %s15, 3
        %s527 = smul.addr %s526, 16
        %s528 = smul.addr %s527, 8
        %s529 = scalar_lea.vmem %s2, %s528
        %p530 = scmp.lt.s32.totalorder %s15, 3
        %s531 = scalar_select %p530, %s15, 3
        %s532 = smul.addr %s531, 16
        %s533 = smul.addr %s532, 8
        %s534 = scalar_lea.vmem %s4, %s533
        %v536 = vld [vmem:[%s3] sm:$0x1]
        %v537 = vld [vmem:[%s486] sm:$0xf]
        %v538 = vld [vmem:[%s486 + $0x4] sm:$0xf]
        %v541 = vunpack.c.l.b16 %v537
        %v542 = vunpack.c.l.b16 %v538
        %v543 = vpack.c.b16 %v542, %v541
        %544 = vrot.lane.b32.xlu0 %v543, 1
        %v545 = vpop.permute.xlu0 %544
        %vm546 = vcmask 7168
        %v549 = vsel %vm546, 0, %v545
        %v552 = vpack.i.b16 %v536, %v536
        %v554 = vlaneseq
        %v555 = vshrl.u32 %v554, 7
        %v556 = vsub.s32 0, %v555
        %v557 = vrot.slane %v552, %v556
        %v558 = vmul.bf16 %v549, %v557
        %v560 = vunpack.c.l.b16 %v558
        %v561 = vunpack.c.h.b16 %v558
        %v562 = vpack.c.b16 %v560, %v560
        %v563 = vpack.c.b16 %v561, %v561
        %vm566 = vcmask 519168
        %567 = vst.msk [vmem:[#allocation2] sm:$0xf] %vm566, %v562
        %568 = vst.msk [vmem:[#allocation2 + $0x4] sm:$0xf] %vm566, %v563
        %s569 = scalar_lea.vmem %s486, 64 [#allocation3]
        %v570 = vld [vmem:[%s569] sm:$0xf]
        %v571 = vld [vmem:[%s569 + $0x4] sm:$0xf]
        %572 = vst.msk [vmem:[#allocation2 + $0x8] sm:$0xf] %vm566, %v570
        %573 = vst.msk [vmem:[#allocation2 + $0xc] sm:$0xf] %vm566, %v571
        %v574 = vld [vmem:[%s486] sm:$0xf]
        %v575 = vld [vmem:[%s486 + $0x4] sm:$0xf]
        %576 = vst.msk [vmem:[#allocation2 + $0x10] sm:$0xf] %vm566, %v574
        %577 = vst.msk [vmem:[#allocation2 + $0x14] sm:$0xf] %vm566, %v575
        %s578 = scalar_lea.vmem %s486, 128 [#allocation3]
        %v579 = vld [vmem:[%s578] sm:$0xf]
        %v580 = vld [vmem:[%s578 + $0x4] sm:$0xf]
        %v583 = vunpack.c.l.b16 %v579
        %v584 = vunpack.c.l.b16 %v580
        %v585 = vpack.c.b16 %v584, %v583
        %586 = vrot.lane.b32.xlu0 %v585, 1
        %v587 = vpop.permute.xlu0 %586
        %v589 = vsel %vm546, 0, %v587
        %v591 = vmul.bf16 %v589, %v557
        %v593 = vunpack.c.l.b16 %v591
        %v594 = vunpack.c.h.b16 %v591
        %v595 = vpack.c.b16 %v593, %v593
        %v596 = vpack.c.b16 %v594, %v594
        %599 = vst.msk [vmem:[#allocation2 + $0x18] sm:$0xf] %vm566, %v595
        %600 = vst.msk [vmem:[#allocation2 + $0x1c] sm:$0xf] %vm566, %v596
        %s601 = scalar_lea.vmem %s486, 192 [#allocation3]
        %v602 = vld [vmem:[%s601] sm:$0xf]
        %v603 = vld [vmem:[%s601 + $0x4] sm:$0xf]
        %604 = vst.msk [vmem:[#allocation2 + $0x20] sm:$0xf] %vm566, %v602
        %605 = vst.msk [vmem:[#allocation2 + $0x24] sm:$0xf] %vm566, %v603
        %v606 = vld [vmem:[%s578] sm:$0xf]
        %v607 = vld [vmem:[%s578 + $0x4] sm:$0xf]
        %608 = vst.msk [vmem:[#allocation2 + $0x28] sm:$0xf] %vm566, %v606
        %609 = vst.msk [vmem:[#allocation2 + $0x2c] sm:$0xf] %vm566, %v607
        %v610 = vld [vmem:[%s486] sm:$0xf]
        %v611 = vld [vmem:[%s486 + $0x4] sm:$0xf]
        %v614 = vunpack.c.l.b16 %v610
        %v615 = vunpack.c.l.b16 %v611
        %v616 = vpack.c.b16 %v615, %v614
        %617 = vrot.lane.b32.xlu0 %v616, 121
        %v618 = vpop.permute.xlu0 %617
        %v620 = vsel %vm546, 0, %v618
        %v622 = vmul.bf16 %v620, %v557
        %v624 = vunpack.c.l.b16 %v622
        %v625 = vunpack.c.h.b16 %v622
        %v626 = vpack.c.b16 %v624, %v624
        %v627 = vpack.c.b16 %v625, %v625
        %630 = vst.msk [vmem:[#allocation2 + $0x30] sm:$0xf] %vm566, %v626
        %631 = vst.msk [vmem:[#allocation2 + $0x34] sm:$0xf] %vm566, %v627
        %v632 = vld [vmem:[%s569] sm:$0xf]
        %v633 = vld [vmem:[%s569 + $0x4] sm:$0xf]
        %636 = vrot.lane.b32.xlu0 %v632, 120
        %v637 = vpop.permute.xlu0 %636
        %638 = vrot.lane.b32.xlu0 %v633, 120
        %v639 = vpop.permute.xlu0 %638
        %642 = vst.msk [vmem:[#allocation2 + $0x38] sm:$0xf] %vm566, %v637
        %643 = vst.msk [vmem:[#allocation2 + $0x3c] sm:$0xf] %vm566, %v639
        %v644 = vld [vmem:[%s486] sm:$0xf]
        %v645 = vld [vmem:[%s486 + $0x4] sm:$0xf]
        %648 = vrot.lane.b32.xlu0 %v644, 120
        %v649 = vpop.permute.xlu0 %648
        %650 = vrot.lane.b32.xlu0 %v645, 120
        %v651 = vpop.permute.xlu0 %650
        %654 = vst.msk [vmem:[#allocation2 + $0x40] sm:$0xf] %vm566, %v649
        %655 = vst.msk [vmem:[#allocation2 + $0x44] sm:$0xf] %vm566, %v651
        %v656 = vld [vmem:[%s524] sm:$0xff]
        %v657 = vld [vmem:[%s524 + $0x8] sm:$0xff]
        %v658 = vld [vmem:[#allocation2] sm:$0xf]
        %v659 = vld [vmem:[#allocation2 + $0x4] sm:$0xf]
        %v660 = vld [vmem:[#allocation2 + $0x8] sm:$0xf]
        %v661 = vld [vmem:[#allocation2 + $0xc] sm:$0xf]
        %v662 = vld [vmem:[#allocation2 + $0x10] sm:$0xf]
        %v663 = vld [vmem:[#allocation2 + $0x14] sm:$0xf]
        %v664 = vld [vmem:[#allocation2 + $0x18] sm:$0xf]
        %v665 = vld [vmem:[#allocation2 + $0x1c] sm:$0xf]
        %v666 = vld [vmem:[#allocation2 + $0x20] sm:$0xf]
        %v667 = vld [vmem:[#allocation2 + $0x24] sm:$0xf]
        %v668 = vld [vmem:[#allocation2 + $0x28] sm:$0xf]
        %v669 = vld [vmem:[#allocation2 + $0x2c] sm:$0xf]
        %v670 = vld [vmem:[#allocation2 + $0x30] sm:$0xf]
        %v671 = vld [vmem:[#allocation2 + $0x34] sm:$0xf]
        %v672 = vld [vmem:[#allocation2 + $0x38] sm:$0xf]
        %v673 = vld [vmem:[#allocation2 + $0x3c] sm:$0xf]
        %v674 = vld [vmem:[#allocation2 + $0x40] sm:$0xf]
        %v675 = vld [vmem:[#allocation2 + $0x44] sm:$0xf]
        %v678 = vunpack.c.l.b16 %v656
        %v679 = vunpack.c.h.b16 %v656
        %v680 = vunpack.c.l.b16 %v657
        %v681 = vunpack.c.h.b16 %v657
        %v682 = vpack.c.b16 %v680, %v678
        %v683 = vpack.c.b16 %v681, %v679
        %v703 = vunpack.c.l.b16 %v658
        %v704 = vunpack.c.l.b16 %v659
        %v705 = vunpack.c.l.b16 %v660
        %v706 = vunpack.c.l.b16 %v661
        %v707 = vunpack.c.l.b16 %v662
        %v708 = vunpack.c.l.b16 %v663
        %v709 = vunpack.c.l.b16 %v664
        %v710 = vunpack.c.l.b16 %v665
        %v711 = vunpack.c.l.b16 %v666
        %v712 = vunpack.c.l.b16 %v667
        %v713 = vunpack.c.l.b16 %v668
        %v714 = vunpack.c.l.b16 %v669
        %v715 = vunpack.c.l.b16 %v670
        %v716 = vunpack.c.l.b16 %v671
        %v717 = vunpack.c.l.b16 %v672
        %v718 = vunpack.c.l.b16 %v673
        %v719 = vunpack.c.l.b16 %v674
        %v720 = vunpack.c.l.b16 %v675
        %v721 = vpack.c.b16 %v704, %v703
        %v722 = vpack.c.b16 %v706, %v705
        %v723 = vpack.c.b16 %v708, %v707
        %v724 = vpack.c.b16 %v710, %v709
        %v725 = vpack.c.b16 %v712, %v711
        %v726 = vpack.c.b16 %v714, %v713
        %v727 = vpack.c.b16 %v716, %v715
        %v728 = vpack.c.b16 %v718, %v717
        %v729 = vpack.c.b16 %v720, %v719
        %vm739 = vcmask 130048
        %v741 = vsel %vm739, %v683, 0
        %743 = vmatprep.subr.bf16.mxu0 0
        %744 = vmatpush1.bf16.msra.mxu0 %v728
        %745 = vmatprep.subr.bf16.mxu0 0
        %746 = vmatpush1.bf16.msra.mxu0 %v727
        %747 = vmatprep.subr.bf16.mxu0 0
        %748 = vmatpush1.bf16.msra.mxu0 %v726
        %749 = vmatprep.subr.bf16.mxu0 0
        %750 = vmatpush1.bf16.msra.mxu0 %v725
        %751 = vmatprep.subr.bf16.mxu0 0
        %752 = vmatpush1.bf16.msra.mxu0 %v724
        %753 = vmatprep.subr.bf16.mxu0 0
        %754 = vmatpush1.bf16.msra.mxu0 %v723
        %755 = vmatprep.subr.bf16.mxu0 0
        %756 = vmatpush1.bf16.msra.mxu0 %v722
        %757 = vmatprep.subr.bf16.mxu0 0
        %758 = vmatpush1.bf16.msra.mxu0 %v721
        %759 = vmatprep.subr.bf16.mxu0 0
        %760 = vmatpush2.bf16.msra.mxu0 0
        %761 = vmatprep.subr.bf16.mxu0 0
        %762 = vmatpush2.bf16.msra.mxu0 0
        %763 = vmatprep.subr.bf16.mxu0 0
        %764 = vmatpush2.bf16.msra.mxu0 0
        %765 = vmatprep.subr.bf16.mxu0 0
        %766 = vmatpush2.bf16.msra.mxu0 0
        %767 = vmatprep.subr.bf16.mxu0 0
        %768 = vmatpush2.bf16.msra.mxu0 0
        %769 = vmatprep.subr.bf16.mxu0 0
        %770 = vmatpush2.bf16.msra.mxu0 0
        %771 = vmatprep.subr.bf16.mxu0 0
        %772 = vmatpush2.bf16.msra.mxu0 0
        %773 = vmatprep.subr.bf16.mxu0 0
        %774 = vmatpush2.bf16.msra.mxu0 %v729
        %775 = vmatprep.mubr.bf16.mxu0 %v741
        %776 = vmatmul.mubr.bf16.gmra.mxu0 %v682
        %v777 = vpop.f32.mrf.mxu0
        %v778 = vadd.f32 0.0, %v777
        %v779 = vpop.f32.mrf.mxu0
        %v780 = vpop.f32.mrf.mxu0
        %v781 = vadd.f32 0.0, %v780
        %v782 = vpop.f32.mrf.mxu0
        %783 = vdwg.mxu0
        %vm784 = vcmask 523264
        %785 = vst.msk [vmem:[%s534] sm:$0xff] %vm784, %v778
        %786 = vst.msk [vmem:[%s534 + $0x8] sm:$0xff] %vm784, %v781
        %v787 = vsel %vm784, %v778, 0.0
        %788 = vadd.xlane.f32.xlu0 %v787
        %v789 = vpop.xlane.xlu0 %788
        %v790 = vsel %vm784, %v781, 0.0
        %791 = vadd.xlane.f32.xlu0 %v790
        %v792 = vpop.xlane.xlu0 %791
        %v793 = vmul.f32 %v778, %v778
        %v794 = vmul.f32 %v781, %v781
        %v795 = vsel %vm784, %v793, 0.0
        %796 = vadd.xlane.f32.xlu0 %v795
        %v797 = vpop.xlane.xlu0 %796
        %v798 = vsel %vm784, %v794, 0.0
        %799 = vadd.xlane.f32.xlu0 %v798
        %v800 = vpop.xlane.xlu0 %799
        %v801 = vld [vmem:[%s486 + $0x8] sm:$0xf]
        %v802 = vld [vmem:[%s486 + $0xc] sm:$0xf]
        %v805 = vunpack.c.l.b16 %v801
        %v806 = vunpack.c.l.b16 %v802
        %v807 = vpack.c.b16 %v806, %v805
        %808 = vrot.lane.b32.xlu0 %v807, 1
        %v809 = vpop.permute.xlu0 %808
        %v811 = vsel %vm546, 0, %v809
        %v813 = vmul.bf16 %v811, %v557
        %v815 = vunpack.c.l.b16 %v813
        %v816 = vunpack.c.h.b16 %v813
        %v817 = vpack.c.b16 %v815, %v815
        %v818 = vpack.c.b16 %v816, %v816
        %821 = vst.msk [vmem:[#allocation2] sm:$0xf] %vm566, %v817
        %822 = vst.msk [vmem:[#allocation2 + $0x4] sm:$0xf] %vm566, %v818
        %v823 = vld [vmem:[%s569 + $0x8] sm:$0xf]
        %v824 = vld [vmem:[%s569 + $0xc] sm:$0xf]
        %825 = vst.msk [vmem:[#allocation2 + $0x8] sm:$0xf] %vm566, %v823
        %826 = vst.msk [vmem:[#allocation2 + $0xc] sm:$0xf] %vm566, %v824
        %v827 = vld [vmem:[%s486 + $0x8] sm:$0xf]
        %v828 = vld [vmem:[%s486 + $0xc] sm:$0xf]
        %829 = vst.msk [vmem:[#allocation2 + $0x10] sm:$0xf] %vm566, %v827
        %830 = vst.msk [vmem:[#allocation2 + $0x14] sm:$0xf] %vm566, %v828
        %v831 = vld [vmem:[%s578 + $0x8] sm:$0xf]
        %v832 = vld [vmem:[%s578 + $0xc] sm:$0xf]
        %v835 = vunpack.c.l.b16 %v831
        %v836 = vunpack.c.l.b16 %v832
        %v837 = vpack.c.b16 %v836, %v835
        %838 = vrot.lane.b32.xlu0 %v837, 1
        %v839 = vpop.permute.xlu0 %838
        %v841 = vsel %vm546, 0, %v839
        %v843 = vmul.bf16 %v841, %v557
        %v845 = vunpack.c.l.b16 %v843
        %v846 = vunpack.c.h.b16 %v843
        %v847 = vpack.c.b16 %v845, %v845
        %v848 = vpack.c.b16 %v846, %v846
        %851 = vst.msk [vmem:[#allocation2 + $0x18] sm:$0xf] %vm566, %v847
        %852 = vst.msk [vmem:[#allocation2 + $0x1c] sm:$0xf] %vm566, %v848
        %v853 = vld [vmem:[%s601 + $0x8] sm:$0xf]
        %v854 = vld [vmem:[%s601 + $0xc] sm:$0xf]
        %855 = vst.msk [vmem:[#allocation2 + $0x20] sm:$0xf] %vm566, %v853
        %856 = vst.msk [vmem:[#allocation2 + $0x24] sm:$0xf] %vm566, %v854
        %v857 = vld [vmem:[%s578 + $0x8] sm:$0xf]
        %v858 = vld [vmem:[%s578 + $0xc] sm:$0xf]
        %859 = vst.msk [vmem:[#allocation2 + $0x28] sm:$0xf] %vm566, %v857
        %860 = vst.msk [vmem:[#allocation2 + $0x2c] sm:$0xf] %vm566, %v858
        %v861 = vld [vmem:[%s486 + $0x8] sm:$0xf]
        %v862 = vld [vmem:[%s486 + $0xc] sm:$0xf]
        %v865 = vunpack.c.l.b16 %v861
        %v866 = vunpack.c.l.b16 %v862
        %v867 = vpack.c.b16 %v866, %v865
        %868 = vrot.lane.b32.xlu0 %v867, 121
        %v869 = vpop.permute.xlu0 %868
        %v871 = vsel %vm546, 0, %v869
        %v873 = vmul.bf16 %v871, %v557
        %v875 = vunpack.c.l.b16 %v873
        %v876 = vunpack.c.h.b16 %v873
        %v877 = vpack.c.b16 %v875, %v875
        %v878 = vpack.c.b16 %v876, %v876
        %881 = vst.msk [vmem:[#allocation2 + $0x30] sm:$0xf] %vm566, %v877
        %882 = vst.msk [vmem:[#allocation2 + $0x34] sm:$0xf] %vm566, %v878
        %v883 = vld [vmem:[%s569 + $0x8] sm:$0xf]
        %v884 = vld [vmem:[%s569 + $0xc] sm:$0xf]
        %887 = vrot.lane.b32.xlu0 %v883, 120
        %v888 = vpop.permute.xlu0 %887
        %889 = vrot.lane.b32.xlu0 %v884, 120
        %v890 = vpop.permute.xlu0 %889
        %893 = vst.msk [vmem:[#allocation2 + $0x38] sm:$0xf] %vm566, %v888
        %894 = vst.msk [vmem:[#allocation2 + $0x3c] sm:$0xf] %vm566, %v890
        %v895 = vld [vmem:[%s486 + $0x8] sm:$0xf]
        %v896 = vld [vmem:[%s486 + $0xc] sm:$0xf]
        %899 = vrot.lane.b32.xlu0 %v895, 120
        %v900 = vpop.permute.xlu0 %899
        %901 = vrot.lane.b32.xlu0 %v896, 120
        %v902 = vpop.permute.xlu0 %901
        %905 = vst.msk [vmem:[#allocation2 + $0x40] sm:$0xf] %vm566, %v900
        %906 = vst.msk [vmem:[#allocation2 + $0x44] sm:$0xf] %vm566, %v902
        %s907 = scalar_lea.vmem %s524, 16
        %v908 = vld [vmem:[%s907] sm:$0xff]
        %v909 = vld [vmem:[%s907 + $0x8] sm:$0xff]
        %v910 = vld [vmem:[#allocation2] sm:$0xf]
        %v911 = vld [vmem:[#allocation2 + $0x4] sm:$0xf]
        %v912 = vld [vmem:[#allocation2 + $0x8] sm:$0xf]
        %v913 = vld [vmem:[#allocation2 + $0xc] sm:$0xf]
        %v914 = vld [vmem:[#allocation2 + $0x10] sm:$0xf]
        %v915 = vld [vmem:[#allocation2 + $0x14] sm:$0xf]
        %v916 = vld [vmem:[#allocation2 + $0x18] sm:$0xf]
        %v917 = vld [vmem:[#allocation2 + $0x1c] sm:$0xf]
        %v918 = vld [vmem:[#allocation2 + $0x20] sm:$0xf]
        %v919 = vld [vmem:[#allocation2 + $0x24] sm:$0xf]
        %v920 = vld [vmem:[#allocation2 + $0x28] sm:$0xf]
        %v921 = vld [vmem:[#allocation2 + $0x2c] sm:$0xf]
        %v922 = vld [vmem:[#allocation2 + $0x30] sm:$0xf]
        %v923 = vld [vmem:[#allocation2 + $0x34] sm:$0xf]
        %v924 = vld [vmem:[#allocation2 + $0x38] sm:$0xf]
        %v925 = vld [vmem:[#allocation2 + $0x3c] sm:$0xf]
        %v926 = vld [vmem:[#allocation2 + $0x40] sm:$0xf]
        %v927 = vld [vmem:[#allocation2 + $0x44] sm:$0xf]
        %v930 = vunpack.c.l.b16 %v908
        %v931 = vunpack.c.h.b16 %v908
        %v932 = vunpack.c.l.b16 %v909
        %v933 = vunpack.c.h.b16 %v909
        %v934 = vpack.c.b16 %v932, %v930
        %v935 = vpack.c.b16 %v933, %v931
        %v955 = vunpack.c.l.b16 %v910
        %v956 = vunpack.c.l.b16 %v911
        %v957 = vunpack.c.l.b16 %v912
        %v958 = vunpack.c.l.b16 %v913
        %v959 = vunpack.c.l.b16 %v914
        %v960 = vunpack.c.l.b16 %v915
        %v961 = vunpack.c.l.b16 %v916
        %v962 = vunpack.c.l.b16 %v917
        %v963 = vunpack.c.l.b16 %v918
        %v964 = vunpack.c.l.b16 %v919
        %v965 = vunpack.c.l.b16 %v920
        %v966 = vunpack.c.l.b16 %v921
        %v967 = vunpack.c.l.b16 %v922
        %v968 = vunpack.c.l.b16 %v923
        %v969 = vunpack.c.l.b16 %v924
        %v970 = vunpack.c.l.b16 %v925
        %v971 = vunpack.c.l.b16 %v926
        %v972 = vunpack.c.l.b16 %v927
        %v973 = vpack.c.b16 %v956, %v955
        %v974 = vpack.c.b16 %v958, %v957
        %v975 = vpack.c.b16 %v960, %v959
        %v976 = vpack.c.b16 %v962, %v961
        %v977 = vpack.c.b16 %v964, %v963
        %v978 = vpack.c.b16 %v966, %v965
        %v979 = vpack.c.b16 %v968, %v967
        %v980 = vpack.c.b16 %v970, %v969
        %v981 = vpack.c.b16 %v972, %v971
        %v992 = vsel %vm739, %v935, 0
        %994 = vmatprep.subr.bf16.mxu0 0
        %995 = vmatpush1.bf16.msra.mxu0 %v980
        %996 = vmatprep.subr.bf16.mxu0 0
        %997 = vmatpush1.bf16.msra.mxu0 %v979
        %998 = vmatprep.subr.bf16.mxu0 0
        %999 = vmatpush1.bf16.msra.mxu0 %v978
        %1000 = vmatprep.subr.bf16.mxu0 0
        %1001 = vmatpush1.bf16.msra.mxu0 %v977
        %1002 = vmatprep.subr.bf16.mxu0 0
        %1003 = vmatpush1.bf16.msra.mxu0 %v976
        %1004 = vmatprep.subr.bf16.mxu0 0
        %1005 = vmatpush1.bf16.msra.mxu0 %v975
        %1006 = vmatprep.subr.bf16.mxu0 0
        %1007 = vmatpush1.bf16.msra.mxu0 %v974
        %1008 = vmatprep.subr.bf16.mxu0 0
        %1009 = vmatpush1.bf16.msra.mxu0 %v973
        %1010 = vmatprep.subr.bf16.mxu0 0
        %1011 = vmatpush2.bf16.msra.mxu0 0
        %1012 = vmatprep.subr.bf16.mxu0 0
        %1013 = vmatpush2.bf16.msra.mxu0 0
        %1014 = vmatprep.subr.bf16.mxu0 0
        %1015 = vmatpush2.bf16.msra.mxu0 0
        %1016 = vmatprep.subr.bf16.mxu0 0
        %1017 = vmatpush2.bf16.msra.mxu0 0
        %1018 = vmatprep.subr.bf16.mxu0 0
        %1019 = vmatpush2.bf16.msra.mxu0 0
        %1020 = vmatprep.subr.bf16.mxu0 0
        %1021 = vmatpush2.bf16.msra.mxu0 0
        %1022 = vmatprep.subr.bf16.mxu0 0
        %1023 = vmatpush2.bf16.msra.mxu0 0
        %1024 = vmatprep.subr.bf16.mxu0 0
        %1025 = vmatpush2.bf16.msra.mxu0 %v981
        %1026 = vmatprep.mubr.bf16.mxu0 %v992
        %1027 = vmatmul.mubr.bf16.gmra.mxu0 %v934
        %v1028 = vpop.f32.mrf.mxu0
        %v1029 = vadd.f32 0.0, %v1028
        %v1030 = vpop.f32.mrf.mxu0
        %v1031 = vpop.f32.mrf.mxu0
        %v1032 = vadd.f32 0.0, %v1031
        %v1033 = vpop.f32.mrf.mxu0
        %1034 = vdwg.mxu0
        %1035 = vst.msk [vmem:[%s534 + $0x10] sm:$0xff] %vm784, %v1029
        %1036 = vst.msk [vmem:[%s534 + $0x18] sm:$0xff] %vm784, %v1032
        %v1037 = vsel %vm784, %v1029, 0.0
        %1038 = vadd.xlane.f32.xlu0 %v1037
        %v1039 = vpop.xlane.xlu0 %1038
        %v1040 = vsel %vm784, %v1032, 0.0
        %1041 = vadd.xlane.f32.xlu0 %v1040
        %v1042 = vpop.xlane.xlu0 %1041
        %v1043 = vmul.f32 %v1029, %v1029
        %v1044 = vmul.f32 %v1032, %v1032
        %v1045 = vsel %vm784, %v1043, 0.0
        %1046 = vadd.xlane.f32.xlu0 %v1045
        %v1047 = vpop.xlane.xlu0 %1046
        %v1048 = vsel %vm784, %v1044, 0.0
        %1049 = vadd.xlane.f32.xlu0 %v1048
        %v1050 = vpop.xlane.xlu0 %1049
        %v1051 = vld [vmem:[%s486 + $0x10] sm:$0xf]
        %v1052 = vld [vmem:[%s486 + $0x14] sm:$0xf]
        %v1055 = vunpack.c.l.b16 %v1051
        %v1056 = vunpack.c.l.b16 %v1052
        %v1057 = vpack.c.b16 %v1056, %v1055
        %1058 = vrot.lane.b32.xlu0 %v1057, 1
        %v1059 = vpop.permute.xlu0 %1058
        %v1061 = vsel %vm546, 0, %v1059
        %v1063 = vmul.bf16 %v1061, %v557
        %v1065 = vunpack.c.l.b16 %v1063
        %v1066 = vunpack.c.h.b16 %v1063
        %v1067 = vpack.c.b16 %v1065, %v1065
        %v1068 = vpack.c.b16 %v1066, %v1066
        %1071 = vst.msk [vmem:[#allocation2] sm:$0xf] %vm566, %v1067
        %1072 = vst.msk [vmem:[#allocation2 + $0x4] sm:$0xf] %vm566, %v1068
        %v1073 = vld [vmem:[%s569 + $0x10] sm:$0xf]
        %v1074 = vld [vmem:[%s569 + $0x14] sm:$0xf]
        %1075 = vst.msk [vmem:[#allocation2 + $0x8] sm:$0xf] %vm566, %v1073
        %1076 = vst.msk [vmem:[#allocation2 + $0xc] sm:$0xf] %vm566, %v1074
        %v1077 = vld [vmem:[%s486 + $0x10] sm:$0xf]
        %v1078 = vld [vmem:[%s486 + $0x14] sm:$0xf]
        %1079 = vst.msk [vmem:[#allocation2 + $0x10] sm:$0xf] %vm566, %v1077
        %1080 = vst.msk [vmem:[#allocation2 + $0x14] sm:$0xf] %vm566, %v1078
        %v1081 = vld [vmem:[%s578 + $0x10] sm:$0xf]
        %v1082 = vld [vmem:[%s578 + $0x14] sm:$0xf]
        %v1085 = vunpack.c.l.b16 %v1081
        %v1086 = vunpack.c.l.b16 %v1082
        %v1087 = vpack.c.b16 %v1086, %v1085
        %1088 = vrot.lane.b32.xlu0 %v1087, 1
        %v1089 = vpop.permute.xlu0 %1088
        %v1091 = vsel %vm546, 0, %v1089
        %v1093 = vmul.bf16 %v1091, %v557
        %v1095 = vunpack.c.l.b16 %v1093
        %v1096 = vunpack.c.h.b16 %v1093
        %v1097 = vpack.c.b16 %v1095, %v1095
        %v1098 = vpack.c.b16 %v1096, %v1096
        %1101 = vst.msk [vmem:[#allocation2 + $0x18] sm:$0xf] %vm566, %v1097
        %1102 = vst.msk [vmem:[#allocation2 + $0x1c] sm:$0xf] %vm566, %v1098
        %v1103 = vld [vmem:[%s601 + $0x10] sm:$0xf]
        %v1104 = vld [vmem:[%s601 + $0x14] sm:$0xf]
        %1105 = vst.msk [vmem:[#allocation2 + $0x20] sm:$0xf] %vm566, %v1103
        %1106 = vst.msk [vmem:[#allocation2 + $0x24] sm:$0xf] %vm566, %v1104
        %v1107 = vld [vmem:[%s578 + $0x10] sm:$0xf]
        %v1108 = vld [vmem:[%s578 + $0x14] sm:$0xf]
        %1109 = vst.msk [vmem:[#allocation2 + $0x28] sm:$0xf] %vm566, %v1107
        %1110 = vst.msk [vmem:[#allocation2 + $0x2c] sm:$0xf] %vm566, %v1108
        %v1111 = vld [vmem:[%s486 + $0x10] sm:$0xf]
        %v1112 = vld [vmem:[%s486 + $0x14] sm:$0xf]
        %v1115 = vunpack.c.l.b16 %v1111
        %v1116 = vunpack.c.l.b16 %v1112
        %v1117 = vpack.c.b16 %v1116, %v1115
        %1118 = vrot.lane.b32.xlu0 %v1117, 121
        %v1119 = vpop.permute.xlu0 %1118
        %v1121 = vsel %vm546, 0, %v1119
        %v1123 = vmul.bf16 %v1121, %v557
        %v1125 = vunpack.c.l.b16 %v1123
        %v1126 = vunpack.c.h.b16 %v1123
        %v1127 = vpack.c.b16 %v1125, %v1125
        %v1128 = vpack.c.b16 %v1126, %v1126
        %1131 = vst.msk [vmem:[#allocation2 + $0x30] sm:$0xf] %vm566, %v1127
        %1132 = vst.msk [vmem:[#allocation2 + $0x34] sm:$0xf] %vm566, %v1128
        %v1133 = vld [vmem:[%s569 + $0x10] sm:$0xf]
        %v1134 = vld [vmem:[%s569 + $0x14] sm:$0xf]
        %1137 = vrot.lane.b32.xlu0 %v1133, 120
        %v1138 = vpop.permute.xlu0 %1137
        %1139 = vrot.lane.b32.xlu0 %v1134, 120
        %v1140 = vpop.permute.xlu0 %1139
        %1143 = vst.msk [vmem:[#allocation2 + $0x38] sm:$0xf] %vm566, %v1138
        %1144 = vst.msk [vmem:[#allocation2 + $0x3c] sm:$0xf] %vm566, %v1140
        %v1145 = vld [vmem:[%s486 + $0x10] sm:$0xf]
        %v1146 = vld [vmem:[%s486 + $0x14] sm:$0xf]
        %1149 = vrot.lane.b32.xlu0 %v1145, 120
        %v1150 = vpop.permute.xlu0 %1149
        %1151 = vrot.lane.b32.xlu0 %v1146, 120
        %v1152 = vpop.permute.xlu0 %1151
        %1155 = vst.msk [vmem:[#allocation2 + $0x40] sm:$0xf] %vm566, %v1150
        %1156 = vst.msk [vmem:[#allocation2 + $0x44] sm:$0xf] %vm566, %v1152
        %s1157 = scalar_lea.vmem %s524, 32
        %v1158 = vld [vmem:[%s1157] sm:$0xff]
        %v1159 = vld [vmem:[%s1157 + $0x8] sm:$0xff]
        %v1160 = vld [vmem:[#allocation2] sm:$0xf]
        %v1161 = vld [vmem:[#allocation2 + $0x4] sm:$0xf]
        %v1162 = vld [vmem:[#allocation2 + $0x8] sm:$0xf]
        %v1163 = vld [vmem:[#allocation2 + $0xc] sm:$0xf]
        %v1164 = vld [vmem:[#allocation2 + $0x10] sm:$0xf]
        %v1165 = vld [vmem:[#allocation2 + $0x14] sm:$0xf]
        %v1166 = vld [vmem:[#allocation2 + $0x18] sm:$0xf]
        %v1167 = vld [vmem:[#allocation2 + $0x1c] sm:$0xf]
        %v1168 = vld [vmem:[#allocation2 + $0x20] sm:$0xf]
        %v1169 = vld [vmem:[#allocation2 + $0x24] sm:$0xf]
        %v1170 = vld [vmem:[#allocation2 + $0x28] sm:$0xf]
        %v1171 = vld [vmem:[#allocation2 + $0x2c] sm:$0xf]
        %v1172 = vld [vmem:[#allocation2 + $0x30] sm:$0xf]
        %v1173 = vld [vmem:[#allocation2 + $0x34] sm:$0xf]
        %v1174 = vld [vmem:[#allocation2 + $0x38] sm:$0xf]
        %v1175 = vld [vmem:[#allocation2 + $0x3c] sm:$0xf]
        %v1176 = vld [vmem:[#allocation2 + $0x40] sm:$0xf]
        %v1177 = vld [vmem:[#allocation2 + $0x44] sm:$0xf]
        %v1180 = vunpack.c.l.b16 %v1158
        %v1181 = vunpack.c.h.b16 %v1158
        %v1182 = vunpack.c.l.b16 %v1159
        %v1183 = vunpack.c.h.b16 %v1159
        %v1184 = vpack.c.b16 %v1182, %v1180
        %v1185 = vpack.c.b16 %v1183, %v1181
        %v1205 = vunpack.c.l.b16 %v1160
        %v1206 = vunpack.c.l.b16 %v1161
        %v1207 = vunpack.c.l.b16 %v1162
        %v1208 = vunpack.c.l.b16 %v1163
        %v1209 = vunpack.c.l.b16 %v1164
        %v1210 = vunpack.c.l.b16 %v1165
        %v1211 = vunpack.c.l.b16 %v1166
        %v1212 = vunpack.c.l.b16 %v1167
        %v1213 = vunpack.c.l.b16 %v1168
        %v1214 = vunpack.c.l.b16 %v1169
        %v1215 = vunpack.c.l.b16 %v1170
        %v1216 = vunpack.c.l.b16 %v1171
        %v1217 = vunpack.c.l.b16 %v1172
        %v1218 = vunpack.c.l.b16 %v1173
        %v1219 = vunpack.c.l.b16 %v1174
        %v1220 = vunpack.c.l.b16 %v1175
        %v1221 = vunpack.c.l.b16 %v1176
        %v1222 = vunpack.c.l.b16 %v1177
        %v1223 = vpack.c.b16 %v1206, %v1205
        %v1224 = vpack.c.b16 %v1208, %v1207
        %v1225 = vpack.c.b16 %v1210, %v1209
        %v1226 = vpack.c.b16 %v1212, %v1211
        %v1227 = vpack.c.b16 %v1214, %v1213
        %v1228 = vpack.c.b16 %v1216, %v1215
        %v1229 = vpack.c.b16 %v1218, %v1217
        %v1230 = vpack.c.b16 %v1220, %v1219
        %v1231 = vpack.c.b16 %v1222, %v1221
        %v1242 = vsel %vm739, %v1185, 0
        %1244 = vmatprep.subr.bf16.mxu0 0
        %1245 = vmatpush1.bf16.msra.mxu0 %v1230
        %1246 = vmatprep.subr.bf16.mxu0 0
        %1247 = vmatpush1.bf16.msra.mxu0 %v1229
        %1248 = vmatprep.subr.bf16.mxu0 0
        %1249 = vmatpush1.bf16.msra.mxu0 %v1228
        %1250 = vmatprep.subr.bf16.mxu0 0
        %1251 = vmatpush1.bf16.msra.mxu0 %v1227
        %1252 = vmatprep.subr.bf16.mxu0 0
        %1253 = vmatpush1.bf16.msra.mxu0 %v1226
        %1254 = vmatprep.subr.bf16.mxu0 0
        %1255 = vmatpush1.bf16.msra.mxu0 %v1225
        %1256 = vmatprep.subr.bf16.mxu0 0
        %1257 = vmatpush1.bf16.msra.mxu0 %v1224
        %1258 = vmatprep.subr.bf16.mxu0 0
        %1259 = vmatpush1.bf16.msra.mxu0 %v1223
        %1260 = vmatprep.subr.bf16.mxu0 0
        %1261 = vmatpush2.bf16.msra.mxu0 0
        %1262 = vmatprep.subr.bf16.mxu0 0
        %1263 = vmatpush2.bf16.msra.mxu0 0
        %1264 = vmatprep.subr.bf16.mxu0 0
        %1265 = vmatpush2.bf16.msra.mxu0 0
        %1266 = vmatprep.subr.bf16.mxu0 0
        %1267 = vmatpush2.bf16.msra.mxu0 0
        %1268 = vmatprep.subr.bf16.mxu0 0
        %1269 = vmatpush2.bf16.msra.mxu0 0
        %1270 = vmatprep.subr.bf16.mxu0 0
        %1271 = vmatpush2.bf16.msra.mxu0 0
        %1272 = vmatprep.subr.bf16.mxu0 0
        %1273 = vmatpush2.bf16.msra.mxu0 0
        %1274 = vmatprep.subr.bf16.mxu0 0
        %1275 = vmatpush2.bf16.msra.mxu0 %v1231
        %1276 = vmatprep.mubr.bf16.mxu0 %v1242
        %1277 = vmatmul.mubr.bf16.gmra.mxu0 %v1184
        %v1278 = vpop.f32.mrf.mxu0
        %v1279 = vadd.f32 0.0, %v1278
        %v1280 = vpop.f32.mrf.mxu0
        %v1281 = vpop.f32.mrf.mxu0
        %v1282 = vadd.f32 0.0, %v1281
        %v1283 = vpop.f32.mrf.mxu0
        %1284 = vdwg.mxu0
        %1285 = vst.msk [vmem:[%s534 + $0x20] sm:$0xff] %vm784, %v1279
        %1286 = vst.msk [vmem:[%s534 + $0x28] sm:$0xff] %vm784, %v1282
        %v1287 = vsel %vm784, %v1279, 0.0
        %1288 = vadd.xlane.f32.xlu0 %v1287
        %v1289 = vpop.xlane.xlu0 %1288
        %v1290 = vsel %vm784, %v1282, 0.0
        %1291 = vadd.xlane.f32.xlu0 %v1290
        %v1292 = vpop.xlane.xlu0 %1291
        %v1293 = vmul.f32 %v1279, %v1279
        %v1294 = vmul.f32 %v1282, %v1282
        %v1295 = vsel %vm784, %v1293, 0.0
        %1296 = vadd.xlane.f32.xlu0 %v1295
        %v1297 = vpop.xlane.xlu0 %1296
        %v1298 = vsel %vm784, %v1294, 0.0
        %1299 = vadd.xlane.f32.xlu0 %v1298
        %v1300 = vpop.xlane.xlu0 %1299
        %v1301 = vld [vmem:[%s486 + $0x18] sm:$0xf]
        %v1302 = vld [vmem:[%s486 + $0x1c] sm:$0xf]
        %v1305 = vunpack.c.l.b16 %v1301
        %v1306 = vunpack.c.l.b16 %v1302
        %v1307 = vpack.c.b16 %v1306, %v1305
        %1308 = vrot.lane.b32.xlu0 %v1307, 1
        %v1309 = vpop.permute.xlu0 %1308
        %v1311 = vsel %vm546, 0, %v1309
        %v1313 = vmul.bf16 %v1311, %v557
        %v1315 = vunpack.c.l.b16 %v1313
        %v1316 = vunpack.c.h.b16 %v1313
        %v1317 = vpack.c.b16 %v1315, %v1315
        %v1318 = vpack.c.b16 %v1316, %v1316
        %1321 = vst.msk [vmem:[#allocation2] sm:$0xf] %vm566, %v1317
        %1322 = vst.msk [vmem:[#allocation2 + $0x4] sm:$0xf] %vm566, %v1318
        %v1323 = vld [vmem:[%s569 + $0x18] sm:$0xf]
        %v1324 = vld [vmem:[%s569 + $0x1c] sm:$0xf]
        %1325 = vst.msk [vmem:[#allocation2 + $0x8] sm:$0xf] %vm566, %v1323
        %1326 = vst.msk [vmem:[#allocation2 + $0xc] sm:$0xf] %vm566, %v1324
        %v1327 = vld [vmem:[%s486 + $0x18] sm:$0xf]
        %v1328 = vld [vmem:[%s486 + $0x1c] sm:$0xf]
        %1329 = vst.msk [vmem:[#allocation2 + $0x10] sm:$0xf] %vm566, %v1327
        %1330 = vst.msk [vmem:[#allocation2 + $0x14] sm:$0xf] %vm566, %v1328
        %v1331 = vld [vmem:[%s578 + $0x18] sm:$0xf]
        %v1332 = vld [vmem:[%s578 + $0x1c] sm:$0xf]
        %v1335 = vunpack.c.l.b16 %v1331
        %v1336 = vunpack.c.l.b16 %v1332
        %v1337 = vpack.c.b16 %v1336, %v1335
        %1338 = vrot.lane.b32.xlu0 %v1337, 1
        %v1339 = vpop.permute.xlu0 %1338
        %v1341 = vsel %vm546, 0, %v1339
        %v1343 = vmul.bf16 %v1341, %v557
        %v1345 = vunpack.c.l.b16 %v1343
        %v1346 = vunpack.c.h.b16 %v1343
        %v1347 = vpack.c.b16 %v1345, %v1345
        %v1348 = vpack.c.b16 %v1346, %v1346
        %1351 = vst.msk [vmem:[#allocation2 + $0x18] sm:$0xf] %vm566, %v1347
        %1352 = vst.msk [vmem:[#allocation2 + $0x1c] sm:$0xf] %vm566, %v1348
        %v1353 = vld [vmem:[%s601 + $0x18] sm:$0xf]
        %v1354 = vld [vmem:[%s601 + $0x1c] sm:$0xf]
        %1355 = vst.msk [vmem:[#allocation2 + $0x20] sm:$0xf] %vm566, %v1353
        %1356 = vst.msk [vmem:[#allocation2 + $0x24] sm:$0xf] %vm566, %v1354
        %v1357 = vld [vmem:[%s578 + $0x18] sm:$0xf]
        %v1358 = vld [vmem:[%s578 + $0x1c] sm:$0xf]
        %1359 = vst.msk [vmem:[#allocation2 + $0x28] sm:$0xf] %vm566, %v1357
        %1360 = vst.msk [vmem:[#allocation2 + $0x2c] sm:$0xf] %vm566, %v1358
        %v1361 = vld [vmem:[%s486 + $0x18] sm:$0xf]
        %v1362 = vld [vmem:[%s486 + $0x1c] sm:$0xf]
        %v1365 = vunpack.c.l.b16 %v1361
        %v1366 = vunpack.c.l.b16 %v1362
        %v1367 = vpack.c.b16 %v1366, %v1365
        %1368 = vrot.lane.b32.xlu0 %v1367, 121
        %v1369 = vpop.permute.xlu0 %1368
        %v1371 = vsel %vm546, 0, %v1369
        %v1373 = vmul.bf16 %v1371, %v557
        %v1375 = vunpack.c.l.b16 %v1373
        %v1376 = vunpack.c.h.b16 %v1373
        %v1377 = vpack.c.b16 %v1375, %v1375
        %v1378 = vpack.c.b16 %v1376, %v1376
        %1381 = vst.msk [vmem:[#allocation2 + $0x30] sm:$0xf] %vm566, %v1377
        %1382 = vst.msk [vmem:[#allocation2 + $0x34] sm:$0xf] %vm566, %v1378
        %v1383 = vld [vmem:[%s569 + $0x18] sm:$0xf]
        %v1384 = vld [vmem:[%s569 + $0x1c] sm:$0xf]
        %1387 = vrot.lane.b32.xlu0 %v1383, 120
        %v1388 = vpop.permute.xlu0 %1387
        %1389 = vrot.lane.b32.xlu0 %v1384, 120
        %v1390 = vpop.permute.xlu0 %1389
        %1393 = vst.msk [vmem:[#allocation2 + $0x38] sm:$0xf] %vm566, %v1388
        %1394 = vst.msk [vmem:[#allocation2 + $0x3c] sm:$0xf] %vm566, %v1390
        %v1395 = vld [vmem:[%s486 + $0x18] sm:$0xf]
        %v1396 = vld [vmem:[%s486 + $0x1c] sm:$0xf]
        %1399 = vrot.lane.b32.xlu0 %v1395, 120
        %v1400 = vpop.permute.xlu0 %1399
        %1401 = vrot.lane.b32.xlu0 %v1396, 120
        %v1402 = vpop.permute.xlu0 %1401
        %1405 = vst.msk [vmem:[#allocation2 + $0x40] sm:$0xf] %vm566, %v1400
        %1406 = vst.msk [vmem:[#allocation2 + $0x44] sm:$0xf] %vm566, %v1402
        %s1407 = scalar_lea.vmem %s524, 48
        %v1408 = vld [vmem:[%s1407] sm:$0xff]
        %v1409 = vld [vmem:[%s1407 + $0x8] sm:$0xff]
        %v1410 = vld [vmem:[#allocation2] sm:$0xf]
        %v1411 = vld [vmem:[#allocation2 + $0x4] sm:$0xf]
        %v1412 = vld [vmem:[#allocation2 + $0x8] sm:$0xf]
        %v1413 = vld [vmem:[#allocation2 + $0xc] sm:$0xf]
        %v1414 = vld [vmem:[#allocation2 + $0x10] sm:$0xf]
        %v1415 = vld [vmem:[#allocation2 + $0x14] sm:$0xf]
        %v1416 = vld [vmem:[#allocation2 + $0x18] sm:$0xf]
        %v1417 = vld [vmem:[#allocation2 + $0x1c] sm:$0xf]
        %v1418 = vld [vmem:[#allocation2 + $0x20] sm:$0xf]
        %v1419 = vld [vmem:[#allocation2 + $0x24] sm:$0xf]
        %v1420 = vld [vmem:[#allocation2 + $0x28] sm:$0xf]
        %v1421 = vld [vmem:[#allocation2 + $0x2c] sm:$0xf]
        %v1422 = vld [vmem:[#allocation2 + $0x30] sm:$0xf]
        %v1423 = vld [vmem:[#allocation2 + $0x34] sm:$0xf]
        %v1424 = vld [vmem:[#allocation2 + $0x38] sm:$0xf]
        %v1425 = vld [vmem:[#allocation2 + $0x3c] sm:$0xf]
        %v1426 = vld [vmem:[#allocation2 + $0x40] sm:$0xf]
        %v1427 = vld [vmem:[#allocation2 + $0x44] sm:$0xf]
        %v1430 = vunpack.c.l.b16 %v1408
        %v1431 = vunpack.c.h.b16 %v1408
        %v1432 = vunpack.c.l.b16 %v1409
        %v1433 = vunpack.c.h.b16 %v1409
        %v1434 = vpack.c.b16 %v1432, %v1430
        %v1435 = vpack.c.b16 %v1433, %v1431
        %v1455 = vunpack.c.l.b16 %v1410
        %v1456 = vunpack.c.l.b16 %v1411
        %v1457 = vunpack.c.l.b16 %v1412
        %v1458 = vunpack.c.l.b16 %v1413
        %v1459 = vunpack.c.l.b16 %v1414
        %v1460 = vunpack.c.l.b16 %v1415
        %v1461 = vunpack.c.l.b16 %v1416
        %v1462 = vunpack.c.l.b16 %v1417
        %v1463 = vunpack.c.l.b16 %v1418
        %v1464 = vunpack.c.l.b16 %v1419
        %v1465 = vunpack.c.l.b16 %v1420
        %v1466 = vunpack.c.l.b16 %v1421
        %v1467 = vunpack.c.l.b16 %v1422
        %v1468 = vunpack.c.l.b16 %v1423
        %v1469 = vunpack.c.l.b16 %v1424
        %v1470 = vunpack.c.l.b16 %v1425
        %v1471 = vunpack.c.l.b16 %v1426
        %v1472 = vunpack.c.l.b16 %v1427
        %v1473 = vpack.c.b16 %v1456, %v1455
        %v1474 = vpack.c.b16 %v1458, %v1457
        %v1475 = vpack.c.b16 %v1460, %v1459
        %v1476 = vpack.c.b16 %v1462, %v1461
        %v1477 = vpack.c.b16 %v1464, %v1463
        %v1478 = vpack.c.b16 %v1466, %v1465
        %v1479 = vpack.c.b16 %v1468, %v1467
        %v1480 = vpack.c.b16 %v1470, %v1469
        %v1481 = vpack.c.b16 %v1472, %v1471
        %v1492 = vsel %vm739, %v1435, 0
        %1494 = vmatprep.subr.bf16.mxu0 0
        %1495 = vmatpush1.bf16.msra.mxu0 %v1480
        %1496 = vmatprep.subr.bf16.mxu0 0
        %1497 = vmatpush1.bf16.msra.mxu0 %v1479
        %1498 = vmatprep.subr.bf16.mxu0 0
        %1499 = vmatpush1.bf16.msra.mxu0 %v1478
        %1500 = vmatprep.subr.bf16.mxu0 0
        %1501 = vmatpush1.bf16.msra.mxu0 %v1477
        %1502 = vmatprep.subr.bf16.mxu0 0
        %1503 = vmatpush1.bf16.msra.mxu0 %v1476
        %1504 = vmatprep.subr.bf16.mxu0 0
        %1505 = vmatpush1.bf16.msra.mxu0 %v1475
        %1506 = vmatprep.subr.bf16.mxu0 0
        %1507 = vmatpush1.bf16.msra.mxu0 %v1474
        %1508 = vmatprep.subr.bf16.mxu0 0
        %1509 = vmatpush1.bf16.msra.mxu0 %v1473
        %1510 = vmatprep.subr.bf16.mxu0 0
        %1511 = vmatpush2.bf16.msra.mxu0 0
        %1512 = vmatprep.subr.bf16.mxu0 0
        %1513 = vmatpush2.bf16.msra.mxu0 0
        %1514 = vmatprep.subr.bf16.mxu0 0
        %1515 = vmatpush2.bf16.msra.mxu0 0
        %1516 = vmatprep.subr.bf16.mxu0 0
        %1517 = vmatpush2.bf16.msra.mxu0 0
        %1518 = vmatprep.subr.bf16.mxu0 0
        %1519 = vmatpush2.bf16.msra.mxu0 0
        %1520 = vmatprep.subr.bf16.mxu0 0
        %1521 = vmatpush2.bf16.msra.mxu0 0
        %1522 = vmatprep.subr.bf16.mxu0 0
        %1523 = vmatpush2.bf16.msra.mxu0 0
        %1524 = vmatprep.subr.bf16.mxu0 0
        %1525 = vmatpush2.bf16.msra.mxu0 %v1481
        %1526 = vmatprep.mubr.bf16.mxu0 %v1492
        %1527 = vmatmul.mubr.bf16.gmra.mxu0 %v1434
        %v1528 = vpop.f32.mrf.mxu0
        %v1529 = vadd.f32 0.0, %v1528
        %v1530 = vpop.f32.mrf.mxu0
        %v1531 = vpop.f32.mrf.mxu0
        %v1532 = vadd.f32 0.0, %v1531
        %v1533 = vpop.f32.mrf.mxu0
        %1534 = vdwg.mxu0
        %1535 = vst.msk [vmem:[%s534 + $0x30] sm:$0xff] %vm784, %v1529
        %1536 = vst.msk [vmem:[%s534 + $0x38] sm:$0xff] %vm784, %v1532
        %v1537 = vsel %vm784, %v1529, 0.0
        %1538 = vadd.xlane.f32.xlu0 %v1537
        %v1539 = vpop.xlane.xlu0 %1538
        %v1540 = vsel %vm784, %v1532, 0.0
        %1541 = vadd.xlane.f32.xlu0 %v1540
        %v1542 = vpop.xlane.xlu0 %1541
        %v1543 = vmul.f32 %v1529, %v1529
        %v1544 = vmul.f32 %v1532, %v1532
        %v1545 = vsel %vm784, %v1543, 0.0
        %1546 = vadd.xlane.f32.xlu0 %v1545
        %v1547 = vpop.xlane.xlu0 %1546
        %v1548 = vsel %vm784, %v1544, 0.0
        %1549 = vadd.xlane.f32.xlu0 %v1548
        %v1550 = vpop.xlane.xlu0 %1549
        %v1551 = vld [vmem:[%s486 + $0x20] sm:$0xf]
        %v1552 = vld [vmem:[%s486 + $0x24] sm:$0xf]
        %v1555 = vunpack.c.l.b16 %v1551
        %v1556 = vunpack.c.l.b16 %v1552
        %v1557 = vpack.c.b16 %v1556, %v1555
        %1558 = vrot.lane.b32.xlu0 %v1557, 1
        %v1559 = vpop.permute.xlu0 %1558
        %v1561 = vsel %vm546, 0, %v1559
        %v1563 = vmul.bf16 %v1561, %v557
        %v1565 = vunpack.c.l.b16 %v1563
        %v1566 = vunpack.c.h.b16 %v1563
        %v1567 = vpack.c.b16 %v1565, %v1565
        %v1568 = vpack.c.b16 %v1566, %v1566
        %1571 = vst.msk [vmem:[#allocation2] sm:$0xf] %vm566, %v1567
        %1572 = vst.msk [vmem:[#allocation2 + $0x4] sm:$0xf] %vm566, %v1568
        %v1573 = vld [vmem:[%s569 + $0x20] sm:$0xf]
        %v1574 = vld [vmem:[%s569 + $0x24] sm:$0xf]
        %1575 = vst.msk [vmem:[#allocation2 + $0x8] sm:$0xf] %vm566, %v1573
        %1576 = vst.msk [vmem:[#allocation2 + $0xc] sm:$0xf] %vm566, %v1574
        %v1577 = vld [vmem:[%s486 + $0x20] sm:$0xf]
        %v1578 = vld [vmem:[%s486 + $0x24] sm:$0xf]
        %1579 = vst.msk [vmem:[#allocation2 + $0x10] sm:$0xf] %vm566, %v1577
        %1580 = vst.msk [vmem:[#allocation2 + $0x14] sm:$0xf] %vm566, %v1578
        %v1581 = vld [vmem:[%s578 + $0x20] sm:$0xf]
        %v1582 = vld [vmem:[%s578 + $0x24] sm:$0xf]
        %v1585 = vunpack.c.l.b16 %v1581
        %v1586 = vunpack.c.l.b16 %v1582
        %v1587 = vpack.c.b16 %v1586, %v1585
        %1588 = vrot.lane.b32.xlu0 %v1587, 1
        %v1589 = vpop.permute.xlu0 %1588
        %v1591 = vsel %vm546, 0, %v1589
        %v1593 = vmul.bf16 %v1591, %v557
        %v1595 = vunpack.c.l.b16 %v1593
        %v1596 = vunpack.c.h.b16 %v1593
        %v1597 = vpack.c.b16 %v1595, %v1595
        %v1598 = vpack.c.b16 %v1596, %v1596
        %1601 = vst.msk [vmem:[#allocation2 + $0x18] sm:$0xf] %vm566, %v1597
        %1602 = vst.msk [vmem:[#allocation2 + $0x1c] sm:$0xf] %vm566, %v1598
        %v1603 = vld [vmem:[%s601 + $0x20] sm:$0xf]
        %v1604 = vld [vmem:[%s601 + $0x24] sm:$0xf]
        %1605 = vst.msk [vmem:[#allocation2 + $0x20] sm:$0xf] %vm566, %v1603
        %1606 = vst.msk [vmem:[#allocation2 + $0x24] sm:$0xf] %vm566, %v1604
        %v1607 = vld [vmem:[%s578 + $0x20] sm:$0xf]
        %v1608 = vld [vmem:[%s578 + $0x24] sm:$0xf]
        %1609 = vst.msk [vmem:[#allocation2 + $0x28] sm:$0xf] %vm566, %v1607
        %1610 = vst.msk [vmem:[#allocation2 + $0x2c] sm:$0xf] %vm566, %v1608
        %v1611 = vld [vmem:[%s486 + $0x20] sm:$0xf]
        %v1612 = vld [vmem:[%s486 + $0x24] sm:$0xf]
        %v1615 = vunpack.c.l.b16 %v1611
        %v1616 = vunpack.c.l.b16 %v1612
        %v1617 = vpack.c.b16 %v1616, %v1615
        %1618 = vrot.lane.b32.xlu0 %v1617, 121
        %v1619 = vpop.permute.xlu0 %1618
        %v1621 = vsel %vm546, 0, %v1619
        %v1623 = vmul.bf16 %v1621, %v557
        %v1625 = vunpack.c.l.b16 %v1623
        %v1626 = vunpack.c.h.b16 %v1623
        %v1627 = vpack.c.b16 %v1625, %v1625
        %v1628 = vpack.c.b16 %v1626, %v1626
        %1631 = vst.msk [vmem:[#allocation2 + $0x30] sm:$0xf] %vm566, %v1627
        %1632 = vst.msk [vmem:[#allocation2 + $0x34] sm:$0xf] %vm566, %v1628
        %v1633 = vld [vmem:[%s569 + $0x20] sm:$0xf]
        %v1634 = vld [vmem:[%s569 + $0x24] sm:$0xf]
        %1637 = vrot.lane.b32.xlu0 %v1633, 120
        %v1638 = vpop.permute.xlu0 %1637
        %1639 = vrot.lane.b32.xlu0 %v1634, 120
        %v1640 = vpop.permute.xlu0 %1639
        %1643 = vst.msk [vmem:[#allocation2 + $0x38] sm:$0xf] %vm566, %v1638
        %1644 = vst.msk [vmem:[#allocation2 + $0x3c] sm:$0xf] %vm566, %v1640
        %v1645 = vld [vmem:[%s486 + $0x20] sm:$0xf]
        %v1646 = vld [vmem:[%s486 + $0x24] sm:$0xf]
        %1649 = vrot.lane.b32.xlu0 %v1645, 120
        %v1650 = vpop.permute.xlu0 %1649
        %1651 = vrot.lane.b32.xlu0 %v1646, 120
        %v1652 = vpop.permute.xlu0 %1651
        %1655 = vst.msk [vmem:[#allocation2 + $0x40] sm:$0xf] %vm566, %v1650
        %1656 = vst.msk [vmem:[#allocation2 + $0x44] sm:$0xf] %vm566, %v1652
        %s1657 = scalar_lea.vmem %s524, 64
        %v1658 = vld [vmem:[%s1657] sm:$0xff]
        %v1659 = vld [vmem:[%s1657 + $0x8] sm:$0xff]
        %v1660 = vld [vmem:[#allocation2] sm:$0xf]
        %v1661 = vld [vmem:[#allocation2 + $0x4] sm:$0xf]
        %v1662 = vld [vmem:[#allocation2 + $0x8] sm:$0xf]
        %v1663 = vld [vmem:[#allocation2 + $0xc] sm:$0xf]
        %v1664 = vld [vmem:[#allocation2 + $0x10] sm:$0xf]
        %v1665 = vld [vmem:[#allocation2 + $0x14] sm:$0xf]
        %v1666 = vld [vmem:[#allocation2 + $0x18] sm:$0xf]
        %v1667 = vld [vmem:[#allocation2 + $0x1c] sm:$0xf]
        %v1668 = vld [vmem:[#allocation2 + $0x20] sm:$0xf]
        %v1669 = vld [vmem:[#allocation2 + $0x24] sm:$0xf]
        %v1670 = vld [vmem:[#allocation2 + $0x28] sm:$0xf]
        %v1671 = vld [vmem:[#allocation2 + $0x2c] sm:$0xf]
        %v1672 = vld [vmem:[#allocation2 + $0x30] sm:$0xf]
        %v1673 = vld [vmem:[#allocation2 + $0x34] sm:$0xf]
        %v1674 = vld [vmem:[#allocation2 + $0x38] sm:$0xf]
        %v1675 = vld [vmem:[#allocation2 + $0x3c] sm:$0xf]
        %v1676 = vld [vmem:[#allocation2 + $0x40] sm:$0xf]
        %v1677 = vld [vmem:[#allocation2 + $0x44] sm:$0xf]
        %v1680 = vunpack.c.l.b16 %v1658
        %v1681 = vunpack.c.h.b16 %v1658
        %v1682 = vunpack.c.l.b16 %v1659
        %v1683 = vunpack.c.h.b16 %v1659
        %v1684 = vpack.c.b16 %v1682, %v1680
        %v1685 = vpack.c.b16 %v1683, %v1681
        %v1705 = vunpack.c.l.b16 %v1660
        %v1706 = vunpack.c.l.b16 %v1661
        %v1707 = vunpack.c.l.b16 %v1662
        %v1708 = vunpack.c.l.b16 %v1663
        %v1709 = vunpack.c.l.b16 %v1664
        %v1710 = vunpack.c.l.b16 %v1665
        %v1711 = vunpack.c.l.b16 %v1666
        %v1712 = vunpack.c.l.b16 %v1667
        %v1713 = vunpack.c.l.b16 %v1668
        %v1714 = vunpack.c.l.b16 %v1669
        %v1715 = vunpack.c.l.b16 %v1670
        %v1716 = vunpack.c.l.b16 %v1671
        %v1717 = vunpack.c.l.b16 %v1672
        %v1718 = vunpack.c.l.b16 %v1673
        %v1719 = vunpack.c.l.b16 %v1674
        %v1720 = vunpack.c.l.b16 %v1675
        %v1721 = vunpack.c.l.b16 %v1676
        %v1722 = vunpack.c.l.b16 %v1677
        %v1723 = vpack.c.b16 %v1706, %v1705
        %v1724 = vpack.c.b16 %v1708, %v1707
        %v1725 = vpack.c.b16 %v1710, %v1709
        %v1726 = vpack.c.b16 %v1712, %v1711
        %v1727 = vpack.c.b16 %v1714, %v1713
        %v1728 = vpack.c.b16 %v1716, %v1715
        %v1729 = vpack.c.b16 %v1718, %v1717
        %v1730 = vpack.c.b16 %v1720, %v1719
        %v1731 = vpack.c.b16 %v1722, %v1721
        %v1742 = vsel %vm739, %v1685, 0
        %1744 = vmatprep.subr.bf16.mxu0 0
        %1745 = vmatpush1.bf16.msra.mxu0 %v1730
        %1746 = vmatprep.subr.bf16.mxu0 0
        %1747 = vmatpush1.bf16.msra.mxu0 %v1729
        %1748 = vmatprep.subr.bf16.mxu0 0
        %1749 = vmatpush1.bf16.msra.mxu0 %v1728
        %1750 = vmatprep.subr.bf16.mxu0 0
        %1751 = vmatpush1.bf16.msra.mxu0 %v1727
        %1752 = vmatprep.subr.bf16.mxu0 0
        %1753 = vmatpush1.bf16.msra.mxu0 %v1726
        %1754 = vmatprep.subr.bf16.mxu0 0
        %1755 = vmatpush1.bf16.msra.mxu0 %v1725
        %1756 = vmatprep.subr.bf16.mxu0 0
        %1757 = vmatpush1.bf16.msra.mxu0 %v1724
        %1758 = vmatprep.subr.bf16.mxu0 0
        %1759 = vmatpush1.bf16.msra.mxu0 %v1723
        %1760 = vmatprep.subr.bf16.mxu0 0
        %1761 = vmatpush2.bf16.msra.mxu0 0
        %1762 = vmatprep.subr.bf16.mxu0 0
        %1763 = vmatpush2.bf16.msra.mxu0 0
        %1764 = vmatprep.subr.bf16.mxu0 0
        %1765 = vmatpush2.bf16.msra.mxu0 0
        %1766 = vmatprep.subr.bf16.mxu0 0
        %1767 = vmatpush2.bf16.msra.mxu0 0
        %1768 = vmatprep.subr.bf16.mxu0 0
        %1769 = vmatpush2.bf16.msra.mxu0 0
        %1770 = vmatprep.subr.bf16.mxu0 0
        %1771 = vmatpush2.bf16.msra.mxu0 0
        %1772 = vmatprep.subr.bf16.mxu0 0
        %1773 = vmatpush2.bf16.msra.mxu0 0
        %1774 = vmatprep.subr.bf16.mxu0 0
        %1775 = vmatpush2.bf16.msra.mxu0 %v1731
        %1776 = vmatprep.mubr.bf16.mxu0 %v1742
        %1777 = vmatmul.mubr.bf16.gmra.mxu0 %v1684
        %v1778 = vpop.f32.mrf.mxu0
        %v1779 = vadd.f32 0.0, %v1778
        %v1780 = vpop.f32.mrf.mxu0
        %v1781 = vpop.f32.mrf.mxu0
        %v1782 = vadd.f32 0.0, %v1781
        %v1783 = vpop.f32.mrf.mxu0
        %1784 = vdwg.mxu0
        %1785 = vst.msk [vmem:[%s534 + $0x40] sm:$0xff] %vm784, %v1779
        %1786 = vst.msk [vmem:[%s534 + $0x48] sm:$0xff] %vm784, %v1782
        %v1787 = vsel %vm784, %v1779, 0.0
        %1788 = vadd.xlane.f32.xlu0 %v1787
        %v1789 = vpop.xlane.xlu0 %1788
        %v1790 = vsel %vm784, %v1782, 0.0
        %1791 = vadd.xlane.f32.xlu0 %v1790
        %v1792 = vpop.xlane.xlu0 %1791
        %v1793 = vmul.f32 %v1779, %v1779
        %v1794 = vmul.f32 %v1782, %v1782
        %v1795 = vsel %vm784, %v1793, 0.0
        %1796 = vadd.xlane.f32.xlu0 %v1795
        %v1797 = vpop.xlane.xlu0 %1796
        %v1798 = vsel %vm784, %v1794, 0.0
        %1799 = vadd.xlane.f32.xlu0 %v1798
        %v1800 = vpop.xlane.xlu0 %1799
        %v1801 = vld [vmem:[%s486 + $0x28] sm:$0xf]
        %v1802 = vld [vmem:[%s486 + $0x2c] sm:$0xf]
        %v1805 = vunpack.c.l.b16 %v1801
        %v1806 = vunpack.c.l.b16 %v1802
        %v1807 = vpack.c.b16 %v1806, %v1805
        %1808 = vrot.lane.b32.xlu0 %v1807, 1
        %v1809 = vpop.permute.xlu0 %1808
        %v1811 = vsel %vm546, 0, %v1809
        %v1813 = vmul.bf16 %v1811, %v557
        %v1815 = vunpack.c.l.b16 %v1813
        %v1816 = vunpack.c.h.b16 %v1813
        %v1817 = vpack.c.b16 %v1815, %v1815
        %v1818 = vpack.c.b16 %v1816, %v1816
        %1821 = vst.msk [vmem:[#allocation2] sm:$0xf] %vm566, %v1817
        %1822 = vst.msk [vmem:[#allocation2 + $0x4] sm:$0xf] %vm566, %v1818
        %v1823 = vld [vmem:[%s569 + $0x28] sm:$0xf]
        %v1824 = vld [vmem:[%s569 + $0x2c] sm:$0xf]
        %1825 = vst.msk [vmem:[#allocation2 + $0x8] sm:$0xf] %vm566, %v1823
        %1826 = vst.msk [vmem:[#allocation2 + $0xc] sm:$0xf] %vm566, %v1824
        %v1827 = vld [vmem:[%s486 + $0x28] sm:$0xf]
        %v1828 = vld [vmem:[%s486 + $0x2c] sm:$0xf]
        %1829 = vst.msk [vmem:[#allocation2 + $0x10] sm:$0xf] %vm566, %v1827
        %1830 = vst.msk [vmem:[#allocation2 + $0x14] sm:$0xf] %vm566, %v1828
        %v1831 = vld [vmem:[%s578 + $0x28] sm:$0xf]
        %v1832 = vld [vmem:[%s578 + $0x2c] sm:$0xf]
        %v1835 = vunpack.c.l.b16 %v1831
        %v1836 = vunpack.c.l.b16 %v1832
        %v1837 = vpack.c.b16 %v1836, %v1835
        %1838 = vrot.lane.b32.xlu0 %v1837, 1
        %v1839 = vpop.permute.xlu0 %1838
        %v1841 = vsel %vm546, 0, %v1839
        %v1843 = vmul.bf16 %v1841, %v557
        %v1845 = vunpack.c.l.b16 %v1843
        %v1846 = vunpack.c.h.b16 %v1843
        %v1847 = vpack.c.b16 %v1845, %v1845
        %v1848 = vpack.c.b16 %v1846, %v1846
        %1851 = vst.msk [vmem:[#allocation2 + $0x18] sm:$0xf] %vm566, %v1847
        %1852 = vst.msk [vmem:[#allocation2 + $0x1c] sm:$0xf] %vm566, %v1848
        %v1853 = vld [vmem:[%s601 + $0x28] sm:$0xf]
        %v1854 = vld [vmem:[%s601 + $0x2c] sm:$0xf]
        %1855 = vst.msk [vmem:[#allocation2 + $0x20] sm:$0xf] %vm566, %v1853
        %1856 = vst.msk [vmem:[#allocation2 + $0x24] sm:$0xf] %vm566, %v1854
        %v1857 = vld [vmem:[%s578 + $0x28] sm:$0xf]
        %v1858 = vld [vmem:[%s578 + $0x2c] sm:$0xf]
        %1859 = vst.msk [vmem:[#allocation2 + $0x28] sm:$0xf] %vm566, %v1857
        %1860 = vst.msk [vmem:[#allocation2 + $0x2c] sm:$0xf] %vm566, %v1858
        %v1861 = vld [vmem:[%s486 + $0x28] sm:$0xf]
        %v1862 = vld [vmem:[%s486 + $0x2c] sm:$0xf]
        %v1865 = vunpack.c.l.b16 %v1861
        %v1866 = vunpack.c.l.b16 %v1862
        %v1867 = vpack.c.b16 %v1866, %v1865
        %1868 = vrot.lane.b32.xlu0 %v1867, 121
        %v1869 = vpop.permute.xlu0 %1868
        %v1871 = vsel %vm546, 0, %v1869
        %v1873 = vmul.bf16 %v1871, %v557
        %v1875 = vunpack.c.l.b16 %v1873
        %v1876 = vunpack.c.h.b16 %v1873
        %v1877 = vpack.c.b16 %v1875, %v1875
        %v1878 = vpack.c.b16 %v1876, %v1876
        %1881 = vst.msk [vmem:[#allocation2 + $0x30] sm:$0xf] %vm566, %v1877
        %1882 = vst.msk [vmem:[#allocation2 + $0x34] sm:$0xf] %vm566, %v1878
        %v1883 = vld [vmem:[%s569 + $0x28] sm:$0xf]
        %v1884 = vld [vmem:[%s569 + $0x2c] sm:$0xf]
        %1887 = vrot.lane.b32.xlu0 %v1883, 120
        %v1888 = vpop.permute.xlu0 %1887
        %1889 = vrot.lane.b32.xlu0 %v1884, 120
        %v1890 = vpop.permute.xlu0 %1889
        %1893 = vst.msk [vmem:[#allocation2 + $0x38] sm:$0xf] %vm566, %v1888
        %1894 = vst.msk [vmem:[#allocation2 + $0x3c] sm:$0xf] %vm566, %v1890
        %v1895 = vld [vmem:[%s486 + $0x28] sm:$0xf]
        %v1896 = vld [vmem:[%s486 + $0x2c] sm:$0xf]
        %1899 = vrot.lane.b32.xlu0 %v1895, 120
        %v1900 = vpop.permute.xlu0 %1899
        %1901 = vrot.lane.b32.xlu0 %v1896, 120
        %v1902 = vpop.permute.xlu0 %1901
        %1905 = vst.msk [vmem:[#allocation2 + $0x40] sm:$0xf] %vm566, %v1900
        %1906 = vst.msk [vmem:[#allocation2 + $0x44] sm:$0xf] %vm566, %v1902
        %s1907 = scalar_lea.vmem %s524, 80
        %v1908 = vld [vmem:[%s1907] sm:$0xff]
        %v1909 = vld [vmem:[%s1907 + $0x8] sm:$0xff]
        %v1910 = vld [vmem:[#allocation2] sm:$0xf]
        %v1911 = vld [vmem:[#allocation2 + $0x4] sm:$0xf]
        %v1912 = vld [vmem:[#allocation2 + $0x8] sm:$0xf]
        %v1913 = vld [vmem:[#allocation2 + $0xc] sm:$0xf]
        %v1914 = vld [vmem:[#allocation2 + $0x10] sm:$0xf]
        %v1915 = vld [vmem:[#allocation2 + $0x14] sm:$0xf]
        %v1916 = vld [vmem:[#allocation2 + $0x18] sm:$0xf]
        %v1917 = vld [vmem:[#allocation2 + $0x1c] sm:$0xf]
        %v1918 = vld [vmem:[#allocation2 + $0x20] sm:$0xf]
        %v1919 = vld [vmem:[#allocation2 + $0x24] sm:$0xf]
        %v1920 = vld [vmem:[#allocation2 + $0x28] sm:$0xf]
        %v1921 = vld [vmem:[#allocation2 + $0x2c] sm:$0xf]
        %v1922 = vld [vmem:[#allocation2 + $0x30] sm:$0xf]
        %v1923 = vld [vmem:[#allocation2 + $0x34] sm:$0xf]
        %v1924 = vld [vmem:[#allocation2 + $0x38] sm:$0xf]
        %v1925 = vld [vmem:[#allocation2 + $0x3c] sm:$0xf]
        %v1926 = vld [vmem:[#allocation2 + $0x40] sm:$0xf]
        %v1927 = vld [vmem:[#allocation2 + $0x44] sm:$0xf]
        %v1930 = vunpack.c.l.b16 %v1908
        %v1931 = vunpack.c.h.b16 %v1908
        %v1932 = vunpack.c.l.b16 %v1909
        %v1933 = vunpack.c.h.b16 %v1909
        %v1934 = vpack.c.b16 %v1932, %v1930
        %v1935 = vpack.c.b16 %v1933, %v1931
        %v1955 = vunpack.c.l.b16 %v1910
        %v1956 = vunpack.c.l.b16 %v1911
        %v1957 = vunpack.c.l.b16 %v1912
        %v1958 = vunpack.c.l.b16 %v1913
        %v1959 = vunpack.c.l.b16 %v1914
        %v1960 = vunpack.c.l.b16 %v1915
        %v1961 = vunpack.c.l.b16 %v1916
        %v1962 = vunpack.c.l.b16 %v1917
        %v1963 = vunpack.c.l.b16 %v1918
        %v1964 = vunpack.c.l.b16 %v1919
        %v1965 = vunpack.c.l.b16 %v1920
        %v1966 = vunpack.c.l.b16 %v1921
        %v1967 = vunpack.c.l.b16 %v1922
        %v1968 = vunpack.c.l.b16 %v1923
        %v1969 = vunpack.c.l.b16 %v1924
        %v1970 = vunpack.c.l.b16 %v1925
        %v1971 = vunpack.c.l.b16 %v1926
        %v1972 = vunpack.c.l.b16 %v1927
        %v1973 = vpack.c.b16 %v1956, %v1955
        %v1974 = vpack.c.b16 %v1958, %v1957
        %v1975 = vpack.c.b16 %v1960, %v1959
        %v1976 = vpack.c.b16 %v1962, %v1961
        %v1977 = vpack.c.b16 %v1964, %v1963
        %v1978 = vpack.c.b16 %v1966, %v1965
        %v1979 = vpack.c.b16 %v1968, %v1967
        %v1980 = vpack.c.b16 %v1970, %v1969
        %v1981 = vpack.c.b16 %v1972, %v1971
        %v1992 = vsel %vm739, %v1935, 0
        %1994 = vmatprep.subr.bf16.mxu0 0
        %1995 = vmatpush1.bf16.msra.mxu0 %v1980
        %1996 = vmatprep.subr.bf16.mxu0 0
        %1997 = vmatpush1.bf16.msra.mxu0 %v1979
        %1998 = vmatprep.subr.bf16.mxu0 0
        %1999 = vmatpush1.bf16.msra.mxu0 %v1978
        %2000 = vmatprep.subr.bf16.mxu0 0
        %2001 = vmatpush1.bf16.msra.mxu0 %v1977
        %2002 = vmatprep.subr.bf16.mxu0 0
        %2003 = vmatpush1.bf16.msra.mxu0 %v1976
        %2004 = vmatprep.subr.bf16.mxu0 0
        %2005 = vmatpush1.bf16.msra.mxu0 %v1975
        %2006 = vmatprep.subr.bf16.mxu0 0
        %2007 = vmatpush1.bf16.msra.mxu0 %v1974
        %2008 = vmatprep.subr.bf16.mxu0 0
        %2009 = vmatpush1.bf16.msra.mxu0 %v1973
        %2010 = vmatprep.subr.bf16.mxu0 0
        %2011 = vmatpush2.bf16.msra.mxu0 0
        %2012 = vmatprep.subr.bf16.mxu0 0
        %2013 = vmatpush2.bf16.msra.mxu0 0
        %2014 = vmatprep.subr.bf16.mxu0 0
        %2015 = vmatpush2.bf16.msra.mxu0 0
        %2016 = vmatprep.subr.bf16.mxu0 0
        %2017 = vmatpush2.bf16.msra.mxu0 0
        %2018 = vmatprep.subr.bf16.mxu0 0
        %2019 = vmatpush2.bf16.msra.mxu0 0
        %2020 = vmatprep.subr.bf16.mxu0 0
        %2021 = vmatpush2.bf16.msra.mxu0 0
        %2022 = vmatprep.subr.bf16.mxu0 0
        %2023 = vmatpush2.bf16.msra.mxu0 0
        %2024 = vmatprep.subr.bf16.mxu0 0
        %2025 = vmatpush2.bf16.msra.mxu0 %v1981
        %2026 = vmatprep.mubr.bf16.mxu0 %v1992
        %2027 = vmatmul.mubr.bf16.gmra.mxu0 %v1934
        %v2028 = vpop.f32.mrf.mxu0
        %v2029 = vadd.f32 0.0, %v2028
        %v2030 = vpop.f32.mrf.mxu0
        %v2031 = vpop.f32.mrf.mxu0
        %v2032 = vadd.f32 0.0, %v2031
        %v2033 = vpop.f32.mrf.mxu0
        %2034 = vdwg.mxu0
        %2035 = vst.msk [vmem:[%s534 + $0x50] sm:$0xff] %vm784, %v2029
        %2036 = vst.msk [vmem:[%s534 + $0x58] sm:$0xff] %vm784, %v2032
        %v2037 = vsel %vm784, %v2029, 0.0
        %2038 = vadd.xlane.f32.xlu0 %v2037
        %v2039 = vpop.xlane.xlu0 %2038
        %v2040 = vsel %vm784, %v2032, 0.0
        %2041 = vadd.xlane.f32.xlu0 %v2040
        %v2042 = vpop.xlane.xlu0 %2041
        %v2043 = vmul.f32 %v2029, %v2029
        %v2044 = vmul.f32 %v2032, %v2032
        %v2045 = vsel %vm784, %v2043, 0.0
        %2046 = vadd.xlane.f32.xlu0 %v2045
        %v2047 = vpop.xlane.xlu0 %2046
        %v2048 = vsel %vm784, %v2044, 0.0
        %2049 = vadd.xlane.f32.xlu0 %v2048
        %v2050 = vpop.xlane.xlu0 %2049
        %v2051 = vld [vmem:[%s486 + $0x30] sm:$0xf]
        %v2052 = vld [vmem:[%s486 + $0x34] sm:$0xf]
        %v2055 = vunpack.c.l.b16 %v2051
        %v2056 = vunpack.c.l.b16 %v2052
        %v2057 = vpack.c.b16 %v2056, %v2055
        %2058 = vrot.lane.b32.xlu0 %v2057, 1
        %v2059 = vpop.permute.xlu0 %2058
        %v2061 = vsel %vm546, 0, %v2059
        %v2063 = vmul.bf16 %v2061, %v557
        %v2065 = vunpack.c.l.b16 %v2063
        %v2066 = vunpack.c.h.b16 %v2063
        %v2067 = vpack.c.b16 %v2065, %v2065
        %v2068 = vpack.c.b16 %v2066, %v2066
        %2071 = vst.msk [vmem:[#allocation2] sm:$0xf] %vm566, %v2067
        %2072 = vst.msk [vmem:[#allocation2 + $0x4] sm:$0xf] %vm566, %v2068
        %v2073 = vld [vmem:[%s569 + $0x30] sm:$0xf]
        %v2074 = vld [vmem:[%s569 + $0x34] sm:$0xf]
        %2075 = vst.msk [vmem:[#allocation2 + $0x8] sm:$0xf] %vm566, %v2073
        %2076 = vst.msk [vmem:[#allocation2 + $0xc] sm:$0xf] %vm566, %v2074
        %v2077 = vld [vmem:[%s486 + $0x30] sm:$0xf]
        %v2078 = vld [vmem:[%s486 + $0x34] sm:$0xf]
        %2079 = vst.msk [vmem:[#allocation2 + $0x10] sm:$0xf] %vm566, %v2077
        %2080 = vst.msk [vmem:[#allocation2 + $0x14] sm:$0xf] %vm566, %v2078
        %v2081 = vld [vmem:[%s578 + $0x30] sm:$0xf]
        %v2082 = vld [vmem:[%s578 + $0x34] sm:$0xf]
        %v2085 = vunpack.c.l.b16 %v2081
        %v2086 = vunpack.c.l.b16 %v2082
        %v2087 = vpack.c.b16 %v2086, %v2085
        %2088 = vrot.lane.b32.xlu0 %v2087, 1
        %v2089 = vpop.permute.xlu0 %2088
        %v2091 = vsel %vm546, 0, %v2089
        %v2093 = vmul.bf16 %v2091, %v557
        %v2095 = vunpack.c.l.b16 %v2093
        %v2096 = vunpack.c.h.b16 %v2093
        %v2097 = vpack.c.b16 %v2095, %v2095
        %v2098 = vpack.c.b16 %v2096, %v2096
        %2101 = vst.msk [vmem:[#allocation2 + $0x18] sm:$0xf] %vm566, %v2097
        %2102 = vst.msk [vmem:[#allocation2 + $0x1c] sm:$0xf] %vm566, %v2098
        %v2103 = vld [vmem:[%s601 + $0x30] sm:$0xf]
        %v2104 = vld [vmem:[%s601 + $0x34] sm:$0xf]
        %2105 = vst.msk [vmem:[#allocation2 + $0x20] sm:$0xf] %vm566, %v2103
        %2106 = vst.msk [vmem:[#allocation2 + $0x24] sm:$0xf] %vm566, %v2104
        %v2107 = vld [vmem:[%s578 + $0x30] sm:$0xf]
        %v2108 = vld [vmem:[%s578 + $0x34] sm:$0xf]
        %2109 = vst.msk [vmem:[#allocation2 + $0x28] sm:$0xf] %vm566, %v2107
        %2110 = vst.msk [vmem:[#allocation2 + $0x2c] sm:$0xf] %vm566, %v2108
        %v2111 = vld [vmem:[%s486 + $0x30] sm:$0xf]
        %v2112 = vld [vmem:[%s486 + $0x34] sm:$0xf]
        %v2115 = vunpack.c.l.b16 %v2111
        %v2116 = vunpack.c.l.b16 %v2112
        %v2117 = vpack.c.b16 %v2116, %v2115
        %2118 = vrot.lane.b32.xlu0 %v2117, 121
        %v2119 = vpop.permute.xlu0 %2118
        %v2121 = vsel %vm546, 0, %v2119
        %v2123 = vmul.bf16 %v2121, %v557
        %v2125 = vunpack.c.l.b16 %v2123
        %v2126 = vunpack.c.h.b16 %v2123
        %v2127 = vpack.c.b16 %v2125, %v2125
        %v2128 = vpack.c.b16 %v2126, %v2126
        %2131 = vst.msk [vmem:[#allocation2 + $0x30] sm:$0xf] %vm566, %v2127
        %2132 = vst.msk [vmem:[#allocation2 + $0x34] sm:$0xf] %vm566, %v2128
        %v2133 = vld [vmem:[%s569 + $0x30] sm:$0xf]
        %v2134 = vld [vmem:[%s569 + $0x34] sm:$0xf]
        %2137 = vrot.lane.b32.xlu0 %v2133, 120
        %v2138 = vpop.permute.xlu0 %2137
        %2139 = vrot.lane.b32.xlu0 %v2134, 120
        %v2140 = vpop.permute.xlu0 %2139
        %2143 = vst.msk [vmem:[#allocation2 + $0x38] sm:$0xf] %vm566, %v2138
        %2144 = vst.msk [vmem:[#allocation2 + $0x3c] sm:$0xf] %vm566, %v2140
        %v2145 = vld [vmem:[%s486 + $0x30] sm:$0xf]
        %v2146 = vld [vmem:[%s486 + $0x34] sm:$0xf]
        %2149 = vrot.lane.b32.xlu0 %v2145, 120
        %v2150 = vpop.permute.xlu0 %2149
        %2151 = vrot.lane.b32.xlu0 %v2146, 120
        %v2152 = vpop.permute.xlu0 %2151
        %2155 = vst.msk [vmem:[#allocation2 + $0x40] sm:$0xf] %vm566, %v2150
        %2156 = vst.msk [vmem:[#allocation2 + $0x44] sm:$0xf] %vm566, %v2152
        %s2157 = scalar_lea.vmem %s524, 96
        %v2158 = vld [vmem:[%s2157] sm:$0xff]
        %v2159 = vld [vmem:[%s2157 + $0x8] sm:$0xff]
        %v2160 = vld [vmem:[#allocation2] sm:$0xf]
        %v2161 = vld [vmem:[#allocation2 + $0x4] sm:$0xf]
        %v2162 = vld [vmem:[#allocation2 + $0x8] sm:$0xf]
        %v2163 = vld [vmem:[#allocation2 + $0xc] sm:$0xf]
        %v2164 = vld [vmem:[#allocation2 + $0x10] sm:$0xf]
        %v2165 = vld [vmem:[#allocation2 + $0x14] sm:$0xf]
        %v2166 = vld [vmem:[#allocation2 + $0x18] sm:$0xf]
        %v2167 = vld [vmem:[#allocation2 + $0x1c] sm:$0xf]
        %v2168 = vld [vmem:[#allocation2 + $0x20] sm:$0xf]
        %v2169 = vld [vmem:[#allocation2 + $0x24] sm:$0xf]
        %v2170 = vld [vmem:[#allocation2 + $0x28] sm:$0xf]
        %v2171 = vld [vmem:[#allocation2 + $0x2c] sm:$0xf]
        %v2172 = vld [vmem:[#allocation2 + $0x30] sm:$0xf]
        %v2173 = vld [vmem:[#allocation2 + $0x34] sm:$0xf]
        %v2174 = vld [vmem:[#allocation2 + $0x38] sm:$0xf]
        %v2175 = vld [vmem:[#allocation2 + $0x3c] sm:$0xf]
        %v2176 = vld [vmem:[#allocation2 + $0x40] sm:$0xf]
        %v2177 = vld [vmem:[#allocation2 + $0x44] sm:$0xf]
        %v2180 = vunpack.c.l.b16 %v2158
        %v2181 = vunpack.c.h.b16 %v2158
        %v2182 = vunpack.c.l.b16 %v2159
        %v2183 = vunpack.c.h.b16 %v2159
        %v2184 = vpack.c.b16 %v2182, %v2180
        %v2185 = vpack.c.b16 %v2183, %v2181
        %v2205 = vunpack.c.l.b16 %v2160
        %v2206 = vunpack.c.l.b16 %v2161
        %v2207 = vunpack.c.l.b16 %v2162
        %v2208 = vunpack.c.l.b16 %v2163
        %v2209 = vunpack.c.l.b16 %v2164
        %v2210 = vunpack.c.l.b16 %v2165
        %v2211 = vunpack.c.l.b16 %v2166
        %v2212 = vunpack.c.l.b16 %v2167
        %v2213 = vunpack.c.l.b16 %v2168
        %v2214 = vunpack.c.l.b16 %v2169
        %v2215 = vunpack.c.l.b16 %v2170
        %v2216 = vunpack.c.l.b16 %v2171
        %v2217 = vunpack.c.l.b16 %v2172
        %v2218 = vunpack.c.l.b16 %v2173
        %v2219 = vunpack.c.l.b16 %v2174
        %v2220 = vunpack.c.l.b16 %v2175
        %v2221 = vunpack.c.l.b16 %v2176
        %v2222 = vunpack.c.l.b16 %v2177
        %v2223 = vpack.c.b16 %v2206, %v2205
        %v2224 = vpack.c.b16 %v2208, %v2207
        %v2225 = vpack.c.b16 %v2210, %v2209
        %v2226 = vpack.c.b16 %v2212, %v2211
        %v2227 = vpack.c.b16 %v2214, %v2213
        %v2228 = vpack.c.b16 %v2216, %v2215
        %v2229 = vpack.c.b16 %v2218, %v2217
        %v2230 = vpack.c.b16 %v2220, %v2219
        %v2231 = vpack.c.b16 %v2222, %v2221
        %v2242 = vsel %vm739, %v2185, 0
        %2244 = vmatprep.subr.bf16.mxu0 0
        %2245 = vmatpush1.bf16.msra.mxu0 %v2230
        %2246 = vmatprep.subr.bf16.mxu0 0
        %2247 = vmatpush1.bf16.msra.mxu0 %v2229
        %2248 = vmatprep.subr.bf16.mxu0 0
        %2249 = vmatpush1.bf16.msra.mxu0 %v2228
        %2250 = vmatprep.subr.bf16.mxu0 0
        %2251 = vmatpush1.bf16.msra.mxu0 %v2227
        %2252 = vmatprep.subr.bf16.mxu0 0
        %2253 = vmatpush1.bf16.msra.mxu0 %v2226
        %2254 = vmatprep.subr.bf16.mxu0 0
        %2255 = vmatpush1.bf16.msra.mxu0 %v2225
        %2256 = vmatprep.subr.bf16.mxu0 0
        %2257 = vmatpush1.bf16.msra.mxu0 %v2224
        %2258 = vmatprep.subr.bf16.mxu0 0
        %2259 = vmatpush1.bf16.msra.mxu0 %v2223
        %2260 = vmatprep.subr.bf16.mxu0 0
        %2261 = vmatpush2.bf16.msra.mxu0 0
        %2262 = vmatprep.subr.bf16.mxu0 0
        %2263 = vmatpush2.bf16.msra.mxu0 0
        %2264 = vmatprep.subr.bf16.mxu0 0
        %2265 = vmatpush2.bf16.msra.mxu0 0
        %2266 = vmatprep.subr.bf16.mxu0 0
        %2267 = vmatpush2.bf16.msra.mxu0 0
        %2268 = vmatprep.subr.bf16.mxu0 0
        %2269 = vmatpush2.bf16.msra.mxu0 0
        %2270 = vmatprep.subr.bf16.mxu0 0
        %2271 = vmatpush2.bf16.msra.mxu0 0
        %2272 = vmatprep.subr.bf16.mxu0 0
        %2273 = vmatpush2.bf16.msra.mxu0 0
        %2274 = vmatprep.subr.bf16.mxu0 0
        %2275 = vmatpush2.bf16.msra.mxu0 %v2231
        %2276 = vmatprep.mubr.bf16.mxu0 %v2242
        %2277 = vmatmul.mubr.bf16.gmra.mxu0 %v2184
        %v2278 = vpop.f32.mrf.mxu0
        %v2279 = vadd.f32 0.0, %v2278
        %v2280 = vpop.f32.mrf.mxu0
        %v2281 = vpop.f32.mrf.mxu0
        %v2282 = vadd.f32 0.0, %v2281
        %v2283 = vpop.f32.mrf.mxu0
        %2284 = vdwg.mxu0
        %2285 = vst.msk [vmem:[%s534 + $0x60] sm:$0xff] %vm784, %v2279
        %2286 = vst.msk [vmem:[%s534 + $0x68] sm:$0xff] %vm784, %v2282
        %v2287 = vsel %vm784, %v2279, 0.0
        %2288 = vadd.xlane.f32.xlu0 %v2287
        %v2289 = vpop.xlane.xlu0 %2288
        %v2290 = vsel %vm784, %v2282, 0.0
        %2291 = vadd.xlane.f32.xlu0 %v2290
        %v2292 = vpop.xlane.xlu0 %2291
        %v2293 = vmul.f32 %v2279, %v2279
        %v2294 = vmul.f32 %v2282, %v2282
        %v2295 = vsel %vm784, %v2293, 0.0
        %2296 = vadd.xlane.f32.xlu0 %v2295
        %v2297 = vpop.xlane.xlu0 %2296
        %v2298 = vsel %vm784, %v2294, 0.0
        %2299 = vadd.xlane.f32.xlu0 %v2298
        %v2300 = vpop.xlane.xlu0 %2299
        %v2301 = vld [vmem:[%s486 + $0x38] sm:$0xf]
        %v2302 = vld [vmem:[%s486 + $0x3c] sm:$0xf]
        %v2305 = vunpack.c.l.b16 %v2301
        %v2306 = vunpack.c.l.b16 %v2302
        %v2307 = vpack.c.b16 %v2306, %v2305
        %2308 = vrot.lane.b32.xlu0 %v2307, 1
        %v2309 = vpop.permute.xlu0 %2308
        %v2311 = vsel %vm546, 0, %v2309
        %v2313 = vmul.bf16 %v2311, %v557
        %v2315 = vunpack.c.l.b16 %v2313
        %v2316 = vunpack.c.h.b16 %v2313
        %v2317 = vpack.c.b16 %v2315, %v2315
        %v2318 = vpack.c.b16 %v2316, %v2316
        %2321 = vst.msk [vmem:[#allocation2] sm:$0xf] %vm566, %v2317
        %2322 = vst.msk [vmem:[#allocation2 + $0x4] sm:$0xf] %vm566, %v2318
        %v2323 = vld [vmem:[%s569 + $0x38] sm:$0xf]
        %v2324 = vld [vmem:[%s569 + $0x3c] sm:$0xf]
        %2325 = vst.msk [vmem:[#allocation2 + $0x8] sm:$0xf] %vm566, %v2323
        %2326 = vst.msk [vmem:[#allocation2 + $0xc] sm:$0xf] %vm566, %v2324
        %v2327 = vld [vmem:[%s486 + $0x38] sm:$0xf]
        %v2328 = vld [vmem:[%s486 + $0x3c] sm:$0xf]
        %2329 = vst.msk [vmem:[#allocation2 + $0x10] sm:$0xf] %vm566, %v2327
        %2330 = vst.msk [vmem:[#allocation2 + $0x14] sm:$0xf] %vm566, %v2328
        %v2331 = vld [vmem:[%s578 + $0x38] sm:$0xf]
        %v2332 = vld [vmem:[%s578 + $0x3c] sm:$0xf]
        %v2335 = vunpack.c.l.b16 %v2331
        %v2336 = vunpack.c.l.b16 %v2332
        %v2337 = vpack.c.b16 %v2336, %v2335
        %2338 = vrot.lane.b32.xlu0 %v2337, 1
        %v2339 = vpop.permute.xlu0 %2338
        %v2341 = vsel %vm546, 0, %v2339
        %v2343 = vmul.bf16 %v2341, %v557
        %v2345 = vunpack.c.l.b16 %v2343
        %v2346 = vunpack.c.h.b16 %v2343
        %v2347 = vpack.c.b16 %v2345, %v2345
        %v2348 = vpack.c.b16 %v2346, %v2346
        %2351 = vst.msk [vmem:[#allocation2 + $0x18] sm:$0xf] %vm566, %v2347
        %2352 = vst.msk [vmem:[#allocation2 + $0x1c] sm:$0xf] %vm566, %v2348
        %v2353 = vld [vmem:[%s601 + $0x38] sm:$0xf]
        %v2354 = vld [vmem:[%s601 + $0x3c] sm:$0xf]
        %2355 = vst.msk [vmem:[#allocation2 + $0x20] sm:$0xf] %vm566, %v2353
        %2356 = vst.msk [vmem:[#allocation2 + $0x24] sm:$0xf] %vm566, %v2354
        %v2357 = vld [vmem:[%s578 + $0x38] sm:$0xf]
        %v2358 = vld [vmem:[%s578 + $0x3c] sm:$0xf]
        %2359 = vst.msk [vmem:[#allocation2 + $0x28] sm:$0xf] %vm566, %v2357
        %2360 = vst.msk [vmem:[#allocation2 + $0x2c] sm:$0xf] %vm566, %v2358
        %v2361 = vld [vmem:[%s486 + $0x38] sm:$0xf]
        %v2362 = vld [vmem:[%s486 + $0x3c] sm:$0xf]
        %v2365 = vunpack.c.l.b16 %v2361
        %v2366 = vunpack.c.l.b16 %v2362
        %v2367 = vpack.c.b16 %v2366, %v2365
        %2368 = vrot.lane.b32.xlu0 %v2367, 121
        %v2369 = vpop.permute.xlu0 %2368
        %v2371 = vsel %vm546, 0, %v2369
        %v2373 = vmul.bf16 %v2371, %v557
        %v2375 = vunpack.c.l.b16 %v2373
        %v2376 = vunpack.c.h.b16 %v2373
        %v2377 = vpack.c.b16 %v2375, %v2375
        %v2378 = vpack.c.b16 %v2376, %v2376
        %2381 = vst.msk [vmem:[#allocation2 + $0x30] sm:$0xf] %vm566, %v2377
        %2382 = vst.msk [vmem:[#allocation2 + $0x34] sm:$0xf] %vm566, %v2378
        %v2383 = vld [vmem:[%s569 + $0x38] sm:$0xf]
        %v2384 = vld [vmem:[%s569 + $0x3c] sm:$0xf]
        %2387 = vrot.lane.b32.xlu0 %v2383, 120
        %v2388 = vpop.permute.xlu0 %2387
        %2389 = vrot.lane.b32.xlu0 %v2384, 120
        %v2390 = vpop.permute.xlu0 %2389
        %2393 = vst.msk [vmem:[#allocation2 + $0x38] sm:$0xf] %vm566, %v2388
        %2394 = vst.msk [vmem:[#allocation2 + $0x3c] sm:$0xf] %vm566, %v2390
        %v2395 = vld [vmem:[%s486 + $0x38] sm:$0xf]
        %v2396 = vld [vmem:[%s486 + $0x3c] sm:$0xf]
        %2399 = vrot.lane.b32.xlu0 %v2395, 120
        %v2400 = vpop.permute.xlu0 %2399
        %2401 = vrot.lane.b32.xlu0 %v2396, 120
        %v2402 = vpop.permute.xlu0 %2401
        %2405 = vst.msk [vmem:[#allocation2 + $0x40] sm:$0xf] %vm566, %v2400
        %2406 = vst.msk [vmem:[#allocation2 + $0x44] sm:$0xf] %vm566, %v2402
        %s2407 = scalar_lea.vmem %s524, 112
        %v2408 = vld [vmem:[%s2407] sm:$0xff]
        %v2409 = vld [vmem:[%s2407 + $0x8] sm:$0xff]
        %v2410 = vld [vmem:[#allocation2] sm:$0xf]
        %v2411 = vld [vmem:[#allocation2 + $0x4] sm:$0xf]
        %v2412 = vld [vmem:[#allocation2 + $0x8] sm:$0xf]
        %v2413 = vld [vmem:[#allocation2 + $0xc] sm:$0xf]
        %v2414 = vld [vmem:[#allocation2 + $0x10] sm:$0xf]
        %v2415 = vld [vmem:[#allocation2 + $0x14] sm:$0xf]
        %v2416 = vld [vmem:[#allocation2 + $0x18] sm:$0xf]
        %v2417 = vld [vmem:[#allocation2 + $0x1c] sm:$0xf]
        %v2418 = vld [vmem:[#allocation2 + $0x20] sm:$0xf]
        %v2419 = vld [vmem:[#allocation2 + $0x24] sm:$0xf]
        %v2420 = vld [vmem:[#allocation2 + $0x28] sm:$0xf]
        %v2421 = vld [vmem:[#allocation2 + $0x2c] sm:$0xf]
        %v2422 = vld [vmem:[#allocation2 + $0x30] sm:$0xf]
        %v2423 = vld [vmem:[#allocation2 + $0x34] sm:$0xf]
        %v2424 = vld [vmem:[#allocation2 + $0x38] sm:$0xf]
        %v2425 = vld [vmem:[#allocation2 + $0x3c] sm:$0xf]
        %v2426 = vld [vmem:[#allocation2 + $0x40] sm:$0xf]
        %v2427 = vld [vmem:[#allocation2 + $0x44] sm:$0xf]
        %v2430 = vunpack.c.l.b16 %v2408
        %v2431 = vunpack.c.h.b16 %v2408
        %v2432 = vunpack.c.l.b16 %v2409
        %v2433 = vunpack.c.h.b16 %v2409
        %v2434 = vpack.c.b16 %v2432, %v2430
        %v2435 = vpack.c.b16 %v2433, %v2431
        %v2455 = vunpack.c.l.b16 %v2410
        %v2456 = vunpack.c.l.b16 %v2411
        %v2457 = vunpack.c.l.b16 %v2412
        %v2458 = vunpack.c.l.b16 %v2413
        %v2459 = vunpack.c.l.b16 %v2414
        %v2460 = vunpack.c.l.b16 %v2415
        %v2461 = vunpack.c.l.b16 %v2416
        %v2462 = vunpack.c.l.b16 %v2417
        %v2463 = vunpack.c.l.b16 %v2418
        %v2464 = vunpack.c.l.b16 %v2419
        %v2465 = vunpack.c.l.b16 %v2420
        %v2466 = vunpack.c.l.b16 %v2421
        %v2467 = vunpack.c.l.b16 %v2422
        %v2468 = vunpack.c.l.b16 %v2423
        %v2469 = vunpack.c.l.b16 %v2424
        %v2470 = vunpack.c.l.b16 %v2425
        %v2471 = vunpack.c.l.b16 %v2426
        %v2472 = vunpack.c.l.b16 %v2427
        %v2473 = vpack.c.b16 %v2456, %v2455
        %v2474 = vpack.c.b16 %v2458, %v2457
        %v2475 = vpack.c.b16 %v2460, %v2459
        %v2476 = vpack.c.b16 %v2462, %v2461
        %v2477 = vpack.c.b16 %v2464, %v2463
        %v2478 = vpack.c.b16 %v2466, %v2465
        %v2479 = vpack.c.b16 %v2468, %v2467
        %v2480 = vpack.c.b16 %v2470, %v2469
        %v2481 = vpack.c.b16 %v2472, %v2471
        %v2492 = vsel %vm739, %v2435, 0
        %2494 = vmatprep.subr.bf16.mxu0 0
        %2495 = vmatpush1.bf16.msra.mxu0 %v2480
        %2496 = vmatprep.subr.bf16.mxu0 0
        %2497 = vmatpush1.bf16.msra.mxu0 %v2479
        %2498 = vmatprep.subr.bf16.mxu0 0
        %2499 = vmatpush1.bf16.msra.mxu0 %v2478
        %2500 = vmatprep.subr.bf16.mxu0 0
        %2501 = vmatpush1.bf16.msra.mxu0 %v2477
        %2502 = vmatprep.subr.bf16.mxu0 0
        %2503 = vmatpush1.bf16.msra.mxu0 %v2476
        %2504 = vmatprep.subr.bf16.mxu0 0
        %2505 = vmatpush1.bf16.msra.mxu0 %v2475
        %2506 = vmatprep.subr.bf16.mxu0 0
        %2507 = vmatpush1.bf16.msra.mxu0 %v2474
        %2508 = vmatprep.subr.bf16.mxu0 0
        %2509 = vmatpush1.bf16.msra.mxu0 %v2473
        %2510 = vmatprep.subr.bf16.mxu0 0
        %2511 = vmatpush2.bf16.msra.mxu0 0
        %2512 = vmatprep.subr.bf16.mxu0 0
        %2513 = vmatpush2.bf16.msra.mxu0 0
        %2514 = vmatprep.subr.bf16.mxu0 0
        %2515 = vmatpush2.bf16.msra.mxu0 0
        %2516 = vmatprep.subr.bf16.mxu0 0
        %2517 = vmatpush2.bf16.msra.mxu0 0
        %2518 = vmatprep.subr.bf16.mxu0 0
        %2519 = vmatpush2.bf16.msra.mxu0 0
        %2520 = vmatprep.subr.bf16.mxu0 0
        %2521 = vmatpush2.bf16.msra.mxu0 0
        %2522 = vmatprep.subr.bf16.mxu0 0
        %2523 = vmatpush2.bf16.msra.mxu0 0
        %2524 = vmatprep.subr.bf16.mxu0 0
        %2525 = vmatpush2.bf16.msra.mxu0 %v2481
        %2526 = vmatprep.mubr.bf16.mxu0 %v2492
        %2527 = vmatmul.mubr.bf16.gmra.mxu0 %v2434
        %v2528 = vpop.f32.mrf.mxu0
        %v2529 = vadd.f32 0.0, %v2528
        %v2530 = vpop.f32.mrf.mxu0
        %v2531 = vpop.f32.mrf.mxu0
        %v2532 = vadd.f32 0.0, %v2531
        %v2533 = vpop.f32.mrf.mxu0
        %2534 = vdwg.mxu0
        %2535 = vst.msk [vmem:[%s534 + $0x70] sm:$0xff] %vm784, %v2529
        %2536 = vst.msk [vmem:[%s534 + $0x78] sm:$0xff] %vm784, %v2532
        %v2537 = vsel %vm784, %v2529, 0.0
        %2538 = vadd.xlane.f32.xlu0 %v2537
        %v2539 = vpop.xlane.xlu0 %2538
        %v2540 = vsel %vm784, %v2532, 0.0
        %2541 = vadd.xlane.f32.xlu0 %v2540
        %v2542 = vpop.xlane.xlu0 %2541
        %v2543 = vmul.f32 %v2529, %v2529
        %v2544 = vmul.f32 %v2532, %v2532
        %v2545 = vsel %vm784, %v2543, 0.0
        %2546 = vadd.xlane.f32.xlu0 %v2545
        %v2547 = vpop.xlane.xlu0 %2546
        %v2548 = vsel %vm784, %v2544, 0.0
        %2549 = vadd.xlane.f32.xlu0 %v2548
        %v2550 = vpop.xlane.xlu0 %2549
        %v2551 = vmul.f32 %v789, 0.015625
        %v2552 = vmul.f32 %v792, 0.015625
        %v2553 = vmul.f32 %v1039, 0.015625
        %v2554 = vmul.f32 %v1042, 0.015625
        %v2555 = vmul.f32 %v1289, 0.015625
        %v2556 = vmul.f32 %v1292, 0.015625
        %v2557 = vmul.f32 %v1539, 0.015625
        %v2558 = vmul.f32 %v1542, 0.015625
        %v2559 = vmul.f32 %v1789, 0.015625
        %v2560 = vmul.f32 %v1792, 0.015625
        %v2561 = vmul.f32 %v2039, 0.015625
        %v2562 = vmul.f32 %v2042, 0.015625
        %v2563 = vmul.f32 %v2289, 0.015625
        %v2564 = vmul.f32 %v2292, 0.015625
        %v2565 = vmul.f32 %v2539, 0.015625
        %v2566 = vmul.f32 %v2542, 0.015625
        %v2567 = vmul.f32 %v797, 0.015625
        %v2568 = vmul.f32 %v800, 0.015625
        %v2569 = vmul.f32 %v1047, 0.015625
        %v2570 = vmul.f32 %v1050, 0.015625
        %v2571 = vmul.f32 %v1297, 0.015625
        %v2572 = vmul.f32 %v1300, 0.015625
        %v2573 = vmul.f32 %v1547, 0.015625
        %v2574 = vmul.f32 %v1550, 0.015625
        %v2575 = vmul.f32 %v1797, 0.015625
        %v2576 = vmul.f32 %v1800, 0.015625
        %v2577 = vmul.f32 %v2047, 0.015625
        %v2578 = vmul.f32 %v2050, 0.015625
        %v2579 = vmul.f32 %v2297, 0.015625
        %v2580 = vmul.f32 %v2300, 0.015625
        %v2581 = vmul.f32 %v2547, 0.015625
        %v2582 = vmul.f32 %v2550, 0.015625
        %v2583 = vmul.f32 %v2551, %v2551
        %v2584 = vmul.f32 %v2552, %v2552
        %v2585 = vmul.f32 %v2553, %v2553
        %v2586 = vmul.f32 %v2554, %v2554
        %v2587 = vmul.f32 %v2555, %v2555
        %v2588 = vmul.f32 %v2556, %v2556
        %v2589 = vmul.f32 %v2557, %v2557
        %v2590 = vmul.f32 %v2558, %v2558
        %v2591 = vmul.f32 %v2559, %v2559
        %v2592 = vmul.f32 %v2560, %v2560
        %v2593 = vmul.f32 %v2561, %v2561
        %v2594 = vmul.f32 %v2562, %v2562
        %v2595 = vmul.f32 %v2563, %v2563
        %v2596 = vmul.f32 %v2564, %v2564
        %v2597 = vmul.f32 %v2565, %v2565
        %v2598 = vmul.f32 %v2566, %v2566
        %v2599 = vsub.f32 %v2567, %v2583
        %v2600 = vsub.f32 %v2568, %v2584
        %v2601 = vsub.f32 %v2569, %v2585
        %v2602 = vsub.f32 %v2570, %v2586
        %v2603 = vsub.f32 %v2571, %v2587
        %v2604 = vsub.f32 %v2572, %v2588
        %v2605 = vsub.f32 %v2573, %v2589
        %v2606 = vsub.f32 %v2574, %v2590
        %v2607 = vsub.f32 %v2575, %v2591
        %v2608 = vsub.f32 %v2576, %v2592
        %v2609 = vsub.f32 %v2577, %v2593
        %v2610 = vsub.f32 %v2578, %v2594
        %v2611 = vsub.f32 %v2579, %v2595
        %v2612 = vsub.f32 %v2580, %v2596
        %v2613 = vsub.f32 %v2581, %v2597
        %v2614 = vsub.f32 %v2582, %v2598
        %v2615 = vld [vmem:[%s529] sm:$0xff]
        %v2616 = vld [vmem:[%s529 + $0x8] sm:$0xff]
        %v2617 = vld [vmem:[%s529 + $0x10] sm:$0xff]
        %v2618 = vld [vmem:[%s529 + $0x18] sm:$0xff]
        %v2619 = vld [vmem:[%s529 + $0x20] sm:$0xff]
        %v2620 = vld [vmem:[%s529 + $0x28] sm:$0xff]
        %v2621 = vld [vmem:[%s529 + $0x30] sm:$0xff]
        %v2622 = vld [vmem:[%s529 + $0x38] sm:$0xff]
        %v2623 = vld [vmem:[%s529 + $0x40] sm:$0xff]
        %v2624 = vld [vmem:[%s529 + $0x48] sm:$0xff]
        %v2625 = vld [vmem:[%s529 + $0x50] sm:$0xff]
        %v2626 = vld [vmem:[%s529 + $0x58] sm:$0xff]
        %v2627 = vld [vmem:[%s529 + $0x60] sm:$0xff]
        %v2628 = vld [vmem:[%s529 + $0x68] sm:$0xff]
        %v2629 = vld [vmem:[%s529 + $0x70] sm:$0xff]
        %v2630 = vld [vmem:[%s529 + $0x78] sm:$0xff]
        %v2631 = vadd.f32 %v2599, 1e-05
        %v2632 = vadd.f32 %v2600, 1e-05
        %v2633 = vadd.f32 %v2601, 1e-05
        %v2634 = vadd.f32 %v2602, 1e-05
        %v2635 = vadd.f32 %v2603, 1e-05
        %v2636 = vadd.f32 %v2604, 1e-05
        %v2637 = vadd.f32 %v2605, 1e-05
        %v2638 = vadd.f32 %v2606, 1e-05
        %v2639 = vadd.f32 %v2607, 1e-05
        %v2640 = vadd.f32 %v2608, 1e-05
        %v2641 = vadd.f32 %v2609, 1e-05
        %v2642 = vadd.f32 %v2610, 1e-05
        %v2643 = vadd.f32 %v2611, 1e-05
        %v2644 = vadd.f32 %v2612, 1e-05
        %v2645 = vadd.f32 %v2613, 1e-05
        %v2646 = vadd.f32 %v2614, 1e-05
        %v2647 = vrsqrt.pop %v2631
        %v2648 = vrsqrt.pop %v2632
        %v2649 = vrsqrt.pop %v2633
        %v2650 = vrsqrt.pop %v2634
        %v2651 = vrsqrt.pop %v2635
        %v2652 = vrsqrt.pop %v2636
        %v2653 = vrsqrt.pop %v2637
        %v2654 = vrsqrt.pop %v2638
        %v2655 = vrsqrt.pop %v2639
        %v2656 = vrsqrt.pop %v2640
        %v2657 = vrsqrt.pop %v2641
        %v2658 = vrsqrt.pop %v2642
        %v2659 = vrsqrt.pop %v2643
        %v2660 = vrsqrt.pop %v2644
        %v2661 = vrsqrt.pop %v2645
        %v2662 = vrsqrt.pop %v2646
        %v2663 = vmul.f32 %v2615, %v2647
        %v2664 = vmul.f32 %v2616, %v2648
        %v2665 = vmul.f32 %v2617, %v2649
        %v2666 = vmul.f32 %v2618, %v2650
        %v2667 = vmul.f32 %v2619, %v2651
        %v2668 = vmul.f32 %v2620, %v2652
        %v2669 = vmul.f32 %v2621, %v2653
        %v2670 = vmul.f32 %v2622, %v2654
        %v2671 = vmul.f32 %v2623, %v2655
        %v2672 = vmul.f32 %v2624, %v2656
        %v2673 = vmul.f32 %v2625, %v2657
        %v2674 = vmul.f32 %v2626, %v2658
        %v2675 = vmul.f32 %v2627, %v2659
        %v2676 = vmul.f32 %v2628, %v2660
        %v2677 = vmul.f32 %v2629, %v2661
        %v2678 = vmul.f32 %v2630, %v2662
        %v2679 = vmul.f32 %v2551, %v2663
        %v2680 = vmul.f32 %v2552, %v2664
        %v2681 = vmul.f32 %v2553, %v2665
        %v2682 = vmul.f32 %v2554, %v2666
        %v2683 = vmul.f32 %v2555, %v2667
        %v2684 = vmul.f32 %v2556, %v2668
        %v2685 = vmul.f32 %v2557, %v2669
        %v2686 = vmul.f32 %v2558, %v2670
        %v2687 = vmul.f32 %v2559, %v2671
        %v2688 = vmul.f32 %v2560, %v2672
        %v2689 = vmul.f32 %v2561, %v2673
        %v2690 = vmul.f32 %v2562, %v2674
        %v2691 = vmul.f32 %v2563, %v2675
        %v2692 = vmul.f32 %v2564, %v2676
        %v2693 = vmul.f32 %v2565, %v2677
        %v2694 = vmul.f32 %v2566, %v2678
        %2711 = vrot.lane.b32.xlu0 %v2679, 1
        %v2712 = vpop.permute.xlu0 %2711
        %2713 = vrot.lane.b32.xlu0 %v2680, 1
        %v2714 = vpop.permute.xlu0 %2713
        %2715 = vrot.lane.b32.xlu0 %v2681, 1
        %v2716 = vpop.permute.xlu0 %2715
        %2717 = vrot.lane.b32.xlu0 %v2682, 1
        %v2718 = vpop.permute.xlu0 %2717
        %2719 = vrot.lane.b32.xlu0 %v2683, 1
        %v2720 = vpop.permute.xlu0 %2719
        %2721 = vrot.lane.b32.xlu0 %v2684, 1
        %v2722 = vpop.permute.xlu0 %2721
        %2723 = vrot.lane.b32.xlu0 %v2685, 1
        %v2724 = vpop.permute.xlu0 %2723
        %2725 = vrot.lane.b32.xlu0 %v2686, 1
        %v2726 = vpop.permute.xlu0 %2725
        %2727 = vrot.lane.b32.xlu0 %v2687, 1
        %v2728 = vpop.permute.xlu0 %2727
        %2729 = vrot.lane.b32.xlu0 %v2688, 1
        %v2730 = vpop.permute.xlu0 %2729
        %2731 = vrot.lane.b32.xlu0 %v2689, 1
        %v2732 = vpop.permute.xlu0 %2731
        %2733 = vrot.lane.b32.xlu0 %v2690, 1
        %v2734 = vpop.permute.xlu0 %2733
        %2735 = vrot.lane.b32.xlu0 %v2691, 1
        %v2736 = vpop.permute.xlu0 %2735
        %2737 = vrot.lane.b32.xlu0 %v2692, 1
        %v2738 = vpop.permute.xlu0 %2737
        %2739 = vrot.lane.b32.xlu0 %v2693, 1
        %v2740 = vpop.permute.xlu0 %2739
        %2741 = vrot.lane.b32.xlu0 %v2694, 1
        %v2742 = vpop.permute.xlu0 %2741
        %v2759 = vsub.f32 %v2615, %v2712
        %v2760 = vsub.f32 %v2616, %v2714
        %v2761 = vsub.f32 %v2617, %v2716
        %v2762 = vsub.f32 %v2618, %v2718
        %v2763 = vsub.f32 %v2619, %v2720
        %v2764 = vsub.f32 %v2620, %v2722
        %v2765 = vsub.f32 %v2621, %v2724
        %v2766 = vsub.f32 %v2622, %v2726
        %v2767 = vsub.f32 %v2623, %v2728
        %v2768 = vsub.f32 %v2624, %v2730
        %v2769 = vsub.f32 %v2625, %v2732
        %v2770 = vsub.f32 %v2626, %v2734
        %v2771 = vsub.f32 %v2627, %v2736
        %v2772 = vsub.f32 %v2628, %v2738
        %v2773 = vsub.f32 %v2629, %v2740
        %v2774 = vsub.f32 %v2630, %v2742
        %v2775 = vld [vmem:[%s534] sm:$0xff]
        %v2776 = vld [vmem:[%s534 + $0x8] sm:$0xff]
        %v2777 = vld [vmem:[%s534 + $0x10] sm:$0xff]
        %v2778 = vld [vmem:[%s534 + $0x18] sm:$0xff]
        %v2779 = vld [vmem:[%s534 + $0x20] sm:$0xff]
        %v2780 = vld [vmem:[%s534 + $0x28] sm:$0xff]
        %v2781 = vld [vmem:[%s534 + $0x30] sm:$0xff]
        %v2782 = vld [vmem:[%s534 + $0x38] sm:$0xff]
        %v2783 = vld [vmem:[%s534 + $0x40] sm:$0xff]
        %v2784 = vld [vmem:[%s534 + $0x48] sm:$0xff]
        %v2785 = vld [vmem:[%s534 + $0x50] sm:$0xff]
        %v2786 = vld [vmem:[%s534 + $0x58] sm:$0xff]
        %v2787 = vld [vmem:[%s534 + $0x60] sm:$0xff]
        %v2788 = vld [vmem:[%s534 + $0x68] sm:$0xff]
        %v2789 = vld [vmem:[%s534 + $0x70] sm:$0xff]
        %v2790 = vld [vmem:[%s534 + $0x78] sm:$0xff]
        %2792 = vset.pattern.permute.xlu0 0
        %2793 = vperm.xlu0 %2792, %v2663
        %v2794 = vpop.permute.xlu0 %2793
        %2797 = vset.pattern.permute.xlu0 0
        %2798 = vperm.xlu0 %2797, %v2664
        %v2799 = vpop.permute.xlu0 %2798
        %2802 = vset.pattern.permute.xlu0 0
        %2803 = vperm.xlu0 %2802, %v2665
        %v2804 = vpop.permute.xlu0 %2803
        %2807 = vset.pattern.permute.xlu0 0
        %2808 = vperm.xlu0 %2807, %v2666
        %v2809 = vpop.permute.xlu0 %2808
        %2812 = vset.pattern.permute.xlu0 0
        %2813 = vperm.xlu0 %2812, %v2667
        %v2814 = vpop.permute.xlu0 %2813
        %2817 = vset.pattern.permute.xlu0 0
        %2818 = vperm.xlu0 %2817, %v2668
        %v2819 = vpop.permute.xlu0 %2818
        %2822 = vset.pattern.permute.xlu0 0
        %2823 = vperm.xlu0 %2822, %v2669
        %v2824 = vpop.permute.xlu0 %2823
        %2827 = vset.pattern.permute.xlu0 0
        %2828 = vperm.xlu0 %2827, %v2670
        %v2829 = vpop.permute.xlu0 %2828
        %2832 = vset.pattern.permute.xlu0 0
        %2833 = vperm.xlu0 %2832, %v2671
        %v2834 = vpop.permute.xlu0 %2833
        %2837 = vset.pattern.permute.xlu0 0
        %2838 = vperm.xlu0 %2837, %v2672
        %v2839 = vpop.permute.xlu0 %2838
        %2842 = vset.pattern.permute.xlu0 0
        %2843 = vperm.xlu0 %2842, %v2673
        %v2844 = vpop.permute.xlu0 %2843
        %2847 = vset.pattern.permute.xlu0 0
        %2848 = vperm.xlu0 %2847, %v2674
        %v2849 = vpop.permute.xlu0 %2848
        %2852 = vset.pattern.permute.xlu0 0
        %2853 = vperm.xlu0 %2852, %v2675
        %v2854 = vpop.permute.xlu0 %2853
        %2857 = vset.pattern.permute.xlu0 0
        %2858 = vperm.xlu0 %2857, %v2676
        %v2859 = vpop.permute.xlu0 %2858
        %2862 = vset.pattern.permute.xlu0 0
        %2863 = vperm.xlu0 %2862, %v2677
        %v2864 = vpop.permute.xlu0 %2863
        %2867 = vset.pattern.permute.xlu0 0
        %2868 = vperm.xlu0 %2867, %v2678
        %v2869 = vpop.permute.xlu0 %2868
        %v2871 = vmul.f32 %v2775, %v2794
        %v2872 = vmul.f32 %v2776, %v2799
        %v2873 = vmul.f32 %v2777, %v2804
        %v2874 = vmul.f32 %v2778, %v2809
        %v2875 = vmul.f32 %v2779, %v2814
        %v2876 = vmul.f32 %v2780, %v2819
        %v2877 = vmul.f32 %v2781, %v2824
        %v2878 = vmul.f32 %v2782, %v2829
        %v2879 = vmul.f32 %v2783, %v2834
        %v2880 = vmul.f32 %v2784, %v2839
        %v2881 = vmul.f32 %v2785, %v2844
        %v2882 = vmul.f32 %v2786, %v2849
        %v2883 = vmul.f32 %v2787, %v2854
        %v2884 = vmul.f32 %v2788, %v2859
        %v2885 = vmul.f32 %v2789, %v2864
        %v2886 = vmul.f32 %v2790, %v2869
        %2888 = vset.pattern.permute.xlu0 1
        %2889 = vperm.xlu0 %2888, %v2759
        %v2890 = vpop.permute.xlu0 %2889
        %2893 = vset.pattern.permute.xlu0 1
        %2894 = vperm.xlu0 %2893, %v2760
        %v2895 = vpop.permute.xlu0 %2894
        %2898 = vset.pattern.permute.xlu0 1
        %2899 = vperm.xlu0 %2898, %v2761
        %v2900 = vpop.permute.xlu0 %2899
        %2903 = vset.pattern.permute.xlu0 1
        %2904 = vperm.xlu0 %2903, %v2762
        %v2905 = vpop.permute.xlu0 %2904
        %2908 = vset.pattern.permute.xlu0 1
        %2909 = vperm.xlu0 %2908, %v2763
        %v2910 = vpop.permute.xlu0 %2909
        %2913 = vset.pattern.permute.xlu0 1
        %2914 = vperm.xlu0 %2913, %v2764
        %v2915 = vpop.permute.xlu0 %2914
        %2918 = vset.pattern.permute.xlu0 1
        %2919 = vperm.xlu0 %2918, %v2765
        %v2920 = vpop.permute.xlu0 %2919
        %2923 = vset.pattern.permute.xlu0 1
        %2924 = vperm.xlu0 %2923, %v2766
        %v2925 = vpop.permute.xlu0 %2924
        %2928 = vset.pattern.permute.xlu0 1
        %2929 = vperm.xlu0 %2928, %v2767
        %v2930 = vpop.permute.xlu0 %2929
        %2933 = vset.pattern.permute.xlu0 1
        %2934 = vperm.xlu0 %2933, %v2768
        %v2935 = vpop.permute.xlu0 %2934
        %2938 = vset.pattern.permute.xlu0 1
        %2939 = vperm.xlu0 %2938, %v2769
        %v2940 = vpop.permute.xlu0 %2939
        %2943 = vset.pattern.permute.xlu0 1
        %2944 = vperm.xlu0 %2943, %v2770
        %v2945 = vpop.permute.xlu0 %2944
        %2948 = vset.pattern.permute.xlu0 1
        %2949 = vperm.xlu0 %2948, %v2771
        %v2950 = vpop.permute.xlu0 %2949
        %2953 = vset.pattern.permute.xlu0 1
        %2954 = vperm.xlu0 %2953, %v2772
        %v2955 = vpop.permute.xlu0 %2954
        %2958 = vset.pattern.permute.xlu0 1
        %2959 = vperm.xlu0 %2958, %v2773
        %v2960 = vpop.permute.xlu0 %2959
        %2963 = vset.pattern.permute.xlu0 1
        %2964 = vperm.xlu0 %2963, %v2774
        %v2965 = vpop.permute.xlu0 %2964
        %v2967 = vadd.f32 %v2871, %v2890
        %v2968 = vadd.f32 %v2872, %v2895
        %v2969 = vadd.f32 %v2873, %v2900
        %v2970 = vadd.f32 %v2874, %v2905
        %v2971 = vadd.f32 %v2875, %v2910
        %v2972 = vadd.f32 %v2876, %v2915
        %v2973 = vadd.f32 %v2877, %v2920
        %v2974 = vadd.f32 %v2878, %v2925
        %v2975 = vadd.f32 %v2879, %v2930
        %v2976 = vadd.f32 %v2880, %v2935
        %v2977 = vadd.f32 %v2881, %v2940
        %v2978 = vadd.f32 %v2882, %v2945
        %v2979 = vadd.f32 %v2883, %v2950
        %v2980 = vadd.f32 %v2884, %v2955
        %v2981 = vadd.f32 %v2885, %v2960
        %v2982 = vadd.f32 %v2886, %v2965
        %v2983 = vmax.f32 %v2967, 0.0
        %v2984 = vmax.f32 %v2968, 0.0
        %v2985 = vmax.f32 %v2969, 0.0
        %v2986 = vmax.f32 %v2970, 0.0
        %v2987 = vmax.f32 %v2971, 0.0
        %v2988 = vmax.f32 %v2972, 0.0
        %v2989 = vmax.f32 %v2973, 0.0
        %v2990 = vmax.f32 %v2974, 0.0
        %v2991 = vmax.f32 %v2975, 0.0
        %v2992 = vmax.f32 %v2976, 0.0
        %v2993 = vmax.f32 %v2977, 0.0
        %v2994 = vmax.f32 %v2978, 0.0
        %v2995 = vmax.f32 %v2979, 0.0
        %v2996 = vmax.f32 %v2980, 0.0
        %v2997 = vmax.f32 %v2981, 0.0
        %v2998 = vmax.f32 %v2982, 0.0
        %2999 = vst.msk [vmem:[%s534] sm:$0xff] %vm784, %v2983
        %3000 = vst.msk [vmem:[%s534 + $0x8] sm:$0xff] %vm784, %v2984
        %3001 = vst.msk [vmem:[%s534 + $0x10] sm:$0xff] %vm784, %v2985
        %3002 = vst.msk [vmem:[%s534 + $0x18] sm:$0xff] %vm784, %v2986
        %3003 = vst.msk [vmem:[%s534 + $0x20] sm:$0xff] %vm784, %v2987
        %3004 = vst.msk [vmem:[%s534 + $0x28] sm:$0xff] %vm784, %v2988
        %3005 = vst.msk [vmem:[%s534 + $0x30] sm:$0xff] %vm784, %v2989
        %3006 = vst.msk [vmem:[%s534 + $0x38] sm:$0xff] %vm784, %v2990
        %3007 = vst.msk [vmem:[%s534 + $0x40] sm:$0xff] %vm784, %v2991
        %3008 = vst.msk [vmem:[%s534 + $0x48] sm:$0xff] %vm784, %v2992
        %3009 = vst.msk [vmem:[%s534 + $0x50] sm:$0xff] %vm784, %v2993
        %3010 = vst.msk [vmem:[%s534 + $0x58] sm:$0xff] %vm784, %v2994
        %3011 = vst.msk [vmem:[%s534 + $0x60] sm:$0xff] %vm784, %v2995
        %3012 = vst.msk [vmem:[%s534 + $0x68] sm:$0xff] %vm784, %v2996
        %3013 = vst.msk [vmem:[%s534 + $0x70] sm:$0xff] %vm784, %v2997
        %3014 = vst.msk [vmem:[%s534 + $0x78] sm:$0xff] %vm784, %v2998
        %p3015 = scmp.lt.s32.totalorder %s15, 3
        %s3016 = scalar_select %p3015, %s15, 3
        %s3017 = smul.addr %s3016, 16
        %s3018 = smul.addr %s3017, 8
        %s3019 = scalar_lea.vmem %s4, %s3018
        // Predicated region
        $region78: #{fused_relu_gconv_bn_relu.1} parent=72 // pred_check
          %p3020 = pneg %p132
        $region79: #{fused_relu_gconv_bn_relu.1} parent=72 // pred_check_branch
          %3022 = sbr.rel (%p3020) target = $region81
        $region80: #{fused_relu_gconv_bn_relu.1} parent=72 // pred_region
          _
        $region81: #{fused_relu_gconv_bn_relu.1} parent=72 // pred_fallthru
          _
      $region73: #{fused_relu_gconv_bn_relu.1} parent=5 // pred_fallthru
        _
      %p3023 = scmp.le.s32.totalorder 2, %s10
      // Predicated region
      $region82: #{fused_relu_gconv_bn_relu.1} parent=5 // pred_check
        %p3024 = pneg %p3023
      $region83: #{fused_relu_gconv_bn_relu.1} parent=5 // pred_check_branch
        %3026 = sbr.rel (%p3024) target = $region85
      $region84: #{fused_relu_gconv_bn_relu.1} parent=5 // pred_region
        %s3027 = ssub.s32 %s10, 2
        // Predicated region
        $region86: #{fused_relu_gconv_bn_relu.1} parent=84 // pred_check
          %p3028 = pneg %p138
        $region87: #{fused_relu_gconv_bn_relu.1} parent=84 // pred_check_branch
          %3030 = sbr.rel (%p3028) target = $region89
        $region88: #{fused_relu_gconv_bn_relu.1} parent=84 // pred_region
          %p3031 = scmp.lt.s32.totalorder %s16, 3
          %s3032 = scalar_select %p3031, %s16, 3
          %s3033 = smul.addr %s3032, 16
          %s3034 = smul.addr %s3033, 8
          %s3035 = scalar_lea.vmem %s4, %s3034
        $region89: #{fused_relu_gconv_bn_relu.1} parent=84 // pred_fallthru
          _
      $region85: #{fused_relu_gconv_bn_relu.1} parent=5 // pred_fallthru
        _
    $region6: #{fused_relu_gconv_bn_relu.1} parent=1 // loop_footer
      %s14 = sadd.s32 1, %s10
    $region7: #{fused_relu_gconv_bn_relu.1} parent=1 // loop_footer_branch
      %9 = sbr.rel target = $region3
    $region8: #{fused_relu_gconv_bn_relu.1} parent=1 // loop_exit
      _

</llo_original>
